<compile_context>
chip_gen: v7x
topology: tpu7x:2x2x1
jax: 0.10.0
libtpu: 0.0.40
codegen_flags: <defaults>
</compile_context>

<pallas_src>
import jax
import jax.numpy as jnp
from jax import lax
from jax.experimental import pallas as pl
from jax.experimental.pallas import tpu as pltpu

K_SLOTS = 32   # static upper bound on components kept per mask (>= limit)
LIMIT = 20     # module's self.limit
BN_EPS = 1e-5


def _pick_tile(hw, max_lanes=2048):
    """Largest lane tile <= max_lanes (multiple of 128) that evenly divides hw."""
    if hw <= max_lanes:
        return hw
    for t in range(max_lanes, 127, -128):
        if hw % t == 0:
            return t
    return hw  # fallback: one whole-row block


def _sublane_prod(p):
    """Product over axis 0 (power-of-two extent) via a log-depth halving tree
    (jnp.prod / reduce_prod is not lowered by Mosaic)."""
    n = p.shape[0]
    while n > 1:
        h = n // 2
        p = p[:h, :] * p[h:n, :]
        n = h
    return p  # (1, cols)


# ----------------------------------------------------------------------------
# Kernel 1: Softmax2d (channel softmax) + channel argmax, tiled over HW
# ----------------------------------------------------------------------------
def _softmax_argmax_kernel(z_ref, attn_ref, amax_ref):
    z = z_ref[...]                                       # (3, T) conv logits
    m = jnp.max(z, axis=0, keepdims=True)
    e = jnp.exp(z - m)
    s = jnp.sum(e, axis=0, keepdims=True)
    attn_ref[...] = e * pl.reciprocal(s, approx=True)    # EUP divide
    a0 = z[0:1, :]
    a1 = z[1:2, :]
    a2 = z[2:3, :]
    am = jnp.where(a1 > a0, 1, 0)                        # torch argmax: first-index tie-break
    am = jnp.where(a2 > jnp.maximum(a0, a1), 2, am)
    amax_ref[...] = am.astype(jnp.int32)


def softmax_argmax(logits_flat, tile):
    B, _, HW = logits_flat.shape
    nt = HW // tile
    return pl.pallas_call(
        _softmax_argmax_kernel,
        out_shape=(jax.ShapeDtypeStruct((B, 3, HW), jnp.float32),
                   jax.ShapeDtypeStruct((B, 1, HW), jnp.int32)),
        grid=(B, nt),
        in_specs=[pl.BlockSpec((None, 3, tile), lambda b, t: (b, 0, t))],
        out_specs=(pl.BlockSpec((None, 3, tile), lambda b, t: (b, 0, t)),
                   pl.BlockSpec((None, 1, tile), lambda b, t: (b, 0, t))),
        compiler_params=pltpu.CompilerParams(
            dimension_semantics=("parallel", "parallel")),
    )(logits_flat)


# ----------------------------------------------------------------------------
# Connected-component labeling (plain JAX glue)
# ----------------------------------------------------------------------------
def connected_components(mask):
    # TODO(synk): fline's ConnectedComponents (iterative union-find) has no clean
    # Pallas equivalent; done in plain JAX: min-label propagation + pointer jumping
    # inside a fixpoint while_loop (4-connectivity). Labels = min raster index + 1.
    B, H, W = mask.shape
    HW = H * W
    BIG = jnp.int32(2 ** 30)
    idx = jnp.broadcast_to(
        jnp.arange(HW, dtype=jnp.int32).reshape(1, H, W), (B, H, W))

    def nbr_min(lab):
        labm = jnp.where(mask, lab, BIG)
        up = jnp.pad(labm[:, 1:, :], ((0, 0), (0, 1), (0, 0)), constant_values=2 ** 30)
        down = jnp.pad(labm[:, :-1, :], ((0, 0), (1, 0), (0, 0)), constant_values=2 ** 30)
        left = jnp.pad(labm[:, :, 1:], ((0, 0), (0, 0), (0, 1)), constant_values=2 ** 30)
        right = jnp.pad(labm[:, :, :-1], ((0, 0), (0, 0), (1, 0)), constant_values=2 ** 30)
        return jnp.minimum(jnp.minimum(up, down), jnp.minimum(left, right))

    def body(state):
        lab, _ = state
        new = jnp.where(mask, jnp.minimum(lab, nbr_min(lab)), lab)
        flat = new.reshape(B, HW)
        flat = jnp.take_along_axis(flat, flat, axis=1)   # pointer jump
        flat = jnp.take_along_axis(flat, flat, axis=1)   # jump again (faster convergence)
        new = flat.reshape(B, H, W)
        return new, jnp.any(new != lab)

    lab, _ = lax.while_loop(lambda s: s[1], body, (idx, jnp.array(True)))
    return jnp.where(mask, lab + 1, 0).astype(jnp.int32)


def _unique_nonzero(flat_labels, k):
    """Sorted unique nonzero labels, 0-padded to k slots (vmappable, no python loop)."""
    s = jnp.sort(flat_labels)
    nz = s != 0
    first = nz & jnp.concatenate([jnp.ones((1,), dtype=bool), s[1:] != s[:-1]])
    slot = jnp.cumsum(first.astype(jnp.int32)) - 1
    slot = jnp.where(first, slot, k)
    vals = jnp.where(first, s, 0)
    return jnp.zeros((k,), jnp.int32).at[slot].set(vals, mode="drop")


# ----------------------------------------------------------------------------
# Kernel 2a: component statistics (HW-accumulating) + finalize of pair factors
# ----------------------------------------------------------------------------
_DN_LAST = (((1,), (1,)), ((), ()))   # contract last dims
_DN_STD = (((1,), (0,)), ((), ()))    # standard matmul


def _comp_stats_kernel(u1_ref, u2_ref, x_ref, lab1_ref, lab2_ref,
                       fm1_ref, fm2_ref,
                       s1_acc, s2_acc, c1c, c1r, c2c, c2r):
    t = pl.program_id(1)

    @pl.when(t == 0)
    def _():
        s1_acc[...] = jnp.zeros_like(s1_acc)
        s2_acc[...] = jnp.zeros_like(s2_acc)
        c1c[...] = jnp.zeros_like(c1c)
        c1r[...] = jnp.zeros_like(c1r)
        c2c[...] = jnp.zeros_like(c2c)
        c2r[...] = jnp.zeros_like(c2r)

    x = x_ref[...]                     # (C, T)
    lab1 = lab1_ref[...]               # (1, T) int32
    lab2 = lab2_ref[...]
    u1 = u1_ref[...]                   # (K, 1) int32 sorted nonzero labels, 0-padded
    u2 = u2_ref[...]

    # limit mask built in-kernel (first LIMIT-1 nonzero components; slot 0 of the
    # torch unique list is the background, hence limit-1).
    kio = lax.broadcasted_iota(jnp.int32, (K_SLOTS, 1), 0)
    valid1 = (u1 != 0) & (kio < (LIMIT - 1))
    valid2 = (u2 != 0) & (kio < (LIMIT - 1))
    M1 = ((lab1 == u1) & valid1).astype(jnp.float32)     # (K, T) raw 0/1 membership
    M2 = ((lab2 == u2) & valid2).astype(jnp.float32)

    # masked channel sums + counts on the MXU (normalization folded into finalize)
    s1_acc[...] += lax.dot_general(M1, x, _DN_LAST, preferred_element_type=jnp.float32)  # (K, C)
    s2_acc[...] += lax.dot_general(M2, x, _DN_LAST, preferred_element_type=jnp.float32)
    ones_row = jnp.ones((1, M1.shape[1]), jnp.float32)
    c1c[...] += jnp.sum(M1, axis=1, keepdims=True)                                        # (K, 1)
    c2c[...] += jnp.sum(M2, axis=1, keepdims=True)
    c1r[...] += lax.dot_general(ones_row, M1, _DN_LAST, preferred_element_type=jnp.float32)  # (1, K)
    c2r[...] += lax.dot_general(ones_row, M2, _DN_LAST, preferred_element_type=jnp.float32)

    @pl.when(t == pl.num_programs(1) - 1)
    def _():
        inv1c = 1.0 / jnp.maximum(c1c[...], 1.0)
        inv1r = 1.0 / jnp.maximum(c1r[...], 1.0)
        inv2c = 1.0 / jnp.maximum(c2c[...], 1.0)
        inv2r = 1.0 / jnp.maximum(c2r[...], 1.0)
        s1 = s1_acc[...]
        s2 = s2_acc[...]
        # mm[k1,k2] = mean1[k1] . mean2[k2]  (single (K,K) build; mm21 == mm12^T)
        raw = lax.dot_general(s1, s2, _DN_LAST, preferred_element_type=jnp.float32)   # (K, K)
        rawT = lax.dot_general(s2, s1, _DN_LAST, preferred_element_type=jnp.float32)  # (K, K)
        eff = 1.0 + raw * inv1c * inv2r        # eff[k1,k2]  = 1 + mm[k1,k2]
        effT = 1.0 + rawT * inv2c * inv1r      # effT[k2,k1] = 1 + mm[k1,k2]
        # factor for mask2 comp k2: prod_k1 (1+mm[k1,k2]); for mask1 comp k1: prod_k2
        fm2_ref[...] = _sublane_prod(eff) - 1.0    # (1, K)
        fm1_ref[...] = _sublane_prod(effT) - 1.0   # (1, K)


def comp_stats(x_flat, lab1, lab2, u1, u2, tile):
    B, C, HW = x_flat.shape
    K = K_SLOTS
    nt = HW // tile
    return pl.pallas_call(
        _comp_stats_kernel,
        out_shape=(jax.ShapeDtypeStruct((B, 1, K), jnp.float32),
                   jax.ShapeDtypeStruct((B, 1, K), jnp.float32)),
        grid=(B, nt),
        in_specs=[pl.BlockSpec((None, K, 1), lambda b, t: (b, 0, 0)),
                  pl.BlockSpec((None, K, 1), lambda b, t: (b, 0, 0)),
                  pl.BlockSpec((None, C, tile), lambda b, t: (b, 0, t)),
                  pl.BlockSpec((None, 1, tile), lambda b, t: (b, 0, t)),
                  pl.BlockSpec((None, 1, tile), lambda b, t: (b, 0, t))],
        out_specs=(pl.BlockSpec((None, 1, K), lambda b, t: (b, 0, 0)),
                   pl.BlockSpec((None, 1, K), lambda b, t: (b, 0, 0))),
        scratch_shapes=[pltpu.VMEM((K, C), jnp.float32),
                        pltpu.VMEM((K, C), jnp.float32),
                        pltpu.VMEM((K, 1), jnp.float32),
                        pltpu.VMEM((1, K), jnp.float32),
                        pltpu.VMEM((K, 1), jnp.float32),
                        pltpu.VMEM((1, K), jnp.float32)],
        compiler_params=pltpu.CompilerParams(
            dimension_semantics=("parallel", "arbitrary")),
    )(u1, u2, x_flat, lab1, lab2)


# ----------------------------------------------------------------------------
# Kernel 2b: apply per-pixel multiplicative update (MXU matvecs over masks)
# ----------------------------------------------------------------------------
def _comp_apply_kernel(u1_ref, u2_ref, fm1_ref, fm2_ref,
                       x_ref, lab1_ref, lab2_ref, out_ref):
    x = x_ref[...]                     # (C, T)
    lab1 = lab1_ref[...]
    lab2 = lab2_ref[...]
    u1 = u1_ref[...]
    u2 = u2_ref[...]
    kio = lax.broadcasted_iota(jnp.int32, (K_SLOTS, 1), 0)
    valid1 = (u1 != 0) & (kio < (LIMIT - 1))
    valid2 = (u2 != 0) & (kio < (LIMIT - 1))
    M1 = ((lab1 == u1) & valid1).astype(jnp.float32)     # (K, T)
    M2 = ((lab2 == u2) & valid2).astype(jnp.float32)
    add1 = lax.dot_general(fm1_ref[...], M1, _DN_STD, preferred_element_type=jnp.float32)  # (1, T)
    add2 = lax.dot_general(fm2_ref[...], M2, _DN_STD, preferred_element_type=jnp.float32)
    out_ref[...] = x * (1.0 + add1 + add2)    # masks disjoint -> at most one term nonzero


def comp_apply(x_flat, lab1, lab2, u1, u2, fm1, fm2, tile):
    B, C, HW = x_flat.shape
    K = K_SLOTS
    nt = HW // tile
    return pl.pallas_call(
        _comp_apply_kernel,
        out_shape=jax.ShapeDtypeStruct((B, C, HW), jnp.float32),
        grid=(B, nt),
        in_specs=[pl.BlockSpec((None, K, 1), lambda b, t: (b, 0, 0)),
                  pl.BlockSpec((None, K, 1), lambda b, t: (b, 0, 0)),
                  pl.BlockSpec((None, 1, K), lambda b, t: (b, 0, 0)),
                  pl.BlockSpec((None, 1, K), lambda b, t: (b, 0, 0)),
                  pl.BlockSpec((None, C, tile), lambda b, t: (b, 0, t)),
                  pl.BlockSpec((None, 1, tile), lambda b, t: (b, 0, t)),
                  pl.BlockSpec((None, 1, tile), lambda b, t: (b, 0, t))],
        out_specs=pl.BlockSpec((None, C, tile), lambda b, t: (b, 0, t)),
        compiler_params=pltpu.CompilerParams(
            dimension_semantics=("parallel", "parallel")),
    )(u1, u2, fm1, fm2, x_flat, lab1, lab2)


# ----------------------------------------------------------------------------
# Kernel 3: BatchNorm2d (training-mode batch stats), stats + apply, no transpose
# ----------------------------------------------------------------------------
def _make_bn_stats_kernel(inv_n):
    def kernel(x_ref, g_ref, b_ref, scale_ref, shift_ref, s_acc, q_acc):
        bi = pl.program_id(0)
        t = pl.program_id(1)

        @pl.when(jnp.logical_and(bi == 0, t == 0))
        def _():
            s_acc[...] = jnp.zeros_like(s_acc)
            q_acc[...] = jnp.zeros_like(q_acc)

        x = x_ref[...]                                   # (C, T)
        s_acc[...] += jnp.sum(x, axis=1, keepdims=True)
        q_acc[...] += jnp.sum(x * x, axis=1, keepdims=True)

        @pl.when(jnp.logical_and(bi == pl.num_programs(0) - 1,
                                 t == pl.num_programs(1) - 1))
        def _():
            mean = s_acc[...] * inv_n
            var = q_acc[...] * inv_n - mean * mean       # biased, as torch BN training
            scale = g_ref[...] * lax.rsqrt(var + BN_EPS)
            scale_ref[...] = scale
            shift_ref[...] = b_ref[...] - mean * scale
    return kernel


def bn_stats(x_flat, gamma, beta, tile):
    B, C, HW = x_flat.shape
    nt = HW // tile
    kernel = _make_bn_stats_kernel(1.0 / float(B * HW))
    return pl.pallas_call(
        kernel,
        out_shape=(jax.ShapeDtypeStruct((C, 1), jnp.float32),
                   jax.ShapeDtypeStruct((C, 1), jnp.float32)),
        grid=(B, nt),
        in_specs=[pl.BlockSpec((None, C, tile), lambda b, t: (b, 0, t)),
                  pl.BlockSpec((C, 1), lambda b, t: (0, 0)),
                  pl.BlockSpec((C, 1), lambda b, t: (0, 0))],
        out_specs=(pl.BlockSpec((C, 1), lambda b, t: (0, 0)),
                   pl.BlockSpec((C, 1), lambda b, t: (0, 0))),
        scratch_shapes=[pltpu.VMEM((C, 1), jnp.float32),
                        pltpu.VMEM((C, 1), jnp.float32)],
        compiler_params=pltpu.CompilerParams(
            dimension_semantics=("arbitrary", "arbitrary")),
    )(x_flat, gamma, beta)


def _bn_apply_kernel(x_ref, scale_ref, shift_ref, o_ref):
    o_ref[...] = x_ref[...] * scale_ref[...] + shift_ref[...]


def bn_apply(x_flat, scale, shift, tile):
    B, C, HW = x_flat.shape
    nt = HW // tile
    return pl.pallas_call(
        _bn_apply_kernel,
        out_shape=jax.ShapeDtypeStruct((B, C, HW), jnp.float32),
        grid=(B, nt),
        in_specs=[pl.BlockSpec((None, C, tile), lambda b, t: (b, 0, t)),
                  pl.BlockSpec((C, 1), lambda b, t: (0, 0)),
                  pl.BlockSpec((C, 1), lambda b, t: (0, 0))],
        out_specs=pl.BlockSpec((None, C, tile), lambda b, t: (b, 0, t)),
        compiler_params=pltpu.CompilerParams(
            dimension_semantics=("parallel", "parallel")),
    )(x_flat, scale, shift)


# ----------------------------------------------------------------------------
# Wrapper
# ----------------------------------------------------------------------------
def init_params(key, in_dim):
    k1, k2 = jax.random.split(key)
    bound = 1.0 / float((in_dim * 9) ** 0.5)
    w = jax.random.uniform(k1, (3, in_dim, 3, 3), jnp.float32, -bound, bound)
    b = jax.random.uniform(k2, (3,), jnp.float32, -bound, bound)
    return {"conv_w": w, "conv_b": b,
            "bn_gamma": jnp.ones((in_dim, 1), jnp.float32),
            "bn_beta": jnp.zeros((in_dim, 1), jnp.float32)}


def conn_comp_attention(x, params):
    B, C, H, W = x.shape
    HW = H * W
    K = K_SLOTS
    tile = _pick_tile(HW)
    x = x.astype(jnp.float32)

    # 0) 3x3 conv (3 output channels) via XLA conv — avoids 9x im2col HBM traffic.
    logits = lax.conv_general_dilated(
        x, params["conv_w"], window_strides=(1, 1), padding=((1, 1), (1, 1)),
        dimension_numbers=("NCHW", "OIHW", "NCHW"))
    logits = logits + params["conv_b"].reshape(1, 3, 1, 1)

    # 1) Softmax2d + channel argmax (Pallas)
    attn_flat, amax_flat = softmax_argmax(logits.reshape(B, 3, HW), tile)
    out_attn = attn_flat.reshape(B, 3, H, W)
    amax = amax_flat.reshape(B, H, W)

    # 2) connected components + sorted unique nonzero labels (JAX glue, vmapped)
    lab1 = connected_components(amax == 1)
    lab2 = connected_components(amax == 2)
    uniq = jax.vmap(lambda v: _unique_nonzero(v, K_SLOTS))
    # TODO(synk): assumes background (label 0) is present in each mask, matching
    # the torch module's mm[i-1, j-1] indexing; also caps components at K_SLOTS=32.
    u1 = uniq(lab1.reshape(B, HW)).reshape(B, K, 1)
    u2 = uniq(lab2.reshape(B, HW)).reshape(B, K, 1)

    x_flat = x.reshape(B, C, HW)
    lab1_f = lab1.reshape(B, 1, HW)
    lab2_f = lab2.reshape(B, 1, HW)

    # 3/4) component statistics + per-pixel multiplicative update (Pallas)
    fm1, fm2 = comp_stats(x_flat, lab1_f, lab2_f, u1, u2, tile)
    x_upd = comp_apply(x_flat, lab1_f, lab2_f, u1, u2, fm1, fm2, tile)

    # 5) BatchNorm2d with training-mode batch statistics (Pallas, (B,C,HW) layout)
    scale, shift = bn_stats(x_upd, params["bn_gamma"], params["bn_beta"], tile)
    y_flat = bn_apply(x_upd, scale, shift, tile)
    return y_flat.reshape(B, C, H, W), out_attn


if __name__ == "__main__":
    key = jax.random.PRNGKey(0)
    kx, kp = jax.random.split(key)
    B, C, H, W = 2, 4, 16, 16
    x = jax.random.normal(kx, (B, C, H, W), dtype=jnp.float32)
    params = init_params(kp, C)

    fwd = jax.jit(conn_comp_attention)
    y, out_attn = fwd(x, params)
    jax.block_until_ready((y, out_attn))

    assert y.shape == (B, C, H, W)
    assert out_attn.shape == (B, 3, H, W)
    assert bool(jnp.all(jnp.isfinite(y)))
    assert bool(jnp.all(jnp.isfinite(out_attn)))
    assert bool(jnp.allclose(out_attn.sum(axis=1), 1.0, atol=5e-3))          # softmax
    assert bool(jnp.allclose(y.mean(axis=(0, 2, 3)), 0.0, atol=1e-2))        # BN mean
    print("KERNEL_OK")
</pallas_src>

<mosaic_0001>
module attributes {stable_mosaic.version = 11 : i64} {
  func.func @_softmax_argmax_kernel(%arg0: i32, %arg1: i32, %arg2: memref<1x3x256xf32, #tpu.memory_space<vmem>>, %arg3: memref<1x3x256xf32, #tpu.memory_space<vmem>>, %arg4: memref<1x1x256xi32, #tpu.memory_space<vmem>>) attributes {dimension_semantics = [#tpu.dimension_semantics<parallel>, #tpu.dimension_semantics<parallel>], iteration_bounds = array<i64: 2, 1>, scalar_prefetch = 0 : i64, scratch_operands = 0 : i64, tpu.core_type = #tpu.core_type<tc>, window_params = [{transform_indices = @transform_0, window_bounds = array<i64: 1, 3, 256>}, {transform_indices = @transform_1, window_bounds = array<i64: 1, 3, 256>}, {transform_indices = @transform_2, window_bounds = array<i64: 1, 1, 256>}]} {
    %c0 = arith.constant 0 : index
    %c0_0 = arith.constant 0 : index
    %c0_1 = arith.constant 0 : index
    %0 = vector.load %arg2[%c0, %c0_0, %c0_1] : memref<1x3x256xf32, #tpu.memory_space<vmem>>, vector<1x3x256xf32>
    %1 = vector.shape_cast %0 : vector<1x3x256xf32> to vector<3x256xf32>
    %cst = arith.constant dense<0xFF800000> : vector<256xf32>
    %2 = vector.multi_reduction <maximumf>, %1, %cst [0] : vector<3x256xf32> to vector<256xf32>
    %3 = vector.shape_cast %2 : vector<256xf32> to vector<1x256xf32>
    %4 = vector.broadcast %3 : vector<1x256xf32> to vector<3x256xf32>
    %5 = arith.subf %1, %4 : vector<3x256xf32>
    %6 = math.exp %5 : vector<3x256xf32>
    %cst_2 = arith.constant dense<0.000000e+00> : vector<256xf32>
    %7 = vector.multi_reduction <add>, %6, %cst_2 [0] : vector<3x256xf32> to vector<256xf32>
    %8 = vector.shape_cast %7 : vector<256xf32> to vector<1x256xf32>
    %9 = tpu.reciprocal %8 {approx = true} : vector<1x256xf32> -> vector<1x256xf32>
    %10 = vector.broadcast %9 : vector<1x256xf32> to vector<3x256xf32>
    %11 = arith.mulf %6, %10 : vector<3x256xf32>
    %c0_3 = arith.constant 0 : index
    %c0_4 = arith.constant 0 : index
    %c0_5 = arith.constant 0 : index
    %12 = vector.load %arg3[%c0_3, %c0_4, %c0_5] : memref<1x3x256xf32, #tpu.memory_space<vmem>>, vector<1x3x256xf32>
    %13 = vector.shape_cast %12 : vector<1x3x256xf32> to vector<3x256xf32>
    %14 = vector.shape_cast %11 : vector<3x256xf32> to vector<1x3x256xf32>
    tpu.vector_store %arg3[%c0_3, %c0_4, %c0_5], %14 {strides = array<i32>} : memref<1x3x256xf32, #tpu.memory_space<vmem>>, vector<1x3x256xf32>,
    %15 = vector.extract_strided_slice %1 {offsets = [0, 0], sizes = [1, 256], strides = [1, 1]} : vector<3x256xf32> to vector<1x256xf32>
    %16 = vector.extract_strided_slice %1 {offsets = [1, 0], sizes = [1, 256], strides = [1, 1]} : vector<3x256xf32> to vector<1x256xf32>
    %17 = vector.extract_strided_slice %1 {offsets = [2, 0], sizes = [1, 256], strides = [1, 1]} : vector<3x256xf32> to vector<1x256xf32>
    %18 = arith.cmpf ogt, %16, %15 : vector<1x256xf32>
    %c1_i32 = arith.constant 1 : i32
    %c0_i32 = arith.constant 0 : i32
    %19 = vector.broadcast %c1_i32 : i32 to vector<1x256xi32>
    %20 = vector.broadcast %c0_i32 : i32 to vector<1x256xi32>
    %21 = arith.select %18, %19, %20 : vector<1x256xi1>, vector<1x256xi32>
    %22 = arith.maximumf %15, %16 : vector<1x256xf32>
    %23 = arith.cmpf ogt, %17, %22 : vector<1x256xf32>
    %c2_i32 = arith.constant 2 : i32
    %24 = vector.broadcast %c2_i32 : i32 to vector<1x256xi32>
    %25 = arith.select %23, %24, %21 : vector<1x256xi1>, vector<1x256xi32>
    %c0_6 = arith.constant 0 : index
    %c0_7 = arith.constant 0 : index
    %c0_8 = arith.constant 0 : index
    %26 = vector.load %arg4[%c0_6, %c0_7, %c0_8] : memref<1x1x256xi32, #tpu.memory_space<vmem>>, vector<1x1x256xi32>
    %27 = vector.shape_cast %26 : vector<1x1x256xi32> to vector<1x256xi32>
    %28 = vector.shape_cast %25 : vector<1x256xi32> to vector<1x1x256xi32>
    tpu.vector_store %arg4[%c0_6, %c0_7, %c0_8], %28 {strides = array<i32>} : memref<1x1x256xi32, #tpu.memory_space<vmem>>, vector<1x1x256xi32>,
    return
  }
  func.func @transform_0(%arg0: i32, %arg1: i32) -> (i32, i32, i32) {
    %c0_i32 = arith.constant 0 : i32
    %c0_i32_0 = arith.constant 0 : i32
    return %arg0, %c0_i32, %arg1 : i32, i32, i32
  }
  func.func @transform_1(%arg0: i32, %arg1: i32) -> (i32, i32, i32) {
    %c0_i32 = arith.constant 0 : i32
    %c0_i32_0 = arith.constant 0 : i32
    return %arg0, %c0_i32, %arg1 : i32, i32, i32
  }
  func.func @transform_2(%arg0: i32, %arg1: i32) -> (i32, i32, i32) {
    %c0_i32 = arith.constant 0 : i32
    %c0_i32_0 = arith.constant 0 : i32
    return %arg0, %c0_i32, %arg1 : i32, i32, i32
  }
}

module attributes {stable_mosaic.version = 11 : i64} {
  func.func @_comp_stats_kernel(%arg0: i32, %arg1: i32, %arg2: memref<1x32x1xi32, #tpu.memory_space<vmem>>, %arg3: memref<1x32x1xi32, #tpu.memory_space<vmem>>, %arg4: memref<1x4x256xf32, #tpu.memory_space<vmem>>, %arg5: memref<1x1x256xi32, #tpu.memory_space<vmem>>, %arg6: memref<1x1x256xi32, #tpu.memory_space<vmem>>, %arg7: memref<1x1x32xf32, #tpu.memory_space<vmem>>, %arg8: memref<1x1x32xf32, #tpu.memory_space<vmem>>, %arg9: memref<32x4xf32, #tpu.memory_space<vmem>>, %arg10: memref<32x4xf32, #tpu.memory_space<vmem>>, %arg11: memref<32x1xf32, #tpu.memory_space<vmem>>, %arg12: memref<1x32xf32, #tpu.memory_space<vmem>>, %arg13: memref<32x1xf32, #tpu.memory_space<vmem>>, %arg14: memref<1x32xf32, #tpu.memory_space<vmem>>) attributes {dimension_semantics = [#tpu.dimension_semantics<parallel>, #tpu.dimension_semantics<arbitrary>], iteration_bounds = array<i64: 2, 1>, scalar_prefetch = 0 : i64, scratch_operands = 6 : i64, tpu.core_type = #tpu.core_type<tc>, window_params = [{transform_indices = @transform_0, window_bounds = array<i64: 1, 32, 1>}, {transform_indices = @transform_1, window_bounds = array<i64: 1, 32, 1>}, {transform_indices = @transform_2, window_bounds = array<i64: 1, 4, 256>}, {transform_indices = @transform_3, window_bounds = array<i64: 1, 1, 256>}, {transform_indices = @transform_4, window_bounds = array<i64: 1, 1, 256>}, {transform_indices = @transform_5, window_bounds = array<i64: 1, 1, 32>}, {transform_indices = @transform_6, window_bounds = array<i64: 1, 1, 32>}]} {
    %c0_i32 = arith.constant 0 : i32
    %0 = arith.cmpi eq, %arg1, %c0_i32 : i32
    %1 = arith.extui %0 : i1 to i32
    %c0_i32_0 = arith.constant 0 : i32
    %2 = arith.cmpi ne, %1, %c0_i32_0 : i32
    scf.if %2 {
      %cst_50 = arith.constant 0.000000e+00 : f32
      %68 = vector.broadcast %cst_50 : f32 to vector<32x4xf32>
      %c0_51 = arith.constant 0 : index
      %c0_52 = arith.constant 0 : index
      %69 = vector.load %arg9[%c0_51, %c0_52] : memref<32x4xf32, #tpu.memory_space<vmem>>, vector<32x4xf32>
      tpu.vector_store %arg9[%c0_51, %c0_52], %68 {strides = array<i32>} : memref<32x4xf32, #tpu.memory_space<vmem>>, vector<32x4xf32>,
      %cst_53 = arith.constant 0.000000e+00 : f32
      %70 = vector.broadcast %cst_53 : f32 to vector<32x4xf32>
      %c0_54 = arith.constant 0 : index
      %c0_55 = arith.constant 0 : index
      %71 = vector.load %arg10[%c0_54, %c0_55] : memref<32x4xf32, #tpu.memory_space<vmem>>, vector<32x4xf32>
      tpu.vector_store %arg10[%c0_54, %c0_55], %70 {strides = array<i32>} : memref<32x4xf32, #tpu.memory_space<vmem>>, vector<32x4xf32>,
      %cst_56 = arith.constant 0.000000e+00 : f32
      %72 = vector.broadcast %cst_56 : f32 to vector<32x1xf32>
      %c0_57 = arith.constant 0 : index
      %c0_58 = arith.constant 0 : index
      %73 = vector.load %arg11[%c0_57, %c0_58] : memref<32x1xf32, #tpu.memory_space<vmem>>, vector<32x1xf32>
      tpu.vector_store %arg11[%c0_57, %c0_58], %72 {strides = array<i32>} : memref<32x1xf32, #tpu.memory_space<vmem>>, vector<32x1xf32>,
      %cst_59 = arith.constant 0.000000e+00 : f32
      %74 = vector.broadcast %cst_59 : f32 to vector<1x32xf32>
      %c0_60 = arith.constant 0 : index
      %c0_61 = arith.constant 0 : index
      %75 = vector.load %arg12[%c0_60, %c0_61] : memref<1x32xf32, #tpu.memory_space<vmem>>, vector<1x32xf32>
      tpu.vector_store %arg12[%c0_60, %c0_61], %74 {strides = array<i32>} : memref<1x32xf32, #tpu.memory_space<vmem>>, vector<1x32xf32>,
      %cst_62 = arith.constant 0.000000e+00 : f32
      %76 = vector.broadcast %cst_62 : f32 to vector<32x1xf32>
      %c0_63 = arith.constant 0 : index
      %c0_64 = arith.constant 0 : index
      %77 = vector.load %arg13[%c0_63, %c0_64] : memref<32x1xf32, #tpu.memory_space<vmem>>, vector<32x1xf32>
      tpu.vector_store %arg13[%c0_63, %c0_64], %76 {strides = array<i32>} : memref<32x1xf32, #tpu.memory_space<vmem>>, vector<32x1xf32>,
      %cst_65 = arith.constant 0.000000e+00 : f32
      %78 = vector.broadcast %cst_65 : f32 to vector<1x32xf32>
      %c0_66 = arith.constant 0 : index
      %c0_67 = arith.constant 0 : index
      %79 = vector.load %arg14[%c0_66, %c0_67] : memref<1x32xf32, #tpu.memory_space<vmem>>, vector<1x32xf32>
      tpu.vector_store %arg14[%c0_66, %c0_67], %78 {strides = array<i32>} : memref<1x32xf32, #tpu.memory_space<vmem>>, vector<1x32xf32>,
    } else {
    }
    %c0 = arith.constant 0 : index
    %c0_1 = arith.constant 0 : index
    %c0_2 = arith.constant 0 : index
    %3 = vector.load %arg4[%c0, %c0_1, %c0_2] : memref<1x4x256xf32, #tpu.memory_space<vmem>>, vector<1x4x256xf32>
    %4 = vector.shape_cast %3 : vector<1x4x256xf32> to vector<4x256xf32>
    %c0_3 = arith.constant 0 : index
    %c0_4 = arith.constant 0 : index
    %c0_5 = arith.constant 0 : index
    %5 = vector.load %arg5[%c0_3, %c0_4, %c0_5] : memref<1x1x256xi32, #tpu.memory_space<vmem>>, vector<1x1x256xi32>
    %6 = vector.shape_cast %5 : vector<1x1x256xi32> to vector<1x256xi32>
    %c0_6 = arith.constant 0 : index
    %c0_7 = arith.constant 0 : index
    %c0_8 = arith.constant 0 : index
    %7 = vector.load %arg6[%c0_6, %c0_7, %c0_8] : memref<1x1x256xi32, #tpu.memory_space<vmem>>, vector<1x1x256xi32>
    %8 = vector.shape_cast %7 : vector<1x1x256xi32> to vector<1x256xi32>
    %c0_9 = arith.constant 0 : index
    %c0_10 = arith.constant 0 : index
    %c0_11 = arith.constant 0 : index
    %9 = vector.load %arg2[%c0_9, %c0_10, %c0_11] : memref<1x32x1xi32, #tpu.memory_space<vmem>>, vector<1x32x1xi32>
    %10 = vector.shape_cast %9 : vector<1x32x1xi32> to vector<32x1xi32>
    %c0_12 = arith.constant 0 : index
    %c0_13 = arith.constant 0 : index
    %c0_14 = arith.constant 0 : index
    %11 = vector.load %arg3[%c0_12, %c0_13, %c0_14] : memref<1x32x1xi32, #tpu.memory_space<vmem>>, vector<1x32x1xi32>
    %12 = vector.shape_cast %11 : vector<1x32x1xi32> to vector<32x1xi32>
    %13 = tpu.iota {dimensions = array<i32: 0>} : vector<32x1xi32>
    %c0_i32_15 = arith.constant 0 : i32
    %14 = vector.broadcast %c0_i32_15 : i32 to vector<32x1xi32>
    %15 = arith.cmpi ne, %10, %14 : vector<32x1xi32>
    %c19_i32 = arith.constant 19 : i32
    %16 = vector.broadcast %c19_i32 : i32 to vector<32x1xi32>
    %17 = arith.cmpi slt, %13, %16 : vector<32x1xi32>
    %18 = arith.andi %15, %17 : vector<32x1xi1>
    %c0_i32_16 = arith.constant 0 : i32
    %19 = vector.broadcast %c0_i32_16 : i32 to vector<32x1xi32>
    %20 = arith.cmpi ne, %12, %19 : vector<32x1xi32>
    %c19_i32_17 = arith.constant 19 : i32
    %21 = vector.broadcast %c19_i32_17 : i32 to vector<32x1xi32>
    %22 = arith.cmpi slt, %13, %21 : vector<32x1xi32>
    %23 = arith.andi %20, %22 : vector<32x1xi1>
    %24 = vector.broadcast %6 : vector<1x256xi32> to vector<32x256xi32>
    %25 = vector.broadcast %10 : vector<32x1xi32> to vector<32x256xi32>
    %26 = arith.cmpi eq, %24, %25 : vector<32x256xi32>
    %27 = vector.broadcast %18 : vector<32x1xi1> to vector<32x256xi1>
    %28 = arith.andi %26, %27 : vector<32x256xi1>
    %29 = arith.extui %28 : vector<32x256xi1> to vector<32x256xi32>
    %30 = arith.sitofp %29 : vector<32x256xi32> to vector<32x256xf32>
    %31 = vector.broadcast %8 : vector<1x256xi32> to vector<32x256xi32>
    %32 = vector.broadcast %12 : vector<32x1xi32> to vector<32x256xi32>
    %33 = arith.cmpi eq, %31, %32 : vector<32x256xi32>
    %34 = vector.broadcast %23 : vector<32x1xi1> to vector<32x256xi1>
    %35 = arith.andi %33, %34 : vector<32x256xi1>
    %36 = arith.extui %35 : vector<32x256xi1> to vector<32x256xi32>
    %37 = arith.sitofp %36 : vector<32x256xi32> to vector<32x256xf32>
    %c0_18 = arith.constant 0 : index
    %c0_19 = arith.constant 0 : index
    %38 = vector.load %arg9[%c0_18, %c0_19] : memref<32x4xf32, #tpu.memory_space<vmem>>, vector<32x4xf32>
    %cst = arith.constant dense<0.000000e+00> : vector<32x4xf32>
    %39 = tpu.matmul %30, %4, %cst {dimension_numbers = #tpu.dot_dimension_numbers<[1], [1], [0], [0], [0, 0, 1, 0], [], []>} : vector<32x256xf32>, vector<4x256xf32>, vector<32x4xf32> -> vector<32x4xf32>
    %40 = arith.addf %38, %39 : vector<32x4xf32>
    %c0_20 = arith.constant 0 : index
    %c0_21 = arith.constant 0 : index
    %41 = vector.load %arg9[%c0_20, %c0_21] : memref<32x4xf32, #tpu.memory_space<vmem>>, vector<32x4xf32>
    tpu.vector_store %arg9[%c0_20, %c0_21], %40 {strides = array<i32>} : memref<32x4xf32, #tpu.memory_space<vmem>>, vector<32x4xf32>,
    %c0_22 = arith.constant 0 : index
    %c0_23 = arith.constant 0 : index
    %42 = vector.load %arg10[%c0_22, %c0_23] : memref<32x4xf32, #tpu.memory_space<vmem>>, vector<32x4xf32>
    %cst_24 = arith.constant dense<0.000000e+00> : vector<32x4xf32>
    %43 = tpu.matmul %37, %4, %cst_24 {dimension_numbers = #tpu.dot_dimension_numbers<[1], [1], [0], [0], [0, 0, 1, 0], [], []>} : vector<32x256xf32>, vector<4x256xf32>, vector<32x4xf32> -> vector<32x4xf32>
    %44 = arith.addf %42, %43 : vector<32x4xf32>
    %c0_25 = arith.constant 0 : index
    %c0_26 = arith.constant 0 : index
    %45 = vector.load %arg10[%c0_25, %c0_26] : memref<32x4xf32, #tpu.memory_space<vmem>>, vector<32x4xf32>
    tpu.vector_store %arg10[%c0_25, %c0_26], %44 {strides = array<i32>} : memref<32x4xf32, #tpu.memory_space<vmem>>, vector<32x4xf32>,
    %cst_27 = arith.constant 1.000000e+00 : f32
    %46 = vector.broadcast %cst_27 : f32 to vector<1x256xf32>
    %c0_28 = arith.constant 0 : index
    %c0_29 = arith.constant 0 : index
    %47 = vector.load %arg11[%c0_28, %c0_29] : memref<32x1xf32, #tpu.memory_space<vmem>>, vector<32x1xf32>
    %cst_30 = arith.constant dense<0.000000e+00> : vector<32xf32>
    %48 = vector.multi_reduction <add>, %30, %cst_30 [1] : vector<32x256xf32> to vector<32xf32>
    %49 = vector.shape_cast %48 : vector<32xf32> to vector<32x1xf32>
    %50 = arith.addf %47, %49 : vector<32x1xf32>
    %c0_31 = arith.constant 0 : index
    %c0_32 = arith.constant 0 : index
    %51 = vector.load %arg11[%c0_31, %c0_32] : memref<32x1xf32, #tpu.memory_space<vmem>>, vector<32x1xf32>
    tpu.vector_store %arg11[%c0_31, %c0_32], %50 {strides = array<i32>} : memref<32x1xf32, #tpu.memory_space<vmem>>, vector<32x1xf32>,
    %c0_33 = arith.constant 0 : index
    %c0_34 = arith.constant 0 : index
    %52 = vector.load %arg13[%c0_33, %c0_34] : memref<32x1xf32, #tpu.memory_space<vmem>>, vector<32x1xf32>
    %cst_35 = arith.constant dense<0.000000e+00> : vector<32xf32>
    %53 = vector.multi_reduction <add>, %37, %cst_35 [1] : vector<32x256xf32> to vector<32xf32>
    %54 = vector.shape_cast %53 : vector<32xf32> to vector<32x1xf32>
    %55 = arith.addf %52, %54 : vector<32x1xf32>
    %c0_36 = arith.constant 0 : index
    %c0_37 = arith.constant 0 : index
    %56 = vector.load %arg13[%c0_36, %c0_37] : memref<32x1xf32, #tpu.memory_space<vmem>>, vector<32x1xf32>
    tpu.vector_store %arg13[%c0_36, %c0_37], %55 {strides = array<i32>} : memref<32x1xf32, #tpu.memory_space<vmem>>, vector<32x1xf32>,
    %c0_38 = arith.constant 0 : index
    %c0_39 = arith.constant 0 : index
    %57 = vector.load %arg12[%c0_38, %c0_39] : memref<1x32xf32, #tpu.memory_space<vmem>>, vector<1x32xf32>
    %cst_40 = arith.constant dense<0.000000e+00> : vector<1x32xf32>
    %58 = tpu.matmul %46, %30, %cst_40 {dimension_numbers = #tpu.dot_dimension_numbers<[1], [1], [0], [0], [0, 0, 1, 0], [], []>} : vector<1x256xf32>, vector<32x256xf32>, vector<1x32xf32> -> vector<1x32xf32>
    %59 = arith.addf %57, %58 : vector<1x32xf32>
    %c0_41 = arith.constant 0 : index
    %c0_42 = arith.constant 0 : index
    %60 = vector.load %arg12[%c0_41, %c0_42] : memref<1x32xf32, #tpu.memory_space<vmem>>, vector<1x32xf32>
    tpu.vector_store %arg12[%c0_41, %c0_42], %59 {strides = array<i32>} : memref<1x32xf32, #tpu.memory_space<vmem>>, vector<1x32xf32>,
    %c0_43 = arith.constant 0 : index
    %c0_44 = arith.constant 0 : index
    %61 = vector.load %arg14[%c0_43, %c0_44] : memref<1x32xf32, #tpu.memory_space<vmem>>, vector<1x32xf32>
    %cst_45 = arith.constant dense<0.000000e+00> : vector<1x32xf32>
    %62 = tpu.matmul %46, %37, %cst_45 {dimension_numbers = #tpu.dot_dimension_numbers<[1], [1], [0], [0], [0, 0, 1, 0], [], []>} : vector<1x256xf32>, vector<32x256xf32>, vector<1x32xf32> -> vector<1x32xf32>
    %63 = arith.addf %61, %62 : vector<1x32xf32>
    %c0_46 = arith.constant 0 : index
    %c0_47 = arith.constant 0 : index
    %64 = vector.load %arg14[%c0_46, %c0_47] : memref<1x32xf32, #tpu.memory_space<vmem>>, vector<1x32xf32>
    tpu.vector_store %arg14[%c0_46, %c0_47], %63 {strides = array<i32>} : memref<1x32xf32, #tpu.memory_space<vmem>>, vector<1x32xf32>,
    %c0_i32_48 = arith.constant 0 : i32
    %65 = arith.cmpi eq, %arg1, %c0_i32_48 : i32
    %66 = arith.extui %65 : i1 to i32
    %c0_i32_49 = arith.constant 0 : i32
    %67 = arith.cmpi ne, %66, %c0_i32_49 : i32
    scf.if %67 {
      %c0_50 = arith.constant 0 : index
      %c0_51 = arith.constant 0 : index
      %68 = vector.load %arg11[%c0_50, %c0_51] : memref<32x1xf32, #tpu.memory_space<vmem>>, vector<32x1xf32>
      %cst_52 = arith.constant 1.000000e+00 : f32
      %69 = vector.broadcast %cst_52 : f32 to vector<32x1xf32>
      %70 = arith.maximumf %68, %69 : vector<32x1xf32>
      %cst_53 = arith.constant 1.000000e+00 : f32
      %71 = vector.broadcast %cst_53 : f32 to vector<32x1xf32>
      %72 = arith.divf %71, %70 : vector<32x1xf32>
      %c0_54 = arith.constant 0 : index
      %c0_55 = arith.constant 0 : index
      %73 = vector.load %arg12[%c0_54, %c0_55] : memref<1x32xf32, #tpu.memory_space<vmem>>, vector<1x32xf32>
      %cst_56 = arith.constant 1.000000e+00 : f32
      %74 = vector.broadcast %cst_56 : f32 to vector<1x32xf32>
      %75 = arith.maximumf %73, %74 : vector<1x32xf32>
      %cst_57 = arith.constant 1.000000e+00 : f32
      %76 = vector.broadcast %cst_57 : f32 to vector<1x32xf32>
      %77 = arith.divf %76, %75 : vector<1x32xf32>
      %c0_58 = arith.constant 0 : index
      %c0_59 = arith.constant 0 : index
      %78 = vector.load %arg13[%c0_58, %c0_59] : memref<32x1xf32, #tpu.memory_space<vmem>>, vector<32x1xf32>
      %cst_60 = arith.constant 1.000000e+00 : f32
      %79 = vector.broadcast %cst_60 : f32 to vector<32x1xf32>
      %80 = arith.maximumf %78, %79 : vector<32x1xf32>
      %cst_61 = arith.constant 1.000000e+00 : f32
      %81 = vector.broadcast %cst_61 : f32 to vector<32x1xf32>
      %82 = arith.divf %81, %80 : vector<32x1xf32>
      %c0_62 = arith.constant 0 : index
      %c0_63 = arith.constant 0 : index
      %83 = vector.load %arg14[%c0_62, %c0_63] : memref<1x32xf32, #tpu.memory_space<vmem>>, vector<1x32xf32>
      %cst_64 = arith.constant 1.000000e+00 : f32
      %84 = vector.broadcast %cst_64 : f32 to vector<1x32xf32>
      %85 = arith.maximumf %83, %84 : vector<1x32xf32>
      %cst_65 = arith.constant 1.000000e+00 : f32
      %86 = vector.broadcast %cst_65 : f32 to vector<1x32xf32>
      %87 = arith.divf %86, %85 : vector<1x32xf32>
      %c0_66 = arith.constant 0 : index
      %c0_67 = arith.constant 0 : index
      %88 = vector.load %arg9[%c0_66, %c0_67] : memref<32x4xf32, #tpu.memory_space<vmem>>, vector<32x4xf32>
      %c0_68 = arith.constant 0 : index
      %c0_69 = arith.constant 0 : index
      %89 = vector.load %arg10[%c0_68, %c0_69] : memref<32x4xf32, #tpu.memory_space<vmem>>, vector<32x4xf32>
      %cst_70 = arith.constant dense<0.000000e+00> : vector<32x32xf32>
      %90 = tpu.matmul %88, %89, %cst_70 {dimension_numbers = #tpu.dot_dimension_numbers<[1], [1], [0], [0], [0, 0, 1, 0], [], []>} : vector<32x4xf32>, vector<32x4xf32>, vector<32x32xf32> -> vector<32x32xf32>
      %cst_71 = arith.constant dense<0.000000e+00> : vector<32x32xf32>
      %91 = tpu.matmul %89, %88, %cst_71 {dimension_numbers = #tpu.dot_dimension_numbers<[1], [1], [0], [0], [0, 0, 1, 0], [], []>} : vector<32x4xf32>, vector<32x4xf32>, vector<32x32xf32> -> vector<32x32xf32>
      %92 = vector.broadcast %72 : vector<32x1xf32> to vector<32x32xf32>
      %93 = arith.mulf %90, %92 : vector<32x32xf32>
      %94 = vector.broadcast %87 : vector<1x32xf32> to vector<32x32xf32>
      %95 = arith.mulf %93, %94 : vector<32x32xf32>
      %cst_72 = arith.constant 1.000000e+00 : f32
      %96 = vector.broadcast %cst_72 : f32 to vector<32x32xf32>
      %97 = arith.addf %96, %95 : vector<32x32xf32>
      %98 = vector.broadcast %82 : vector<32x1xf32> to vector<32x32xf32>
      %99 = arith.mulf %91, %98 : vector<32x32xf32>
      %100 = vector.broadcast %77 : vector<1x32xf32> to vector<32x32xf32>
      %101 = arith.mulf %99, %100 : vector<32x32xf32>
      %cst_73 = arith.constant 1.000000e+00 : f32
      %102 = vector.broadcast %cst_73 : f32 to vector<32x32xf32>
      %103 = arith.addf %102, %101 : vector<32x32xf32>
      %104 = vector.extract_strided_slice %97 {offsets = [0, 0], sizes = [16, 32], strides = [1, 1]} : vector<32x32xf32> to vector<16x32xf32>
      %105 = vector.extract_strided_slice %97 {offsets = [16, 0], sizes = [16, 32], strides = [1, 1]} : vector<32x32xf32> to vector<16x32xf32>
      %106 = arith.mulf %104, %105 : vector<16x32xf32>
      %107 = vector.extract_strided_slice %106 {offsets = [0, 0], sizes = [8, 32], strides = [1, 1]} : vector<16x32xf32> to vector<8x32xf32>
      %108 = vector.extract_strided_slice %106 {offsets = [8, 0], sizes = [8, 32], strides = [1, 1]} : vector<16x32xf32> to vector<8x32xf32>
      %109 = arith.mulf %107, %108 : vector<8x32xf32>
      %110 = vector.extract_strided_slice %109 {offsets = [0, 0], sizes = [4, 32], strides = [1, 1]} : vector<8x32xf32> to vector<4x32xf32>
      %111 = vector.extract_strided_slice %109 {offsets = [4, 0], sizes = [4, 32], strides = [1, 1]} : vector<8x32xf32> to vector<4x32xf32>
      %112 = arith.mulf %110, %111 : vector<4x32xf32>
      %113 = vector.extract_strided_slice %112 {offsets = [0, 0], sizes = [2, 32], strides = [1, 1]} : vector<4x32xf32> to vector<2x32xf32>
      %114 = vector.extract_strided_slice %112 {offsets = [2, 0], sizes = [2, 32], strides = [1, 1]} : vector<4x32xf32> to vector<2x32xf32>
      %115 = arith.mulf %113, %114 : vector<2x32xf32>
      %116 = vector.extract_strided_slice %115 {offsets = [0, 0], sizes = [1, 32], strides = [1, 1]} : vector<2x32xf32> to vector<1x32xf32>
      %117 = vector.extract_strided_slice %115 {offsets = [1, 0], sizes = [1, 32], strides = [1, 1]} : vector<2x32xf32> to vector<1x32xf32>
      %118 = arith.mulf %116, %117 : vector<1x32xf32>
      %cst_74 = arith.constant 1.000000e+00 : f32
      %119 = vector.broadcast %cst_74 : f32 to vector<1x32xf32>
      %120 = arith.subf %118, %119 : vector<1x32xf32>
      %c0_75 = arith.constant 0 : index
      %c0_76 = arith.constant 0 : index
      %c0_77 = arith.constant 0 : index
      %121 = vector.load %arg8[%c0_75, %c0_76, %c0_77] : memref<1x1x32xf32, #tpu.memory_space<vmem>>, vector<1x1x32xf32>
      %122 = vector.shape_cast %121 : vector<1x1x32xf32> to vector<1x32xf32>
      %123 = vector.shape_cast %120 : vector<1x32xf32> to vector<1x1x32xf32>
      tpu.vector_store %arg8[%c0_75, %c0_76, %c0_77], %123 {strides = array<i32>} : memref<1x1x32xf32, #tpu.memory_space<vmem>>, vector<1x1x32xf32>,
      %124 = vector.extract_strided_slice %103 {offsets = [0, 0], sizes = [16, 32], strides = [1, 1]} : vector<32x32xf32> to vector<16x32xf32>
      %125 = vector.extract_strided_slice %103 {offsets = [16, 0], sizes = [16, 32], strides = [1, 1]} : vector<32x32xf32> to vector<16x32xf32>
      %126 = arith.mulf %124, %125 : vector<16x32xf32>
      %127 = vector.extract_strided_slice %126 {offsets = [0, 0], sizes = [8, 32], strides = [1, 1]} : vector<16x32xf32> to vector<8x32xf32>
      %128 = vector.extract_strided_slice %126 {offsets = [8, 0], sizes = [8, 32], strides = [1, 1]} : vector<16x32xf32> to vector<8x32xf32>
      %129 = arith.mulf %127, %128 : vector<8x32xf32>
      %130 = vector.extract_strided_slice %129 {offsets = [0, 0], sizes = [4, 32], strides = [1, 1]} : vector<8x32xf32> to vector<4x32xf32>
      %131 = vector.extract_strided_slice %129 {offsets = [4, 0], sizes = [4, 32], strides = [1, 1]} : vector<8x32xf32> to vector<4x32xf32>
      %132 = arith.mulf %130, %131 : vector<4x32xf32>
      %133 = vector.extract_strided_slice %132 {offsets = [0, 0], sizes = [2, 32], strides = [1, 1]} : vector<4x32xf32> to vector<2x32xf32>
      %134 = vector.extract_strided_slice %132 {offsets = [2, 0], sizes = [2, 32], strides = [1, 1]} : vector<4x32xf32> to vector<2x32xf32>
      %135 = arith.mulf %133, %134 : vector<2x32xf32>
      %136 = vector.extract_strided_slice %135 {offsets = [0, 0], sizes = [1, 32], strides = [1, 1]} : vector<2x32xf32> to vector<1x32xf32>
      %137 = vector.extract_strided_slice %135 {offsets = [1, 0], sizes = [1, 32], strides = [1, 1]} : vector<2x32xf32> to vector<1x32xf32>
      %138 = arith.mulf %136, %137 : vector<1x32xf32>
      %cst_78 = arith.constant 1.000000e+00 : f32
      %139 = vector.broadcast %cst_78 : f32 to vector<1x32xf32>
      %140 = arith.subf %138, %139 : vector<1x32xf32>
      %c0_79 = arith.constant 0 : index
      %c0_80 = arith.constant 0 : index
      %c0_81 = arith.constant 0 : index
      %141 = vector.load %arg7[%c0_79, %c0_80, %c0_81] : memref<1x1x32xf32, #tpu.memory_space<vmem>>, vector<1x1x32xf32>
      %142 = vector.shape_cast %141 : vector<1x1x32xf32> to vector<1x32xf32>
      %143 = vector.shape_cast %140 : vector<1x32xf32> to vector<1x1x32xf32>
      tpu.vector_store %arg7[%c0_79, %c0_80, %c0_81], %143 {strides = array<i32>} : memref<1x1x32xf32, #tpu.memory_space<vmem>>, vector<1x1x32xf32>,
    } else {
    }
    return
  }
  func.func @transform_0(%arg0: i32, %arg1: i32) -> (i32, i32, i32) {
    %c0_i32 = arith.constant 0 : i32
    %c0_i32_0 = arith.constant 0 : i32
    %c0_i32_1 = arith.constant 0 : i32
    return %arg0, %c0_i32, %c0_i32_0 : i32, i32, i32
  }
  func.func @transform_1(%arg0: i32, %arg1: i32) -> (i32, i32, i32) {
    %c0_i32 = arith.constant 0 : i32
    %c0_i32_0 = arith.constant 0 : i32
    %c0_i32_1 = arith.constant 0 : i32
    return %arg0, %c0_i32, %c0_i32_0 : i32, i32, i32
  }
  func.func @transform_2(%arg0: i32, %arg1: i32) -> (i32, i32, i32) {
    %c0_i32 = arith.constant 0 : i32
    %c0_i32_0 = arith.constant 0 : i32
    return %arg0, %c0_i32, %arg1 : i32, i32, i32
  }
  func.func @transform_3(%arg0: i32, %arg1: i32) -> (i32, i32, i32) {
    %c0_i32 = arith.constant 0 : i32
    %c0_i32_0 = arith.constant 0 : i32
    return %arg0, %c0_i32, %arg1 : i32, i32, i32
  }
  func.func @transform_4(%arg0: i32, %arg1: i32) -> (i32, i32, i32) {
    %c0_i32 = arith.constant 0 : i32
    %c0_i32_0 = arith.constant 0 : i32
    return %arg0, %c0_i32, %arg1 : i32, i32, i32
  }
  func.func @transform_5(%arg0: i32, %arg1: i32) -> (i32, i32, i32) {
    %c0_i32 = arith.constant 0 : i32
    %c0_i32_0 = arith.constant 0 : i32
    %c0_i32_1 = arith.constant 0 : i32
    return %arg0, %c0_i32, %c0_i32_0 : i32, i32, i32
  }
  func.func @transform_6(%arg0: i32, %arg1: i32) -> (i32, i32, i32) {
    %c0_i32 = arith.constant 0 : i32
    %c0_i32_0 = arith.constant 0 : i32
    %c0_i32_1 = arith.constant 0 : i32
    return %arg0, %c0_i32, %c0_i32_0 : i32, i32, i32
  }
}

module attributes {stable_mosaic.version = 11 : i64} {
  func.func @_comp_apply_kernel(%arg0: i32, %arg1: i32, %arg2: memref<1x32x1xi32, #tpu.memory_space<vmem>>, %arg3: memref<1x32x1xi32, #tpu.memory_space<vmem>>, %arg4: memref<1x1x32xf32, #tpu.memory_space<vmem>>, %arg5: memref<1x1x32xf32, #tpu.memory_space<vmem>>, %arg6: memref<1x4x256xf32, #tpu.memory_space<vmem>>, %arg7: memref<1x1x256xi32, #tpu.memory_space<vmem>>, %arg8: memref<1x1x256xi32, #tpu.memory_space<vmem>>, %arg9: memref<1x4x256xf32, #tpu.memory_space<vmem>>) attributes {dimension_semantics = [#tpu.dimension_semantics<parallel>, #tpu.dimension_semantics<parallel>], iteration_bounds = array<i64: 2, 1>, scalar_prefetch = 0 : i64, scratch_operands = 0 : i64, tpu.core_type = #tpu.core_type<tc>, window_params = [{transform_indices = @transform_0, window_bounds = array<i64: 1, 32, 1>}, {transform_indices = @transform_1, window_bounds = array<i64: 1, 32, 1>}, {transform_indices = @transform_2, window_bounds = array<i64: 1, 1, 32>}, {transform_indices = @transform_3, window_bounds = array<i64: 1, 1, 32>}, {transform_indices = @transform_4, window_bounds = array<i64: 1, 4, 256>}, {transform_indices = @transform_5, window_bounds = array<i64: 1, 1, 256>}, {transform_indices = @transform_6, window_bounds = array<i64: 1, 1, 256>}, {transform_indices = @transform_7, window_bounds = array<i64: 1, 4, 256>}]} {
    %c0 = arith.constant 0 : index
    %c0_0 = arith.constant 0 : index
    %c0_1 = arith.constant 0 : index
    %0 = vector.load %arg6[%c0, %c0_0, %c0_1] : memref<1x4x256xf32, #tpu.memory_space<vmem>>, vector<1x4x256xf32>
    %1 = vector.shape_cast %0 : vector<1x4x256xf32> to vector<4x256xf32>
    %c0_2 = arith.constant 0 : index
    %c0_3 = arith.constant 0 : index
    %c0_4 = arith.constant 0 : index
    %2 = vector.load %arg7[%c0_2, %c0_3, %c0_4] : memref<1x1x256xi32, #tpu.memory_space<vmem>>, vector<1x1x256xi32>
    %3 = vector.shape_cast %2 : vector<1x1x256xi32> to vector<1x256xi32>
    %c0_5 = arith.constant 0 : index
    %c0_6 = arith.constant 0 : index
    %c0_7 = arith.constant 0 : index
    %4 = vector.load %arg8[%c0_5, %c0_6, %c0_7] : memref<1x1x256xi32, #tpu.memory_space<vmem>>, vector<1x1x256xi32>
    %5 = vector.shape_cast %4 : vector<1x1x256xi32> to vector<1x256xi32>
    %c0_8 = arith.constant 0 : index
    %c0_9 = arith.constant 0 : index
    %c0_10 = arith.constant 0 : index
    %6 = vector.load %arg2[%c0_8, %c0_9, %c0_10] : memref<1x32x1xi32, #tpu.memory_space<vmem>>, vector<1x32x1xi32>
    %7 = vector.shape_cast %6 : vector<1x32x1xi32> to vector<32x1xi32>
    %c0_11 = arith.constant 0 : index
    %c0_12 = arith.constant 0 : index
    %c0_13 = arith.constant 0 : index
    %8 = vector.load %arg3[%c0_11, %c0_12, %c0_13] : memref<1x32x1xi32, #tpu.memory_space<vmem>>, vector<1x32x1xi32>
    %9 = vector.shape_cast %8 : vector<1x32x1xi32> to vector<32x1xi32>
    %10 = tpu.iota {dimensions = array<i32: 0>} : vector<32x1xi32>
    %c0_i32 = arith.constant 0 : i32
    %11 = vector.broadcast %c0_i32 : i32 to vector<32x1xi32>
    %12 = arith.cmpi ne, %7, %11 : vector<32x1xi32>
    %c19_i32 = arith.constant 19 : i32
    %13 = vector.broadcast %c19_i32 : i32 to vector<32x1xi32>
    %14 = arith.cmpi slt, %10, %13 : vector<32x1xi32>
    %15 = arith.andi %12, %14 : vector<32x1xi1>
    %c0_i32_14 = arith.constant 0 : i32
    %16 = vector.broadcast %c0_i32_14 : i32 to vector<32x1xi32>
    %17 = arith.cmpi ne, %9, %16 : vector<32x1xi32>
    %c19_i32_15 = arith.constant 19 : i32
    %18 = vector.broadcast %c19_i32_15 : i32 to vector<32x1xi32>
    %19 = arith.cmpi slt, %10, %18 : vector<32x1xi32>
    %20 = arith.andi %17, %19 : vector<32x1xi1>
    %21 = vector.broadcast %3 : vector<1x256xi32> to vector<32x256xi32>
    %22 = vector.broadcast %7 : vector<32x1xi32> to vector<32x256xi32>
    %23 = arith.cmpi eq, %21, %22 : vector<32x256xi32>
    %24 = vector.broadcast %15 : vector<32x1xi1> to vector<32x256xi1>
    %25 = arith.andi %23, %24 : vector<32x256xi1>
    %26 = arith.extui %25 : vector<32x256xi1> to vector<32x256xi32>
    %27 = arith.sitofp %26 : vector<32x256xi32> to vector<32x256xf32>
    %28 = vector.broadcast %5 : vector<1x256xi32> to vector<32x256xi32>
    %29 = vector.broadcast %9 : vector<32x1xi32> to vector<32x256xi32>
    %30 = arith.cmpi eq, %28, %29 : vector<32x256xi32>
    %31 = vector.broadcast %20 : vector<32x1xi1> to vector<32x256xi1>
    %32 = arith.andi %30, %31 : vector<32x256xi1>
    %33 = arith.extui %32 : vector<32x256xi1> to vector<32x256xi32>
    %34 = arith.sitofp %33 : vector<32x256xi32> to vector<32x256xf32>
    %c0_16 = arith.constant 0 : index
    %c0_17 = arith.constant 0 : index
    %c0_18 = arith.constant 0 : index
    %35 = vector.load %arg4[%c0_16, %c0_17, %c0_18] : memref<1x1x32xf32, #tpu.memory_space<vmem>>, vector<1x1x32xf32>
    %36 = vector.shape_cast %35 : vector<1x1x32xf32> to vector<1x32xf32>
    %cst = arith.constant dense<0.000000e+00> : vector<1x256xf32>
    %37 = tpu.matmul %36, %27, %cst {dimension_numbers = #tpu.dot_dimension_numbers<[1], [0], [0], [1], [0, 0, 1, 1], [], []>} : vector<1x32xf32>, vector<32x256xf32>, vector<1x256xf32> -> vector<1x256xf32>
    %c0_19 = arith.constant 0 : index
    %c0_20 = arith.constant 0 : index
    %c0_21 = arith.constant 0 : index
    %38 = vector.load %arg5[%c0_19, %c0_20, %c0_21] : memref<1x1x32xf32, #tpu.memory_space<vmem>>, vector<1x1x32xf32>
    %39 = vector.shape_cast %38 : vector<1x1x32xf32> to vector<1x32xf32>
    %cst_22 = arith.constant dense<0.000000e+00> : vector<1x256xf32>
    %40 = tpu.matmul %39, %34, %cst_22 {dimension_numbers = #tpu.dot_dimension_numbers<[1], [0], [0], [1], [0, 0, 1, 1], [], []>} : vector<1x32xf32>, vector<32x256xf32>, vector<1x256xf32> -> vector<1x256xf32>
    %cst_23 = arith.constant 1.000000e+00 : f32
    %41 = vector.broadcast %cst_23 : f32 to vector<1x256xf32>
    %42 = arith.addf %41, %37 : vector<1x256xf32>
    %43 = arith.addf %42, %40 : vector<1x256xf32>
    %44 = vector.broadcast %43 : vector<1x256xf32> to vector<4x256xf32>
    %45 = arith.mulf %1, %44 : vector<4x256xf32>
    %c0_24 = arith.constant 0 : index
    %c0_25 = arith.constant 0 : index
    %c0_26 = arith.constant 0 : index
    %46 = vector.load %arg9[%c0_24, %c0_25, %c0_26] : memref<1x4x256xf32, #tpu.memory_space<vmem>>, vector<1x4x256xf32>
    %47 = vector.shape_cast %46 : vector<1x4x256xf32> to vector<4x256xf32>
    %48 = vector.shape_cast %45 : vector<4x256xf32> to vector<1x4x256xf32>
    tpu.vector_store %arg9[%c0_24, %c0_25, %c0_26], %48 {strides = array<i32>} : memref<1x4x256xf32, #tpu.memory_space<vmem>>, vector<1x4x256xf32>,
    return
  }
  func.func @transform_0(%arg0: i32, %arg1: i32) -> (i32, i32, i32) {
    %c0_i32 = arith.constant 0 : i32
    %c0_i32_0 = arith.constant 0 : i32
    %c0_i32_1 = arith.constant 0 : i32
    return %arg0, %c0_i32, %c0_i32_0 : i32, i32, i32
  }
  func.func @transform_1(%arg0: i32, %arg1: i32) -> (i32, i32, i32) {
    %c0_i32 = arith.constant 0 : i32
    %c0_i32_0 = arith.constant 0 : i32
    %c0_i32_1 = arith.constant 0 : i32
    return %arg0, %c0_i32, %c0_i32_0 : i32, i32, i32
  }
  func.func @transform_2(%arg0: i32, %arg1: i32) -> (i32, i32, i32) {
    %c0_i32 = arith.constant 0 : i32
    %c0_i32_0 = arith.constant 0 : i32
    %c0_i32_1 = arith.constant 0 : i32
    return %arg0, %c0_i32, %c0_i32_0 : i32, i32, i32
  }
  func.func @transform_3(%arg0: i32, %arg1: i32) -> (i32, i32, i32) {
    %c0_i32 = arith.constant 0 : i32
    %c0_i32_0 = arith.constant 0 : i32
    %c0_i32_1 = arith.constant 0 : i32
    return %arg0, %c0_i32, %c0_i32_0 : i32, i32, i32
  }
  func.func @transform_4(%arg0: i32, %arg1: i32) -> (i32, i32, i32) {
    %c0_i32 = arith.constant 0 : i32
    %c0_i32_0 = arith.constant 0 : i32
    return %arg0, %c0_i32, %arg1 : i32, i32, i32
  }
  func.func @transform_5(%arg0: i32, %arg1: i32) -> (i32, i32, i32) {
    %c0_i32 = arith.constant 0 : i32
    %c0_i32_0 = arith.constant 0 : i32
    return %arg0, %c0_i32, %arg1 : i32, i32, i32
  }
  func.func @transform_6(%arg0: i32, %arg1: i32) -> (i32, i32, i32) {
    %c0_i32 = arith.constant 0 : i32
    %c0_i32_0 = arith.constant 0 : i32
    return %arg0, %c0_i32, %arg1 : i32, i32, i32
  }
  func.func @transform_7(%arg0: i32, %arg1: i32) -> (i32, i32, i32) {
    %c0_i32 = arith.constant 0 : i32
    %c0_i32_0 = arith.constant 0 : i32
    return %arg0, %c0_i32, %arg1 : i32, i32, i32
  }
}

module attributes {stable_mosaic.version = 11 : i64} {
  func.func @kernel(%arg0: i32, %arg1: i32, %arg2: memref<1x4x256xf32, #tpu.memory_space<vmem>>, %arg3: memref<4x1xf32, #tpu.memory_space<vmem>>, %arg4: memref<4x1xf32, #tpu.memory_space<vmem>>, %arg5: memref<4x1xf32, #tpu.memory_space<vmem>>, %arg6: memref<4x1xf32, #tpu.memory_space<vmem>>, %arg7: memref<4x1xf32, #tpu.memory_space<vmem>>, %arg8: memref<4x1xf32, #tpu.memory_space<vmem>>) attributes {dimension_semantics = [#tpu.dimension_semantics<arbitrary>, #tpu.dimension_semantics<arbitrary>], iteration_bounds = array<i64: 2, 1>, scalar_prefetch = 0 : i64, scratch_operands = 2 : i64, tpu.core_type = #tpu.core_type<tc>, window_params = [{transform_indices = @transform_0, window_bounds = array<i64: 1, 4, 256>}, {pipeline_mode = #tpu.pipeline_mode<synchronous>, transform_indices = @transform_1, window_bounds = array<i64: 4, 1>}, {pipeline_mode = #tpu.pipeline_mode<synchronous>, transform_indices = @transform_2, window_bounds = array<i64: 4, 1>}, {pipeline_mode = #tpu.pipeline_mode<synchronous>, transform_indices = @transform_3, window_bounds = array<i64: 4, 1>}, {pipeline_mode = #tpu.pipeline_mode<synchronous>, transform_indices = @transform_4, window_bounds = array<i64: 4, 1>}]} {
    %c0_i32 = arith.constant 0 : i32
    %0 = arith.cmpi eq, %arg0, %c0_i32 : i32
    %c0_i32_0 = arith.constant 0 : i32
    %1 = arith.cmpi eq, %arg1, %c0_i32_0 : i32
    %2 = arith.andi %0, %1 : i1
    %3 = arith.extui %2 : i1 to i32
    %c0_i32_1 = arith.constant 0 : i32
    %4 = arith.cmpi ne, %3, %c0_i32_1 : i32
    scf.if %4 {
      %cst_15 = arith.constant 0.000000e+00 : f32
      %23 = vector.broadcast %cst_15 : f32 to vector<4x1xf32>
      %c0_16 = arith.constant 0 : index
      %c0_17 = arith.constant 0 : index
      %24 = vector.load %arg7[%c0_16, %c0_17] : memref<4x1xf32, #tpu.memory_space<vmem>>, vector<4x1xf32>
      tpu.vector_store %arg7[%c0_16, %c0_17], %23 {strides = array<i32>} : memref<4x1xf32, #tpu.memory_space<vmem>>, vector<4x1xf32>,
      %cst_18 = arith.constant 0.000000e+00 : f32
      %25 = vector.broadcast %cst_18 : f32 to vector<4x1xf32>
      %c0_19 = arith.constant 0 : index
      %c0_20 = arith.constant 0 : index
      %26 = vector.load %arg8[%c0_19, %c0_20] : memref<4x1xf32, #tpu.memory_space<vmem>>, vector<4x1xf32>
      tpu.vector_store %arg8[%c0_19, %c0_20], %25 {strides = array<i32>} : memref<4x1xf32, #tpu.memory_space<vmem>>, vector<4x1xf32>,
    } else {
    }
    %c0 = arith.constant 0 : index
    %c0_2 = arith.constant 0 : index
    %c0_3 = arith.constant 0 : index
    %5 = vector.load %arg2[%c0, %c0_2, %c0_3] : memref<1x4x256xf32, #tpu.memory_space<vmem>>, vector<1x4x256xf32>
    %6 = vector.shape_cast %5 : vector<1x4x256xf32> to vector<4x256xf32>
    %c0_4 = arith.constant 0 : index
    %c0_5 = arith.constant 0 : index
    %7 = vector.load %arg7[%c0_4, %c0_5] : memref<4x1xf32, #tpu.memory_space<vmem>>, vector<4x1xf32>
    %cst = arith.constant dense<0.000000e+00> : vector<4xf32>
    %8 = vector.multi_reduction <add>, %6, %cst [1] : vector<4x256xf32> to vector<4xf32>
    %9 = vector.shape_cast %8 : vector<4xf32> to vector<4x1xf32>
    %10 = arith.addf %7, %9 : vector<4x1xf32>
    %c0_6 = arith.constant 0 : index
    %c0_7 = arith.constant 0 : index
    %11 = vector.load %arg7[%c0_6, %c0_7] : memref<4x1xf32, #tpu.memory_space<vmem>>, vector<4x1xf32>
    tpu.vector_store %arg7[%c0_6, %c0_7], %10 {strides = array<i32>} : memref<4x1xf32, #tpu.memory_space<vmem>>, vector<4x1xf32>,
    %c0_8 = arith.constant 0 : index
    %c0_9 = arith.constant 0 : index
    %12 = vector.load %arg8[%c0_8, %c0_9] : memref<4x1xf32, #tpu.memory_space<vmem>>, vector<4x1xf32>
    %13 = arith.mulf %6, %6 : vector<4x256xf32>
    %cst_10 = arith.constant dense<0.000000e+00> : vector<4xf32>
    %14 = vector.multi_reduction <add>, %13, %cst_10 [1] : vector<4x256xf32> to vector<4xf32>
    %15 = vector.shape_cast %14 : vector<4xf32> to vector<4x1xf32>
    %16 = arith.addf %12, %15 : vector<4x1xf32>
    %c0_11 = arith.constant 0 : index
    %c0_12 = arith.constant 0 : index
    %17 = vector.load %arg8[%c0_11, %c0_12] : memref<4x1xf32, #tpu.memory_space<vmem>>, vector<4x1xf32>
    tpu.vector_store %arg8[%c0_11, %c0_12], %16 {strides = array<i32>} : memref<4x1xf32, #tpu.memory_space<vmem>>, vector<4x1xf32>,
    %c1_i32 = arith.constant 1 : i32
    %18 = arith.cmpi eq, %arg0, %c1_i32 : i32
    %c0_i32_13 = arith.constant 0 : i32
    %19 = arith.cmpi eq, %arg1, %c0_i32_13 : i32
    %20 = arith.andi %18, %19 : i1
    %21 = arith.extui %20 : i1 to i32
    %c0_i32_14 = arith.constant 0 : i32
    %22 = arith.cmpi ne, %21, %c0_i32_14 : i32
    scf.if %22 {
      %c0_15 = arith.constant 0 : index
      %c0_16 = arith.constant 0 : index
      %23 = vector.load %arg7[%c0_15, %c0_16] : memref<4x1xf32, #tpu.memory_space<vmem>>, vector<4x1xf32>
      %cst_17 = arith.constant 0.001953125 : f32
      %24 = vector.broadcast %cst_17 : f32 to vector<4x1xf32>
      %25 = arith.mulf %23, %24 : vector<4x1xf32>
      %c0_18 = arith.constant 0 : index
      %c0_19 = arith.constant 0 : index
      %26 = vector.load %arg8[%c0_18, %c0_19] : memref<4x1xf32, #tpu.memory_space<vmem>>, vector<4x1xf32>
      %cst_20 = arith.constant 0.001953125 : f32
      %27 = vector.broadcast %cst_20 : f32 to vector<4x1xf32>
      %28 = arith.mulf %26, %27 : vector<4x1xf32>
      %29 = arith.mulf %25, %25 : vector<4x1xf32>
      %30 = arith.subf %28, %29 : vector<4x1xf32>
      %c0_21 = arith.constant 0 : index
      %c0_22 = arith.constant 0 : index
      %31 = vector.load %arg3[%c0_21, %c0_22] : memref<4x1xf32, #tpu.memory_space<vmem>>, vector<4x1xf32>
      %cst_23 = arith.constant 9.99999974E-6 : f32
      %32 = vector.broadcast %cst_23 : f32 to vector<4x1xf32>
      %33 = arith.addf %30, %32 : vector<4x1xf32>
      %34 = math.rsqrt %33 : vector<4x1xf32>
      %35 = arith.mulf %31, %34 : vector<4x1xf32>
      %c0_24 = arith.constant 0 : index
      %c0_25 = arith.constant 0 : index
      %36 = vector.load %arg5[%c0_24, %c0_25] : memref<4x1xf32, #tpu.memory_space<vmem>>, vector<4x1xf32>
      tpu.vector_store %arg5[%c0_24, %c0_25], %35 {strides = array<i32>} : memref<4x1xf32, #tpu.memory_space<vmem>>, vector<4x1xf32>,
      %c0_26 = arith.constant 0 : index
      %c0_27 = arith.constant 0 : index
      %37 = vector.load %arg4[%c0_26, %c0_27] : memref<4x1xf32, #tpu.memory_space<vmem>>, vector<4x1xf32>
      %38 = arith.mulf %25, %35 : vector<4x1xf32>
      %39 = arith.subf %37, %38 : vector<4x1xf32>
      %c0_28 = arith.constant 0 : index
      %c0_29 = arith.constant 0 : index
      %40 = vector.load %arg6[%c0_28, %c0_29] : memref<4x1xf32, #tpu.memory_space<vmem>>, vector<4x1xf32>
      tpu.vector_store %arg6[%c0_28, %c0_29], %39 {strides = array<i32>} : memref<4x1xf32, #tpu.memory_space<vmem>>, vector<4x1xf32>,
    } else {
    }
    return
  }
  func.func @transform_0(%arg0: i32, %arg1: i32) -> (i32, i32, i32) {
    %c0_i32 = arith.constant 0 : i32
    %c0_i32_0 = arith.constant 0 : i32
    return %arg0, %c0_i32, %arg1 : i32, i32, i32
  }
  func.func @transform_1(%arg0: i32, %arg1: i32) -> (i32, i32) {
    %c0_i32 = arith.constant 0 : i32
    %c0_i32_0 = arith.constant 0 : i32
    %c0_i32_1 = arith.constant 0 : i32
    return %c0_i32, %c0_i32_0 : i32, i32
  }
  func.func @transform_2(%arg0: i32, %arg1: i32) -> (i32, i32) {
    %c0_i32 = arith.constant 0 : i32
    %c0_i32_0 = arith.constant 0 : i32
    %c0_i32_1 = arith.constant 0 : i32
    return %c0_i32, %c0_i32_0 : i32, i32
  }
  func.func @transform_3(%arg0: i32, %arg1: i32) -> (i32, i32) {
    %c0_i32 = arith.constant 0 : i32
    %c0_i32_0 = arith.constant 0 : i32
    %c0_i32_1 = arith.constant 0 : i32
    return %c0_i32, %c0_i32_0 : i32, i32
  }
  func.func @transform_4(%arg0: i32, %arg1: i32) -> (i32, i32) {
    %c0_i32 = arith.constant 0 : i32
    %c0_i32_0 = arith.constant 0 : i32
    %c0_i32_1 = arith.constant 0 : i32
    return %c0_i32, %c0_i32_0 : i32, i32
  }
}

module attributes {stable_mosaic.version = 11 : i64} {
  func.func @_bn_apply_kernel(%arg0: i32, %arg1: i32, %arg2: memref<1x4x256xf32, #tpu.memory_space<vmem>>, %arg3: memref<4x1xf32, #tpu.memory_space<vmem>>, %arg4: memref<4x1xf32, #tpu.memory_space<vmem>>, %arg5: memref<1x4x256xf32, #tpu.memory_space<vmem>>) attributes {dimension_semantics = [#tpu.dimension_semantics<parallel>, #tpu.dimension_semantics<parallel>], iteration_bounds = array<i64: 2, 1>, scalar_prefetch = 0 : i64, scratch_operands = 0 : i64, tpu.core_type = #tpu.core_type<tc>, window_params = [{transform_indices = @transform_0, window_bounds = array<i64: 1, 4, 256>}, {pipeline_mode = #tpu.pipeline_mode<synchronous>, transform_indices = @transform_1, window_bounds = array<i64: 4, 1>}, {pipeline_mode = #tpu.pipeline_mode<synchronous>, transform_indices = @transform_2, window_bounds = array<i64: 4, 1>}, {transform_indices = @transform_3, window_bounds = array<i64: 1, 4, 256>}]} {
    %c0 = arith.constant 0 : index
    %c0_0 = arith.constant 0 : index
    %c0_1 = arith.constant 0 : index
    %0 = vector.load %arg2[%c0, %c0_0, %c0_1] : memref<1x4x256xf32, #tpu.memory_space<vmem>>, vector<1x4x256xf32>
    %1 = vector.shape_cast %0 : vector<1x4x256xf32> to vector<4x256xf32>
    %c0_2 = arith.constant 0 : index
    %c0_3 = arith.constant 0 : index
    %2 = vector.load %arg3[%c0_2, %c0_3] : memref<4x1xf32, #tpu.memory_space<vmem>>, vector<4x1xf32>
    %3 = vector.broadcast %2 : vector<4x1xf32> to vector<4x256xf32>
    %4 = arith.mulf %1, %3 : vector<4x256xf32>
    %c0_4 = arith.constant 0 : index
    %c0_5 = arith.constant 0 : index
    %5 = vector.load %arg4[%c0_4, %c0_5] : memref<4x1xf32, #tpu.memory_space<vmem>>, vector<4x1xf32>
    %6 = vector.broadcast %5 : vector<4x1xf32> to vector<4x256xf32>
    %7 = arith.addf %4, %6 : vector<4x256xf32>
    %c0_6 = arith.constant 0 : index
    %c0_7 = arith.constant 0 : index
    %c0_8 = arith.constant 0 : index
    %8 = vector.load %arg5[%c0_6, %c0_7, %c0_8] : memref<1x4x256xf32, #tpu.memory_space<vmem>>, vector<1x4x256xf32>
    %9 = vector.shape_cast %8 : vector<1x4x256xf32> to vector<4x256xf32>
    %10 = vector.shape_cast %7 : vector<4x256xf32> to vector<1x4x256xf32>
    tpu.vector_store %arg5[%c0_6, %c0_7, %c0_8], %10 {strides = array<i32>} : memref<1x4x256xf32, #tpu.memory_space<vmem>>, vector<1x4x256xf32>,
    return
  }
  func.func @transform_0(%arg0: i32, %arg1: i32) -> (i32, i32, i32) {
    %c0_i32 = arith.constant 0 : i32
    %c0_i32_0 = arith.constant 0 : i32
    return %arg0, %c0_i32, %arg1 : i32, i32, i32
  }
  func.func @transform_1(%arg0: i32, %arg1: i32) -> (i32, i32) {
    %c0_i32 = arith.constant 0 : i32
    %c0_i32_0 = arith.constant 0 : i32
    %c0_i32_1 = arith.constant 0 : i32
    return %c0_i32, %c0_i32_0 : i32, i32
  }
  func.func @transform_2(%arg0: i32, %arg1: i32) -> (i32, i32) {
    %c0_i32 = arith.constant 0 : i32
    %c0_i32_0 = arith.constant 0 : i32
    %c0_i32_1 = arith.constant 0 : i32
    return %c0_i32, %c0_i32_0 : i32, i32
  }
  func.func @transform_3(%arg0: i32, %arg1: i32) -> (i32, i32, i32) {
    %c0_i32 = arith.constant 0 : i32
    %c0_i32_0 = arith.constant 0 : i32
    return %arg0, %c0_i32, %arg1 : i32, i32, i32
  }
}

</mosaic_0001>

<llo_original>
// kernel: conn_comp_attention.5
$region0: #{conn_comp_attention.5}
  #allocation0 [shape = 'u32[]', space=smem, size = 0x4, offset = 0x4, fixed_abs, tag = 'smem constant byte address 0x4 - core index']
  #allocation1 [shape = 'u32[144,128]{1,0:T(1,128)}', space=vmem, size = 0x12000, scoped, tag = 'internal scratch']
  %s0 = inlined_call_operand.vmem [shape: f32[2,3,256], index: 0, kind: input, shape index: {}]
  %s1 = inlined_call_operand.vmem [shape: f32[2,3,256], index: 1, kind: output, shape index: {0}]
  %s2 = inlined_call_operand.vmem [shape: s32[2,1,256], index: 2, kind: output, shape index: {1}]
  %3 = xla_tuple %s1, %s2
  %s4 = sld [smem:[#allocation0]]
  $region45: #{conn_comp_attention.5} parent=0
    _
  %s6 = ssub.s32 1, %s4
  %s7 = scalar_select 0, %s6, %s4
  loop: start=0, step=1, limit=4
  $region2: #{conn_comp_attention.5} parent=0 // loop_pre_header
    _
  $region3: #{conn_comp_attention.5} parent=0 // loop_header
    %s9 = sphi 0, %s13
    %p10 = scmp.ge.s32.totalorder %s9, 4
    %s16 = sphi 0, %s28
    %s17 = sphi 0, %s24
    %s18 = sphi 0, %s16
    %s19 = sphi 0, %s17
    %s20 = sphi 0, %s18
    %s21 = sphi 0, %s19
    %s33 = sphi 0, %s35
    %s36 = sphi 0, %s33
    %s37 = sphi 0, %s36
    %s53 = sphi 0, %s37
    %s61 = sphi 0, %s63
    %s64 = sphi 0, %s61
    %s65 = sphi 0, %s64
    %s81 = sphi 0, %s65
    %s89 = sphi 0, %s91
    %s92 = sphi 0, %s89
    %s93 = sphi 0, %s92
    %s109 = sphi 0, %s93
  $region4: #{conn_comp_attention.5} parent=0 // loop_header_branch
    %12 = sbr.rel (%p10) target = $region8
  $region5: #{conn_comp_attention.5} parent=0 // loop_body
    %s14 = ssub.s32 %s9, 1
    %s15 = ssub.s32 %s9, 2
    %s22 = sadd.s32 1, %s17
    %p23 = scmp.ge.s32.totalorder %s22, 1
    %s24 = scalar_select %p23, 0, %s22
    %s25 = sadd.s32 1, %s16
    %s26 = scalar_select %p23, %s25, %s16
    %p27 = scmp.ge.s32.totalorder %s26, 2
    %s28 = scalar_select %p27, 0, %s26
    %s29 = ssub.s32 %s16, %s28
    %s30 = ssub.s32 %s17, %s24
    %s31 = sor.u32 %s29, %s30
    %p32 = scmp.eq.s32.totalorder %s31, 0
    %s34 = sadd.s32 %s33, 1
    %s35 = scalar_select %p32, %s33, %s34
    %p38 = pneg %p32
    %p39 = scmp.eq.s32.totalorder %s9, 1
    %p40 = por %p38, %p39
    %p41 = scmp.ne.s32.totalorder %s33, %s36
    %p42 = scmp.eq.s32.totalorder %s9, 0
    %p43 = por %p41, %p42
    %p44 = scmp.ne.s32.totalorder %s33, %s36
    %p45 = scmp.eq.s32.totalorder %s14, 1
    %p46 = por %p44, %p45
    %p47 = scmp.ne.s32.totalorder %s36, %s37
    %p48 = scmp.eq.s32.totalorder %s14, 0
    %p49 = por %p47, %p48
    %p50 = scmp.ne.s32.totalorder %s36, %s37
    %p51 = scmp.eq.s32.totalorder %s15, 1
    %p52 = por %p50, %p51
    %p54 = scmp.ne.s32.totalorder %s37, %s53
    %p55 = scmp.eq.s32.totalorder %s15, 0
    %p56 = por %p54, %p55
    %s57 = ssub.s32 %s16, %s28
    %s58 = ssub.s32 %s17, %s24
    %s59 = sor.u32 %s57, %s58
    %p60 = scmp.eq.s32.totalorder %s59, 0
    %s62 = sadd.s32 %s61, 1
    %s63 = scalar_select %p60, %s61, %s62
    %p66 = pneg %p60
    %p67 = scmp.eq.s32.totalorder %s9, 1
    %p68 = por %p66, %p67
    %p69 = scmp.ne.s32.totalorder %s61, %s64
    %p70 = scmp.eq.s32.totalorder %s9, 0
    %p71 = por %p69, %p70
    %p72 = scmp.ne.s32.totalorder %s61, %s64
    %p73 = scmp.eq.s32.totalorder %s14, 1
    %p74 = por %p72, %p73
    %p75 = scmp.ne.s32.totalorder %s64, %s65
    %p76 = scmp.eq.s32.totalorder %s14, 0
    %p77 = por %p75, %p76
    %p78 = scmp.ne.s32.totalorder %s64, %s65
    %p79 = scmp.eq.s32.totalorder %s15, 1
    %p80 = por %p78, %p79
    %p82 = scmp.ne.s32.totalorder %s65, %s81
    %p83 = scmp.eq.s32.totalorder %s15, 0
    %p84 = por %p82, %p83
    %s85 = ssub.s32 %s16, %s28
    %s86 = ssub.s32 %s17, %s24
    %s87 = sor.u32 %s85, %s86
    %p88 = scmp.eq.s32.totalorder %s87, 0
    %s90 = sadd.s32 %s89, 1
    %s91 = scalar_select %p88, %s89, %s90
    %p94 = pneg %p88
    %p95 = scmp.eq.s32.totalorder %s9, 1
    %p96 = por %p94, %p95
    %p97 = scmp.ne.s32.totalorder %s89, %s92
    %p98 = scmp.eq.s32.totalorder %s9, 0
    %p99 = por %p97, %p98
    %p100 = scmp.ne.s32.totalorder %s89, %s92
    %p101 = scmp.eq.s32.totalorder %s14, 1
    %p102 = por %p100, %p101
    %p103 = scmp.ne.s32.totalorder %s92, %s93
    %p104 = scmp.eq.s32.totalorder %s14, 0
    %p105 = por %p103, %p104
    %p106 = scmp.ne.s32.totalorder %s92, %s93
    %p107 = scmp.eq.s32.totalorder %s15, 1
    %p108 = por %p106, %p107
    %p110 = scmp.ne.s32.totalorder %s93, %s109
    %p111 = scmp.eq.s32.totalorder %s15, 0
    %p112 = por %p110, %p111
    %p113 = scmp.le.s32.totalorder 1, %s9
    %p114 = scmp.lt.s32.totalorder %s9, 3
    %p115 = pnand %p113, %p114
    %p116 = pneg %p115
    // Predicated region
    $region9: #{conn_comp_attention.5} parent=5 // pred_check
      _
    $region10: #{conn_comp_attention.5} parent=5 // pred_check_branch
      %118 = sbr.rel (%p115) target = $region12
    $region11: #{conn_comp_attention.5} parent=5 // pred_region
      %s119 = ssub.s32 %s9, 1
    $region12: #{conn_comp_attention.5} parent=5 // pred_fallthru
      _
    %p120 = scmp.lt.s32.totalorder %s9, 2
    // Predicated region
    $region13: #{conn_comp_attention.5} parent=5 // pred_check
      %p121 = pneg %p120
    $region14: #{conn_comp_attention.5} parent=5 // pred_check_branch
      %123 = sbr.rel (%p121) target = $region16
    $region15: #{conn_comp_attention.5} parent=5 // pred_region
      // Predicated region
      $region17: #{conn_comp_attention.5} parent=15 // pred_check
        %p124 = pneg %p43
      $region18: #{conn_comp_attention.5} parent=15 // pred_check_branch
        %126 = sbr.rel (%p124) target = $region20
      $region19: #{conn_comp_attention.5} parent=15 // pred_region
        %s127 = smul.u32 2, %s17
        %p128 = scmp.lt.s32.totalorder %s16, 1
        %s129 = scalar_select %p128, %s16, 1
        %p130 = scmp.lt.s32.totalorder %s127, 1
        %s131 = scalar_select %p130, %s127, 1
        %s132 = smul.addr %s129, 2
        %s133 = sadd.s32 %s131, %s132
        %s134 = smul.addr %s133, 4
        %s135 = scalar_lea.vmem %s0, %s134
        %s136 = smul.u32 2, %s17
      $region20: #{conn_comp_attention.5} parent=15 // pred_fallthru
        _
    $region16: #{conn_comp_attention.5} parent=5 // pred_fallthru
      _
    %p137 = scmp.le.s32.totalorder 1, %s9
    %p138 = scmp.lt.s32.totalorder %s9, 3
    %p139 = pnand %p137, %p138
    %p140 = pneg %p139
    // Predicated region
    $region21: #{conn_comp_attention.5} parent=5 // pred_check
      _
    $region22: #{conn_comp_attention.5} parent=5 // pred_check_branch
      %142 = sbr.rel (%p139) target = $region24
    $region23: #{conn_comp_attention.5} parent=5 // pred_region
      %s143 = ssub.s32 %s9, 1
      %s144 = smul.u32 2, %s19
      %p145 = scmp.lt.s32.totalorder %s18, 1
      %s146 = scalar_select %p145, %s18, 1
      %p147 = scmp.lt.s32.totalorder %s144, 1
      %s148 = scalar_select %p147, %s144, 1
      %s149 = smul.addr %s146, 2
      %s150 = sadd.s32 %s148, %s149
      %s151 = smul.addr %s150, 4
      %s152 = scalar_lea.vmem %s0, %s151
      %p153 = pneg %p49
      %p154 = pneg %p46
      %p155 = pneg %p77
      %p156 = pneg %p74
      %s157 = smul.u32 2, %s19
      %p158 = scmp.lt.s32.totalorder %s18, 1
      %s159 = scalar_select %p158, %s18, 1
      %p160 = scmp.lt.s32.totalorder %s157, 1
      %s161 = scalar_select %p160, %s157, 1
      %s162 = smul.addr %s159, 2
      %s163 = sadd.s32 %s161, %s162
      %s164 = smul.addr %s163, 4
      %s165 = scalar_lea.vmem %s1, %s164
      %p166 = pneg %p105
      %p167 = pneg %p102
      %s168 = smul.u32 2, %s19
      %p169 = scmp.lt.s32.totalorder %s18, 1
      %s170 = scalar_select %p169, %s18, 1
      %p171 = scmp.lt.s32.totalorder %s168, 1
      %s172 = scalar_select %p171, %s168, 1
      %s173 = smul.addr %s170, 2
      %s174 = sadd.s32 %s172, %s173
      %s175 = scalar_lea.vmem %s2, %s174
      %s176 = smul.u32 2, %s19
      %p177 = scmp.lt.s32.totalorder %s18, 1
      %s178 = scalar_select %p177, %s18, 1
      %p179 = scmp.lt.s32.totalorder %s176, 1
      %s180 = scalar_select %p179, %s176, 1
      %s181 = smul.addr %s178, 2
      %s182 = sadd.s32 %s180, %s181
      %s183 = smul.addr %s182, 4
      %s184 = scalar_lea.vmem %s0, %s183
      %s185 = smul.u32 2, %s19
      %s186 = smul.u32 2, %s19
      %p187 = scmp.lt.s32.totalorder %s18, 1
      %s188 = scalar_select %p187, %s18, 1
      %p189 = scmp.lt.s32.totalorder %s186, 1
      %s190 = scalar_select %p189, %s186, 1
      %s191 = smul.addr %s188, 2
      %s192 = sadd.s32 %s190, %s191
      %s193 = smul.addr %s192, 4
      %s194 = scalar_lea.vmem %s1, %s193
      %s195 = smul.u32 2, %s19
      %s196 = smul.u32 2, %s19
      %p197 = scmp.lt.s32.totalorder %s18, 1
      %s198 = scalar_select %p197, %s18, 1
      %p199 = scmp.lt.s32.totalorder %s196, 1
      %s200 = scalar_select %p199, %s196, 1
      %s201 = smul.addr %s198, 2
      %s202 = sadd.s32 %s200, %s201
      %s203 = scalar_lea.vmem %s2, %s202
      %s204 = smul.u32 2, %s19
      %v205 = vld [vmem:[%s184] sm:$0x77]
      %v207 = vcombine.high %v205, %v205
      %vm209 = vcmask 1042432
      %v210 = vsel %vm209, %v205, -inf
      %v211 = vrot.slane %v210, 4
      %v212 = vmax.f32 %v210, %v211
      %v213 = vrot.slane %v212, 2
      %v214 = vmax.f32 %v212, %v213
      %v215 = vrot.slane %v214, 1
      %v216 = vmax.f32 %v214, %v215
      %v217 = vsel %vm209, %v207, -inf
      %v218 = vrot.slane %v217, 4
      %v219 = vmax.f32 %v217, %v218
      %v220 = vrot.slane %v219, 2
      %v221 = vmax.f32 %v219, %v220
      %v222 = vrot.slane %v221, 1
      %v223 = vmax.f32 %v221, %v222
      %v226 = vcombine.low %v216, %v223
      %v228 = vsub.f32 %v205, %v226
      %v229 = vmul.f32 %v228, 1.442695
      %v230 = vpow.pop %v229
      %v232 = vcombine.high %v230, %v230
      %v234 = vsel %vm209, %v230, 0.0
      %v235 = vrot.slane %v234, 4
      %v236 = vadd.f32 %v234, %v235
      %v237 = vrot.slane %v236, 2
      %v238 = vadd.f32 %v236, %v237
      %v239 = vrot.slane %v238, 1
      %v240 = vadd.f32 %v238, %v239
      %v241 = vsel %vm209, %v232, 0.0
      %v242 = vrot.slane %v241, 4
      %v243 = vadd.f32 %v241, %v242
      %v244 = vrot.slane %v243, 2
      %v245 = vadd.f32 %v243, %v244
      %v246 = vrot.slane %v245, 1
      %v247 = vadd.f32 %v245, %v246
      %v248 = vrcp.pop %v240
      %v249 = vrcp.pop %v247
      %v252 = vcombine.low %v248, %v249
      %v254 = vmul.f32 %v230, %v252
      %255 = vst [vmem:[%s194] sm:$0x77] %v254
      %v256 = vrot.slane %v205, 7
      %vm258 = vcmp.gt.f32.partialorder %v205, %v256
      %v259 = vsel %vm258, 1, 0
      %v260 = vrot.slane %v205, 5
      %v261 = vrot.slane %v260, 4
      %v263 = vmax.f32 %v205, %v261
      %v265 = vrot.slane %v263, 6
      %vm267 = vcmp.gt.f32.partialorder %v205, %v265
      %v268 = vrot.slane %v259, 7
      %v269 = vsel %vm267, 2, %v268
      %v271 = vunpack.c.l.s4 1966171168
      %v272 = vunpack.c.0.s8 %v271
      %v273 = vlaneseq
      %v274 = vshrl.u32 %v273, 7
      %v275 = vsub.s32 %v272, %v274
      %v276 = vrot.slane %v269, %v275
      %v278 = vunpack.c.l.s4 1966171168
      %v279 = vunpack.c.0.s8 %v278
      %v280 = vlaneseq
      %v281 = vshrl.u32 %v280, 7
      %v282 = vsub.s32 %v279, %v281
      %v283 = vrot.slane %v276, %v282
      %v284 = vcombine.high %v283, %v283
      %v285 = vlaneseq
      %vm286 = vcmp.ge.s32.totalorder %v285, 0
      %vm287 = vcmp.lt.s32.totalorder %v285, 256
      %vm288 = vmand %vm286, %vm287
      %289 = vst.msk [vmem:[%s203] sm:$0x3] %vm288, %v284
      %s290 = smul.u32 2, %s19
      %p291 = scmp.lt.s32.totalorder %s18, 1
      %s292 = scalar_select %p291, %s18, 1
      %p293 = scmp.lt.s32.totalorder %s290, 1
      %s294 = scalar_select %p293, %s290, 1
      %s295 = smul.addr %s292, 2
      %s296 = sadd.s32 %s294, %s295
      %s297 = smul.addr %s296, 4
      %s298 = scalar_lea.vmem %s1, %s297
      %s299 = smul.u32 2, %s19
      %p300 = scmp.lt.s32.totalorder %s18, 1
      %s301 = scalar_select %p300, %s18, 1
      %p302 = scmp.lt.s32.totalorder %s299, 1
      %s303 = scalar_select %p302, %s299, 1
      %s304 = smul.addr %s301, 2
      %s305 = sadd.s32 %s303, %s304
      %s306 = scalar_lea.vmem %s2, %s305
      // Predicated region
      $region25: #{conn_comp_attention.5} parent=23 // pred_check
        %p307 = pneg %p74
      $region26: #{conn_comp_attention.5} parent=23 // pred_check_branch
        %309 = sbr.rel (%p307) target = $region28
      $region27: #{conn_comp_attention.5} parent=23 // pred_region
        %s310 = smul.u32 2, %s19
      $region28: #{conn_comp_attention.5} parent=23 // pred_fallthru
        _
      // Predicated region
      $region29: #{conn_comp_attention.5} parent=23 // pred_check
        %p311 = pneg %p102
      $region30: #{conn_comp_attention.5} parent=23 // pred_check_branch
        %313 = sbr.rel (%p311) target = $region32
      $region31: #{conn_comp_attention.5} parent=23 // pred_region
        %s314 = smul.u32 2, %s19
      $region32: #{conn_comp_attention.5} parent=23 // pred_fallthru
        _
    $region24: #{conn_comp_attention.5} parent=5 // pred_fallthru
      _
    %p315 = scmp.le.s32.totalorder 2, %s9
    // Predicated region
    $region33: #{conn_comp_attention.5} parent=5 // pred_check
      %p316 = pneg %p315
    $region34: #{conn_comp_attention.5} parent=5 // pred_check_branch
      %318 = sbr.rel (%p316) target = $region36
    $region35: #{conn_comp_attention.5} parent=5 // pred_region
      %s319 = ssub.s32 %s9, 2
      // Predicated region
      $region37: #{conn_comp_attention.5} parent=35 // pred_check
        %p320 = pneg %p80
      $region38: #{conn_comp_attention.5} parent=35 // pred_check_branch
        %322 = sbr.rel (%p320) target = $region40
      $region39: #{conn_comp_attention.5} parent=35 // pred_region
        %s323 = smul.u32 2, %s21
        %p324 = scmp.lt.s32.totalorder %s20, 1
        %s325 = scalar_select %p324, %s20, 1
        %p326 = scmp.lt.s32.totalorder %s323, 1
        %s327 = scalar_select %p326, %s323, 1
        %s328 = smul.addr %s325, 2
        %s329 = sadd.s32 %s327, %s328
        %s330 = smul.addr %s329, 4
        %s331 = scalar_lea.vmem %s1, %s330
      $region40: #{conn_comp_attention.5} parent=35 // pred_fallthru
        _
      // Predicated region
      $region41: #{conn_comp_attention.5} parent=35 // pred_check
        %p332 = pneg %p108
      $region42: #{conn_comp_attention.5} parent=35 // pred_check_branch
        %334 = sbr.rel (%p332) target = $region44
      $region43: #{conn_comp_attention.5} parent=35 // pred_region
        %s335 = smul.u32 2, %s21
        %p336 = scmp.lt.s32.totalorder %s20, 1
        %s337 = scalar_select %p336, %s20, 1
        %p338 = scmp.lt.s32.totalorder %s335, 1
        %s339 = scalar_select %p338, %s335, 1
        %s340 = smul.addr %s337, 2
        %s341 = sadd.s32 %s339, %s340
        %s342 = scalar_lea.vmem %s2, %s341
      $region44: #{conn_comp_attention.5} parent=35 // pred_fallthru
        _
    $region36: #{conn_comp_attention.5} parent=5 // pred_fallthru
      _
  $region6: #{conn_comp_attention.5} parent=0 // loop_footer
    %s13 = sadd.s32 1, %s9
  $region7: #{conn_comp_attention.5} parent=0 // loop_footer_branch
    %8 = sbr.rel target = $region3
  $region8: #{conn_comp_attention.5} parent=0 // loop_exit
    _

// kernel: conn_comp_attention.7
$region0: #{conn_comp_attention.7}
  #allocation0 [shape = 'u32[]', space=smem, size = 0x4, offset = 0x4, fixed_abs, tag = 'smem constant byte address 0x4 - core index']
  #allocation1 [shape = 'u32[144,128]{1,0:T(1,128)}', space=vmem, size = 0x12000, scoped, tag = 'internal scratch']
  %s0 = inlined_call_operand.vmem [shape: s32[2,32,1], index: 0, kind: input, shape index: {}]
  %s1 = inlined_call_operand.vmem [shape: s32[2,32,1], index: 1, kind: input, shape index: {}]
  %s2 = inlined_call_operand.vmem [shape: f32[2,1,32], index: 2, kind: input, shape index: {}]
  %s3 = inlined_call_operand.vmem [shape: f32[2,1,32], index: 3, kind: input, shape index: {}]
  %s4 = inlined_call_operand.vmem [shape: f32[2,4,256], index: 4, kind: input, shape index: {}]
  %s5 = inlined_call_operand.vmem [shape: s32[2,1,256], index: 5, kind: input, shape index: {}]
  %s6 = inlined_call_operand.vmem [shape: s32[2,1,256], index: 6, kind: input, shape index: {}]
  %s7 = inlined_call_operand.vmem [shape: f32[2,4,256], index: 7, kind: output, shape index: {}]
  %s8 = sld [smem:[#allocation0]]
  $region61: #{conn_comp_attention.7} parent=0
    _
  %s10 = ssub.s32 1, %s8
  %s11 = scalar_select 0, %s10, %s8
  loop: start=0, step=1, limit=4
  $region2: #{conn_comp_attention.7} parent=0 // loop_pre_header
    _
  $region3: #{conn_comp_attention.7} parent=0 // loop_header
    %s13 = sphi 0, %s17
    %p14 = scmp.ge.s32.totalorder %s13, 4
    %s20 = sphi 0, %s32
    %s21 = sphi 0, %s28
    %s22 = sphi 0, %s20
    %s23 = sphi 0, %s21
    %s24 = sphi 0, %s22
    %s25 = sphi 0, %s23
    %s35 = sphi 0, %s37
    %s38 = sphi 0, %s35
    %s39 = sphi 0, %s38
    %s55 = sphi 0, %s39
    %s61 = sphi 0, %s63
    %s64 = sphi 0, %s61
    %s65 = sphi 0, %s64
    %s81 = sphi 0, %s65
    %s87 = sphi 0, %s89
    %s90 = sphi 0, %s87
    %s91 = sphi 0, %s90
    %s107 = sphi 0, %s91
    %s113 = sphi 0, %s115
    %s116 = sphi 0, %s113
    %s117 = sphi 0, %s116
    %s133 = sphi 0, %s117
    %s141 = sphi 0, %s143
    %s144 = sphi 0, %s141
    %s145 = sphi 0, %s144
    %s161 = sphi 0, %s145
    %s169 = sphi 0, %s171
    %s172 = sphi 0, %s169
    %s173 = sphi 0, %s172
    %s189 = sphi 0, %s173
    %s197 = sphi 0, %s199
    %s200 = sphi 0, %s197
    %s201 = sphi 0, %s200
    %s217 = sphi 0, %s201
    %s225 = sphi 0, %s227
    %s228 = sphi 0, %s225
    %s229 = sphi 0, %s228
    %s245 = sphi 0, %s229
  $region4: #{conn_comp_attention.7} parent=0 // loop_header_branch
    %16 = sbr.rel (%p14) target = $region8
  $region5: #{conn_comp_attention.7} parent=0 // loop_body
    %s18 = ssub.s32 %s13, 1
    %s19 = ssub.s32 %s13, 2
    %s26 = sadd.s32 1, %s21
    %p27 = scmp.ge.s32.totalorder %s26, 1
    %s28 = scalar_select %p27, 0, %s26
    %s29 = sadd.s32 1, %s20
    %s30 = scalar_select %p27, %s29, %s20
    %p31 = scmp.ge.s32.totalorder %s30, 2
    %s32 = scalar_select %p31, 0, %s30
    %s33 = ssub.s32 %s20, %s32
    %p34 = scmp.eq.s32.totalorder %s33, 0
    %s36 = sadd.s32 %s35, 1
    %s37 = scalar_select %p34, %s35, %s36
    %p40 = pneg %p34
    %p41 = scmp.eq.s32.totalorder %s13, 1
    %p42 = por %p40, %p41
    %p43 = scmp.ne.s32.totalorder %s35, %s38
    %p44 = scmp.eq.s32.totalorder %s13, 0
    %p45 = por %p43, %p44
    %p46 = scmp.ne.s32.totalorder %s35, %s38
    %p47 = scmp.eq.s32.totalorder %s18, 1
    %p48 = por %p46, %p47
    %p49 = scmp.ne.s32.totalorder %s38, %s39
    %p50 = scmp.eq.s32.totalorder %s18, 0
    %p51 = por %p49, %p50
    %p52 = scmp.ne.s32.totalorder %s38, %s39
    %p53 = scmp.eq.s32.totalorder %s19, 1
    %p54 = por %p52, %p53
    %p56 = scmp.ne.s32.totalorder %s39, %s55
    %p57 = scmp.eq.s32.totalorder %s19, 0
    %p58 = por %p56, %p57
    %s59 = ssub.s32 %s20, %s32
    %p60 = scmp.eq.s32.totalorder %s59, 0
    %s62 = sadd.s32 %s61, 1
    %s63 = scalar_select %p60, %s61, %s62
    %p66 = pneg %p60
    %p67 = scmp.eq.s32.totalorder %s13, 1
    %p68 = por %p66, %p67
    %p69 = scmp.ne.s32.totalorder %s61, %s64
    %p70 = scmp.eq.s32.totalorder %s13, 0
    %p71 = por %p69, %p70
    %p72 = scmp.ne.s32.totalorder %s61, %s64
    %p73 = scmp.eq.s32.totalorder %s18, 1
    %p74 = por %p72, %p73
    %p75 = scmp.ne.s32.totalorder %s64, %s65
    %p76 = scmp.eq.s32.totalorder %s18, 0
    %p77 = por %p75, %p76
    %p78 = scmp.ne.s32.totalorder %s64, %s65
    %p79 = scmp.eq.s32.totalorder %s19, 1
    %p80 = por %p78, %p79
    %p82 = scmp.ne.s32.totalorder %s65, %s81
    %p83 = scmp.eq.s32.totalorder %s19, 0
    %p84 = por %p82, %p83
    %s85 = ssub.s32 %s20, %s32
    %p86 = scmp.eq.s32.totalorder %s85, 0
    %s88 = sadd.s32 %s87, 1
    %s89 = scalar_select %p86, %s87, %s88
    %p92 = pneg %p86
    %p93 = scmp.eq.s32.totalorder %s13, 1
    %p94 = por %p92, %p93
    %p95 = scmp.ne.s32.totalorder %s87, %s90
    %p96 = scmp.eq.s32.totalorder %s13, 0
    %p97 = por %p95, %p96
    %p98 = scmp.ne.s32.totalorder %s87, %s90
    %p99 = scmp.eq.s32.totalorder %s18, 1
    %p100 = por %p98, %p99
    %p101 = scmp.ne.s32.totalorder %s90, %s91
    %p102 = scmp.eq.s32.totalorder %s18, 0
    %p103 = por %p101, %p102
    %p104 = scmp.ne.s32.totalorder %s90, %s91
    %p105 = scmp.eq.s32.totalorder %s19, 1
    %p106 = por %p104, %p105
    %p108 = scmp.ne.s32.totalorder %s91, %s107
    %p109 = scmp.eq.s32.totalorder %s19, 0
    %p110 = por %p108, %p109
    %s111 = ssub.s32 %s20, %s32
    %p112 = scmp.eq.s32.totalorder %s111, 0
    %s114 = sadd.s32 %s113, 1
    %s115 = scalar_select %p112, %s113, %s114
    %p118 = pneg %p112
    %p119 = scmp.eq.s32.totalorder %s13, 1
    %p120 = por %p118, %p119
    %p121 = scmp.ne.s32.totalorder %s113, %s116
    %p122 = scmp.eq.s32.totalorder %s13, 0
    %p123 = por %p121, %p122
    %p124 = scmp.ne.s32.totalorder %s113, %s116
    %p125 = scmp.eq.s32.totalorder %s18, 1
    %p126 = por %p124, %p125
    %p127 = scmp.ne.s32.totalorder %s116, %s117
    %p128 = scmp.eq.s32.totalorder %s18, 0
    %p129 = por %p127, %p128
    %p130 = scmp.ne.s32.totalorder %s116, %s117
    %p131 = scmp.eq.s32.totalorder %s19, 1
    %p132 = por %p130, %p131
    %p134 = scmp.ne.s32.totalorder %s117, %s133
    %p135 = scmp.eq.s32.totalorder %s19, 0
    %p136 = por %p134, %p135
    %s137 = ssub.s32 %s20, %s32
    %s138 = ssub.s32 %s21, %s28
    %s139 = sor.u32 %s137, %s138
    %p140 = scmp.eq.s32.totalorder %s139, 0
    %s142 = sadd.s32 %s141, 1
    %s143 = scalar_select %p140, %s141, %s142
    %p146 = pneg %p140
    %p147 = scmp.eq.s32.totalorder %s13, 1
    %p148 = por %p146, %p147
    %p149 = scmp.ne.s32.totalorder %s141, %s144
    %p150 = scmp.eq.s32.totalorder %s13, 0
    %p151 = por %p149, %p150
    %p152 = scmp.ne.s32.totalorder %s141, %s144
    %p153 = scmp.eq.s32.totalorder %s18, 1
    %p154 = por %p152, %p153
    %p155 = scmp.ne.s32.totalorder %s144, %s145
    %p156 = scmp.eq.s32.totalorder %s18, 0
    %p157 = por %p155, %p156
    %p158 = scmp.ne.s32.totalorder %s144, %s145
    %p159 = scmp.eq.s32.totalorder %s19, 1
    %p160 = por %p158, %p159
    %p162 = scmp.ne.s32.totalorder %s145, %s161
    %p163 = scmp.eq.s32.totalorder %s19, 0
    %p164 = por %p162, %p163
    %s165 = ssub.s32 %s20, %s32
    %s166 = ssub.s32 %s21, %s28
    %s167 = sor.u32 %s165, %s166
    %p168 = scmp.eq.s32.totalorder %s167, 0
    %s170 = sadd.s32 %s169, 1
    %s171 = scalar_select %p168, %s169, %s170
    %p174 = pneg %p168
    %p175 = scmp.eq.s32.totalorder %s13, 1
    %p176 = por %p174, %p175
    %p177 = scmp.ne.s32.totalorder %s169, %s172
    %p178 = scmp.eq.s32.totalorder %s13, 0
    %p179 = por %p177, %p178
    %p180 = scmp.ne.s32.totalorder %s169, %s172
    %p181 = scmp.eq.s32.totalorder %s18, 1
    %p182 = por %p180, %p181
    %p183 = scmp.ne.s32.totalorder %s172, %s173
    %p184 = scmp.eq.s32.totalorder %s18, 0
    %p185 = por %p183, %p184
    %p186 = scmp.ne.s32.totalorder %s172, %s173
    %p187 = scmp.eq.s32.totalorder %s19, 1
    %p188 = por %p186, %p187
    %p190 = scmp.ne.s32.totalorder %s173, %s189
    %p191 = scmp.eq.s32.totalorder %s19, 0
    %p192 = por %p190, %p191
    %s193 = ssub.s32 %s20, %s32
    %s194 = ssub.s32 %s21, %s28
    %s195 = sor.u32 %s193, %s194
    %p196 = scmp.eq.s32.totalorder %s195, 0
    %s198 = sadd.s32 %s197, 1
    %s199 = scalar_select %p196, %s197, %s198
    %p202 = pneg %p196
    %p203 = scmp.eq.s32.totalorder %s13, 1
    %p204 = por %p202, %p203
    %p205 = scmp.ne.s32.totalorder %s197, %s200
    %p206 = scmp.eq.s32.totalorder %s13, 0
    %p207 = por %p205, %p206
    %p208 = scmp.ne.s32.totalorder %s197, %s200
    %p209 = scmp.eq.s32.totalorder %s18, 1
    %p210 = por %p208, %p209
    %p211 = scmp.ne.s32.totalorder %s200, %s201
    %p212 = scmp.eq.s32.totalorder %s18, 0
    %p213 = por %p211, %p212
    %p214 = scmp.ne.s32.totalorder %s200, %s201
    %p215 = scmp.eq.s32.totalorder %s19, 1
    %p216 = por %p214, %p215
    %p218 = scmp.ne.s32.totalorder %s201, %s217
    %p219 = scmp.eq.s32.totalorder %s19, 0
    %p220 = por %p218, %p219
    %s221 = ssub.s32 %s20, %s32
    %s222 = ssub.s32 %s21, %s28
    %s223 = sor.u32 %s221, %s222
    %p224 = scmp.eq.s32.totalorder %s223, 0
    %s226 = sadd.s32 %s225, 1
    %s227 = scalar_select %p224, %s225, %s226
    %p230 = pneg %p224
    %p231 = scmp.eq.s32.totalorder %s13, 1
    %p232 = por %p230, %p231
    %p233 = scmp.ne.s32.totalorder %s225, %s228
    %p234 = scmp.eq.s32.totalorder %s13, 0
    %p235 = por %p233, %p234
    %p236 = scmp.ne.s32.totalorder %s225, %s228
    %p237 = scmp.eq.s32.totalorder %s18, 1
    %p238 = por %p236, %p237
    %p239 = scmp.ne.s32.totalorder %s228, %s229
    %p240 = scmp.eq.s32.totalorder %s18, 0
    %p241 = por %p239, %p240
    %p242 = scmp.ne.s32.totalorder %s228, %s229
    %p243 = scmp.eq.s32.totalorder %s19, 1
    %p244 = por %p242, %p243
    %p246 = scmp.ne.s32.totalorder %s229, %s245
    %p247 = scmp.eq.s32.totalorder %s19, 0
    %p248 = por %p246, %p247
    %p249 = scmp.le.s32.totalorder 1, %s13
    %p250 = scmp.lt.s32.totalorder %s13, 3
    %p251 = pnand %p249, %p250
    %p252 = pneg %p251
    // Predicated region
    $region9: #{conn_comp_attention.7} parent=5 // pred_check
      _
    $region10: #{conn_comp_attention.7} parent=5 // pred_check_branch
      %254 = sbr.rel (%p251) target = $region12
    $region11: #{conn_comp_attention.7} parent=5 // pred_region
      %s255 = ssub.s32 %s13, 1
    $region12: #{conn_comp_attention.7} parent=5 // pred_fallthru
      _
    %p256 = scmp.lt.s32.totalorder %s13, 2
    // Predicated region
    $region13: #{conn_comp_attention.7} parent=5 // pred_check
      %p257 = pneg %p256
    $region14: #{conn_comp_attention.7} parent=5 // pred_check_branch
      %259 = sbr.rel (%p257) target = $region16
    $region15: #{conn_comp_attention.7} parent=5 // pred_region
      // Predicated region
      $region17: #{conn_comp_attention.7} parent=15 // pred_check
        %p260 = pneg %p45
      $region18: #{conn_comp_attention.7} parent=15 // pred_check_branch
        %262 = sbr.rel (%p260) target = $region20
      $region19: #{conn_comp_attention.7} parent=15 // pred_region
        %p263 = scmp.lt.s32.totalorder %s20, 1
        %s264 = scalar_select %p263, %s20, 1
        %s265 = smul.addr %s264, 4
        %s266 = smul.addr %s265, 8
        %s267 = scalar_lea.vmem %s0, %s266
      $region20: #{conn_comp_attention.7} parent=15 // pred_fallthru
        _
      // Predicated region
      $region21: #{conn_comp_attention.7} parent=15 // pred_check
        %p268 = pneg %p71
      $region22: #{conn_comp_attention.7} parent=15 // pred_check_branch
        %270 = sbr.rel (%p268) target = $region24
      $region23: #{conn_comp_attention.7} parent=15 // pred_region
        %p271 = scmp.lt.s32.totalorder %s20, 1
        %s272 = scalar_select %p271, %s20, 1
        %s273 = smul.addr %s272, 4
        %s274 = smul.addr %s273, 8
        %s275 = scalar_lea.vmem %s1, %s274
      $region24: #{conn_comp_attention.7} parent=15 // pred_fallthru
        _
      // Predicated region
      $region25: #{conn_comp_attention.7} parent=15 // pred_check
        %p276 = pneg %p97
      $region26: #{conn_comp_attention.7} parent=15 // pred_check_branch
        %278 = sbr.rel (%p276) target = $region28
      $region27: #{conn_comp_attention.7} parent=15 // pred_region
        %p279 = scmp.lt.s32.totalorder %s20, 1
        %s280 = scalar_select %p279, %s20, 1
        %s281 = scalar_lea.vmem %s2, %s280
      $region28: #{conn_comp_attention.7} parent=15 // pred_fallthru
        _
      // Predicated region
      $region29: #{conn_comp_attention.7} parent=15 // pred_check
        %p282 = pneg %p123
      $region30: #{conn_comp_attention.7} parent=15 // pred_check_branch
        %284 = sbr.rel (%p282) target = $region32
      $region31: #{conn_comp_attention.7} parent=15 // pred_region
        %p285 = scmp.lt.s32.totalorder %s20, 1
        %s286 = scalar_select %p285, %s20, 1
        %s287 = scalar_lea.vmem %s3, %s286
      $region32: #{conn_comp_attention.7} parent=15 // pred_fallthru
        _
      // Predicated region
      $region33: #{conn_comp_attention.7} parent=15 // pred_check
        %p288 = pneg %p151
      $region34: #{conn_comp_attention.7} parent=15 // pred_check_branch
        %290 = sbr.rel (%p288) target = $region36
      $region35: #{conn_comp_attention.7} parent=15 // pred_region
        %s291 = smul.u32 2, %s21
        %p292 = scmp.lt.s32.totalorder %s20, 1
        %s293 = scalar_select %p292, %s20, 1
        %p294 = scmp.lt.s32.totalorder %s291, 1
        %s295 = scalar_select %p294, %s291, 1
        %s296 = smul.addr %s293, 2
        %s297 = sadd.s32 %s295, %s296
        %s298 = smul.addr %s297, 4
        %s299 = scalar_lea.vmem %s4, %s298
        %s300 = smul.u32 2, %s21
      $region36: #{conn_comp_attention.7} parent=15 // pred_fallthru
        _
      // Predicated region
      $region37: #{conn_comp_attention.7} parent=15 // pred_check
        %p301 = pneg %p179
      $region38: #{conn_comp_attention.7} parent=15 // pred_check_branch
        %303 = sbr.rel (%p301) target = $region40
      $region39: #{conn_comp_attention.7} parent=15 // pred_region
        %s304 = smul.u32 2, %s21
        %p305 = scmp.lt.s32.totalorder %s20, 1
        %s306 = scalar_select %p305, %s20, 1
        %p307 = scmp.lt.s32.totalorder %s304, 1
        %s308 = scalar_select %p307, %s304, 1
        %s309 = smul.addr %s306, 2
        %s310 = sadd.s32 %s308, %s309
        %s311 = scalar_lea.vmem %s5, %s310
        %s312 = smul.u32 2, %s21
      $region40: #{conn_comp_attention.7} parent=15 // pred_fallthru
        _
      // Predicated region
      $region41: #{conn_comp_attention.7} parent=15 // pred_check
        %p313 = pneg %p207
      $region42: #{conn_comp_attention.7} parent=15 // pred_check_branch
        %315 = sbr.rel (%p313) target = $region44
      $region43: #{conn_comp_attention.7} parent=15 // pred_region
        %s316 = smul.u32 2, %s21
        %p317 = scmp.lt.s32.totalorder %s20, 1
        %s318 = scalar_select %p317, %s20, 1
        %p319 = scmp.lt.s32.totalorder %s316, 1
        %s320 = scalar_select %p319, %s316, 1
        %s321 = smul.addr %s318, 2
        %s322 = sadd.s32 %s320, %s321
        %s323 = scalar_lea.vmem %s6, %s322
        %s324 = smul.u32 2, %s21
      $region44: #{conn_comp_attention.7} parent=15 // pred_fallthru
        _
    $region16: #{conn_comp_attention.7} parent=5 // pred_fallthru
      _
    %p325 = scmp.le.s32.totalorder 1, %s13
    %p326 = scmp.lt.s32.totalorder %s13, 3
    %p327 = pnand %p325, %p326
    %p328 = pneg %p327
    // Predicated region
    $region45: #{conn_comp_attention.7} parent=5 // pred_check
      _
    $region46: #{conn_comp_attention.7} parent=5 // pred_check_branch
      %330 = sbr.rel (%p327) target = $region48
    $region47: #{conn_comp_attention.7} parent=5 // pred_region
      %s331 = ssub.s32 %s13, 1
      %p332 = scmp.lt.s32.totalorder %s22, 1
      %s333 = scalar_select %p332, %s22, 1
      %s334 = smul.addr %s333, 4
      %s335 = smul.addr %s334, 8
      %s336 = scalar_lea.vmem %s0, %s335
      %p337 = pneg %p51
      %p338 = pneg %p48
      %p339 = scmp.lt.s32.totalorder %s22, 1
      %s340 = scalar_select %p339, %s22, 1
      %s341 = smul.addr %s340, 4
      %s342 = smul.addr %s341, 8
      %s343 = scalar_lea.vmem %s1, %s342
      %p344 = pneg %p77
      %p345 = pneg %p74
      %p346 = scmp.lt.s32.totalorder %s22, 1
      %s347 = scalar_select %p346, %s22, 1
      %s348 = scalar_lea.vmem %s2, %s347
      %p349 = pneg %p103
      %p350 = pneg %p100
      %p351 = scmp.lt.s32.totalorder %s22, 1
      %s352 = scalar_select %p351, %s22, 1
      %s353 = scalar_lea.vmem %s3, %s352
      %p354 = pneg %p129
      %p355 = pneg %p126
      %s356 = smul.u32 2, %s23
      %p357 = scmp.lt.s32.totalorder %s22, 1
      %s358 = scalar_select %p357, %s22, 1
      %p359 = scmp.lt.s32.totalorder %s356, 1
      %s360 = scalar_select %p359, %s356, 1
      %s361 = smul.addr %s358, 2
      %s362 = sadd.s32 %s360, %s361
      %s363 = smul.addr %s362, 4
      %s364 = scalar_lea.vmem %s4, %s363
      %p365 = pneg %p157
      %p366 = pneg %p154
      %s367 = smul.u32 2, %s23
      %p368 = scmp.lt.s32.totalorder %s22, 1
      %s369 = scalar_select %p368, %s22, 1
      %p370 = scmp.lt.s32.totalorder %s367, 1
      %s371 = scalar_select %p370, %s367, 1
      %s372 = smul.addr %s369, 2
      %s373 = sadd.s32 %s371, %s372
      %s374 = scalar_lea.vmem %s5, %s373
      %p375 = pneg %p185
      %p376 = pneg %p182
      %s377 = smul.u32 2, %s23
      %p378 = scmp.lt.s32.totalorder %s22, 1
      %s379 = scalar_select %p378, %s22, 1
      %p380 = scmp.lt.s32.totalorder %s377, 1
      %s381 = scalar_select %p380, %s377, 1
      %s382 = smul.addr %s379, 2
      %s383 = sadd.s32 %s381, %s382
      %s384 = scalar_lea.vmem %s6, %s383
      %p385 = pneg %p213
      %p386 = pneg %p210
      %p387 = pneg %p241
      %p388 = pneg %p238
      %s389 = smul.u32 2, %s23
      %p390 = scmp.lt.s32.totalorder %s22, 1
      %s391 = scalar_select %p390, %s22, 1
      %p392 = scmp.lt.s32.totalorder %s389, 1
      %s393 = scalar_select %p392, %s389, 1
      %s394 = smul.addr %s391, 2
      %s395 = sadd.s32 %s393, %s394
      %s396 = smul.addr %s395, 4
      %s397 = scalar_lea.vmem %s7, %s396
      %p398 = scmp.lt.s32.totalorder %s22, 1
      %s399 = scalar_select %p398, %s22, 1
      %s400 = smul.addr %s399, 4
      %s401 = smul.addr %s400, 8
      %s402 = scalar_lea.vmem %s0, %s401
      %p403 = scmp.lt.s32.totalorder %s22, 1
      %s404 = scalar_select %p403, %s22, 1
      %s405 = smul.addr %s404, 4
      %s406 = smul.addr %s405, 8
      %s407 = scalar_lea.vmem %s1, %s406
      %p408 = scmp.lt.s32.totalorder %s22, 1
      %s409 = scalar_select %p408, %s22, 1
      %s410 = scalar_lea.vmem %s2, %s409
      %p411 = scmp.lt.s32.totalorder %s22, 1
      %s412 = scalar_select %p411, %s22, 1
      %s413 = scalar_lea.vmem %s3, %s412
      %s414 = smul.u32 2, %s23
      %p415 = scmp.lt.s32.totalorder %s22, 1
      %s416 = scalar_select %p415, %s22, 1
      %p417 = scmp.lt.s32.totalorder %s414, 1
      %s418 = scalar_select %p417, %s414, 1
      %s419 = smul.addr %s416, 2
      %s420 = sadd.s32 %s418, %s419
      %s421 = smul.addr %s420, 4
      %s422 = scalar_lea.vmem %s4, %s421
      %s423 = smul.u32 2, %s23
      %s424 = smul.u32 2, %s23
      %p425 = scmp.lt.s32.totalorder %s22, 1
      %s426 = scalar_select %p425, %s22, 1
      %p427 = scmp.lt.s32.totalorder %s424, 1
      %s428 = scalar_select %p427, %s424, 1
      %s429 = smul.addr %s426, 2
      %s430 = sadd.s32 %s428, %s429
      %s431 = scalar_lea.vmem %s5, %s430
      %s432 = smul.u32 2, %s23
      %s433 = smul.u32 2, %s23
      %p434 = scmp.lt.s32.totalorder %s22, 1
      %s435 = scalar_select %p434, %s22, 1
      %p436 = scmp.lt.s32.totalorder %s433, 1
      %s437 = scalar_select %p436, %s433, 1
      %s438 = smul.addr %s435, 2
      %s439 = sadd.s32 %s437, %s438
      %s440 = scalar_lea.vmem %s6, %s439
      %s441 = smul.u32 2, %s23
      %s442 = smul.u32 2, %s23
      %p443 = scmp.lt.s32.totalorder %s22, 1
      %s444 = scalar_select %p443, %s22, 1
      %p445 = scmp.lt.s32.totalorder %s442, 1
      %s446 = scalar_select %p445, %s442, 1
      %s447 = smul.addr %s444, 2
      %s448 = sadd.s32 %s446, %s447
      %s449 = smul.addr %s448, 4
      %s450 = scalar_lea.vmem %s7, %s449
      %s451 = smul.u32 2, %s23
      %v452 = vld [vmem:[%s422] sm:$0xff]
      %v453 = vld [vmem:[%s431] sm:$0x3]
      %v454 = vld [vmem:[%s440] sm:$0x3]
      %v455 = vld [vmem:[%s402] sm:$0xff]
      %v456 = vld [vmem:[%s402 + $0x8] sm:$0xff]
      %v457 = vld [vmem:[%s402 + $0x10] sm:$0xff]
      %v458 = vld [vmem:[%s402 + $0x18] sm:$0xff]
      %v459 = vld [vmem:[%s407] sm:$0xff]
      %v460 = vld [vmem:[%s407 + $0x8] sm:$0xff]
      %v461 = vld [vmem:[%s407 + $0x10] sm:$0xff]
      %v462 = vld [vmem:[%s407 + $0x18] sm:$0xff]
      %v463 = vlaneseq
      %v464 = vshrl.u32 %v463, 7
      %v465 = vadd.s32 %v464, 8
      %v466 = vadd.s32 %v464, 16
      %v467 = vadd.s32 %v464, 24
      %vm468 = vcmp.ne.s32.totalorder %v455, 0
      %vm469 = vcmp.ne.s32.totalorder %v456, 0
      %vm470 = vcmp.ne.s32.totalorder %v457, 0
      %vm471 = vcmp.ne.s32.totalorder %v458, 0
      %vm472 = vcmp.lt.s32.totalorder %v464, 19
      %vm473 = vcmp.lt.s32.totalorder %v465, 19
      %vm474 = vcmp.lt.s32.totalorder %v466, 19
      %vm475 = vcmp.lt.s32.totalorder %v467, 19
      %vm476 = vmand %vm468, %vm472
      %vm477 = vmand %vm469, %vm473
      %vm478 = vmand %vm470, %vm474
      %vm479 = vmand %vm471, %vm475
      %vm480 = vcmp.ne.s32.totalorder %v459, 0
      %vm481 = vcmp.ne.s32.totalorder %v460, 0
      %vm482 = vcmp.ne.s32.totalorder %v461, 0
      %vm483 = vcmp.ne.s32.totalorder %v462, 0
      %vm484 = vmand %vm480, %vm472
      %vm485 = vmand %vm481, %vm473
      %vm486 = vmand %vm482, %vm474
      %vm487 = vmand %vm483, %vm475
      %v488 = vlaneseq
      %v489 = vshrl.u32 %v488, 7
      %v490 = vsub.s32 0, %v489
      %v491 = vrot.slane %v453, %v490
      %v492 = vlaneseq
      %v493 = vshrl.u32 %v492, 7
      %v494 = vsub.s32 1, %v493
      %v495 = vrot.slane %v453, %v494
      %496 = vset.pattern.permute.xlu0 0
      %497 = vperm.xlu0 %496, %v455
      %v498 = vpop.permute.xlu0 %497
      %499 = vset.pattern.permute.xlu0 0
      %500 = vperm.xlu0 %499, %v456
      %v501 = vpop.permute.xlu0 %500
      %502 = vset.pattern.permute.xlu0 0
      %503 = vperm.xlu0 %502, %v457
      %v504 = vpop.permute.xlu0 %503
      %505 = vset.pattern.permute.xlu0 0
      %506 = vperm.xlu0 %505, %v458
      %v507 = vpop.permute.xlu0 %506
      %vm508 = vcmp.eq.s32.totalorder %v491, %v498
      %vm509 = vcmp.eq.s32.totalorder %v495, %v498
      %vm510 = vcmp.eq.s32.totalorder %v491, %v501
      %vm511 = vcmp.eq.s32.totalorder %v495, %v501
      %vm512 = vcmp.eq.s32.totalorder %v491, %v504
      %vm513 = vcmp.eq.s32.totalorder %v495, %v504
      %vm514 = vcmp.eq.s32.totalorder %v491, %v507
      %vm515 = vcmp.eq.s32.totalorder %v495, %v507
      %v516 = vsel %vm476, 1, 0
      %v517 = vsel %vm477, 1, 0
      %v518 = vsel %vm478, 1, 0
      %v519 = vsel %vm479, 1, 0
      %520 = vset.pattern.permute.xlu0 0
      %521 = vperm.xlu0 %520, %v516
      %v522 = vpop.permute.xlu0 %521
      %523 = vset.pattern.permute.xlu0 0
      %524 = vperm.xlu0 %523, %v517
      %v525 = vpop.permute.xlu0 %524
      %526 = vset.pattern.permute.xlu0 0
      %527 = vperm.xlu0 %526, %v518
      %v528 = vpop.permute.xlu0 %527
      %529 = vset.pattern.permute.xlu0 0
      %530 = vperm.xlu0 %529, %v519
      %v531 = vpop.permute.xlu0 %530
      %vm532 = vcmp.eq.s32.totalorder %v522, 1
      %vm533 = vcmp.eq.s32.totalorder %v525, 1
      %vm534 = vcmp.eq.s32.totalorder %v528, 1
      %vm535 = vcmp.eq.s32.totalorder %v531, 1
      %vm536 = vmand %vm508, %vm532
      %vm537 = vmand %vm509, %vm532
      %vm538 = vmand %vm510, %vm533
      %vm539 = vmand %vm511, %vm533
      %vm540 = vmand %vm512, %vm534
      %vm541 = vmand %vm513, %vm534
      %vm542 = vmand %vm514, %vm535
      %vm543 = vmand %vm515, %vm535
      %v544 = vsel %vm536, 1, 0
      %v545 = vsel %vm537, 1, 0
      %v546 = vsel %vm538, 1, 0
      %v547 = vsel %vm539, 1, 0
      %v548 = vsel %vm540, 1, 0
      %v549 = vsel %vm541, 1, 0
      %v550 = vsel %vm542, 1, 0
      %v551 = vsel %vm543, 1, 0
      %v552 = vcvt.s32.f32 %v544
      %v553 = vcvt.s32.f32 %v545
      %v554 = vcvt.s32.f32 %v546
      %v555 = vcvt.s32.f32 %v547
      %v556 = vcvt.s32.f32 %v548
      %v557 = vcvt.s32.f32 %v549
      %v558 = vcvt.s32.f32 %v550
      %v559 = vcvt.s32.f32 %v551
      %v560 = vlaneseq
      %v561 = vshrl.u32 %v560, 7
      %v562 = vsub.s32 0, %v561
      %v563 = vrot.slane %v454, %v562
      %v564 = vlaneseq
      %v565 = vshrl.u32 %v564, 7
      %v566 = vsub.s32 1, %v565
      %v567 = vrot.slane %v454, %v566
      %568 = vset.pattern.permute.xlu0 0
      %569 = vperm.xlu0 %568, %v459
      %v570 = vpop.permute.xlu0 %569
      %571 = vset.pattern.permute.xlu0 0
      %572 = vperm.xlu0 %571, %v460
      %v573 = vpop.permute.xlu0 %572
      %574 = vset.pattern.permute.xlu0 0
      %575 = vperm.xlu0 %574, %v461
      %v576 = vpop.permute.xlu0 %575
      %577 = vset.pattern.permute.xlu0 0
      %578 = vperm.xlu0 %577, %v462
      %v579 = vpop.permute.xlu0 %578
      %vm580 = vcmp.eq.s32.totalorder %v563, %v570
      %vm581 = vcmp.eq.s32.totalorder %v567, %v570
      %vm582 = vcmp.eq.s32.totalorder %v563, %v573
      %vm583 = vcmp.eq.s32.totalorder %v567, %v573
      %vm584 = vcmp.eq.s32.totalorder %v563, %v576
      %vm585 = vcmp.eq.s32.totalorder %v567, %v576
      %vm586 = vcmp.eq.s32.totalorder %v563, %v579
      %vm587 = vcmp.eq.s32.totalorder %v567, %v579
      %v588 = vsel %vm484, 1, 0
      %v589 = vsel %vm485, 1, 0
      %v590 = vsel %vm486, 1, 0
      %v591 = vsel %vm487, 1, 0
      %592 = vset.pattern.permute.xlu0 0
      %593 = vperm.xlu0 %592, %v588
      %v594 = vpop.permute.xlu0 %593
      %595 = vset.pattern.permute.xlu0 0
      %596 = vperm.xlu0 %595, %v589
      %v597 = vpop.permute.xlu0 %596
      %598 = vset.pattern.permute.xlu0 0
      %599 = vperm.xlu0 %598, %v590
      %v600 = vpop.permute.xlu0 %599
      %601 = vset.pattern.permute.xlu0 0
      %602 = vperm.xlu0 %601, %v591
      %v603 = vpop.permute.xlu0 %602
      %vm604 = vcmp.eq.s32.totalorder %v594, 1
      %vm605 = vcmp.eq.s32.totalorder %v597, 1
      %vm606 = vcmp.eq.s32.totalorder %v600, 1
      %vm607 = vcmp.eq.s32.totalorder %v603, 1
      %vm608 = vmand %vm580, %vm604
      %vm609 = vmand %vm581, %vm604
      %vm610 = vmand %vm582, %vm605
      %vm611 = vmand %vm583, %vm605
      %vm612 = vmand %vm584, %vm606
      %vm613 = vmand %vm585, %vm606
      %vm614 = vmand %vm586, %vm607
      %vm615 = vmand %vm587, %vm607
      %v616 = vsel %vm608, 1, 0
      %v617 = vsel %vm609, 1, 0
      %v618 = vsel %vm610, 1, 0
      %v619 = vsel %vm611, 1, 0
      %v620 = vsel %vm612, 1, 0
      %v621 = vsel %vm613, 1, 0
      %v622 = vsel %vm614, 1, 0
      %v623 = vsel %vm615, 1, 0
      %v624 = vcvt.s32.f32 %v616
      %v625 = vcvt.s32.f32 %v617
      %v626 = vcvt.s32.f32 %v618
      %v627 = vcvt.s32.f32 %v619
      %v628 = vcvt.s32.f32 %v620
      %v629 = vcvt.s32.f32 %v621
      %v630 = vcvt.s32.f32 %v622
      %v631 = vcvt.s32.f32 %v623
      %v632 = vld [vmem:[%s410] sm:$0x1]
      %v633 = vld [vmem:[%s413] sm:$0x1]
      %vm634 = vcmask 261120
      %v636 = vsel %vm634, %v633, 0
      %638 = vmatprep.subr.mxu0 %v625
      %639 = vmatpush1.msra.mxu0 %v624
      %640 = vmatprep.subr.mxu0 %v627
      %641 = vmatpush1.msra.mxu0 %v626
      %642 = vmatprep.subr.mxu0 %v629
      %643 = vmatpush1.msra.mxu0 %v628
      %644 = vmatprep.subr.mxu0 %v631
      %645 = vmatpush1.msra.mxu0 %v630
      %646 = vmatprep.subr.mxu0 0.0
      %647 = vmatpush1.msra.mxu0 0.0
      %648 = vmatprep.subr.mxu0 0.0
      %649 = vmatpush1.msra.mxu0 0.0
      %650 = vmatprep.subr.mxu0 0.0
      %651 = vmatpush1.msra.mxu0 0.0
      %652 = vmatprep.subr.mxu0 0.0
      %653 = vmatpush1.msra.mxu0 0.0
      %654 = vmatprep.subr.mxu0 0.0
      %655 = vmatpush1.msra.mxu0 0.0
      %656 = vmatprep.subr.mxu0 0.0
      %657 = vmatpush1.msra.mxu0 0.0
      %658 = vmatprep.subr.mxu0 0.0
      %659 = vmatpush1.msra.mxu0 0.0
      %660 = vmatprep.subr.mxu0 0.0
      %661 = vmatpush1.msra.mxu0 0.0
      %662 = vmatprep.subr.mxu0 0.0
      %663 = vmatpush1.msra.mxu0 0.0
      %664 = vmatprep.subr.mxu0 0.0
      %665 = vmatpush1.msra.mxu0 0.0
      %666 = vmatprep.subr.mxu0 0.0
      %667 = vmatpush1.msra.mxu0 0.0
      %668 = vmatprep.subr.mxu0 0.0
      %669 = vmatpush1.msra.mxu0 0.0
      %670 = vmatprep.subr.mxu0 0.0
      %671 = vmatpush1.msra.mxu0 0.0
      %672 = vmatprep.subr.mxu0 0.0
      %673 = vmatpush1.msra.mxu0 0.0
      %674 = vmatprep.subr.mxu0 0.0
      %675 = vmatpush1.msra.mxu0 0.0
      %676 = vmatprep.subr.mxu0 0.0
      %677 = vmatpush1.msra.mxu0 0.0
      %678 = vmatprep.subr.mxu0 0.0
      %679 = vmatpush1.msra.mxu0 0.0
      %680 = vmatprep.subr.mxu0 0.0
      %681 = vmatpush1.msra.mxu0 0.0
      %682 = vmatprep.subr.mxu0 0.0
      %683 = vmatpush1.msra.mxu0 0.0
      %684 = vmatprep.subr.mxu0 0.0
      %685 = vmatpush1.msra.mxu0 0.0
      %686 = vmatprep.subr.mxu0 0.0
      %687 = vmatpush1.msra.mxu0 0.0
      %688 = vmatprep.subr.mxu0 0.0
      %689 = vmatpush1.msra.mxu0 0.0
      %690 = vmatprep.subr.mxu0 0.0
      %691 = vmatpush1.msra.mxu0 0.0
      %692 = vmatprep.subr.mxu0 0.0
      %693 = vmatpush1.msra.mxu0 0.0
      %694 = vmatprep.subr.mxu0 0.0
      %695 = vmatpush1.msra.mxu0 0.0
      %696 = vmatprep.subr.mxu0 0.0
      %697 = vmatpush1.msra.mxu0 0.0
      %698 = vmatprep.subr.mxu0 0.0
      %699 = vmatpush1.msra.mxu0 0.0
      %700 = vmatprep.subr.mxu0 0.0
      %701 = vmatpush1.msra.mxu0 0.0
      %702 = vmatprep.mubr.f32.mxu0 0.0
      %703 = vmatmul.mubr.f32.gmra.mrb[0].mxu0 %v636
      %v704 = vpop.f32.mrb[0].mxu0
      %v705 = vadd.f32 0.0, %v704
      %v706 = vpop.f32.mrb[0].mxu0
      %v707 = vadd.f32 0.0, %v706
      %708 = vdwg.mxu0
      %v710 = vsel %vm634, %v632, 0
      %712 = vmatprep.subr.mxu0 %v553
      %713 = vmatpush1.msra.mxu0 %v552
      %714 = vmatprep.subr.mxu0 %v555
      %715 = vmatpush1.msra.mxu0 %v554
      %716 = vmatprep.subr.mxu0 %v557
      %717 = vmatpush1.msra.mxu0 %v556
      %718 = vmatprep.subr.mxu0 %v559
      %719 = vmatpush1.msra.mxu0 %v558
      %720 = vmatprep.subr.mxu0 0.0
      %721 = vmatpush1.msra.mxu0 0.0
      %722 = vmatprep.subr.mxu0 0.0
      %723 = vmatpush1.msra.mxu0 0.0
      %724 = vmatprep.subr.mxu0 0.0
      %725 = vmatpush1.msra.mxu0 0.0
      %726 = vmatprep.subr.mxu0 0.0
      %727 = vmatpush1.msra.mxu0 0.0
      %728 = vmatprep.subr.mxu0 0.0
      %729 = vmatpush1.msra.mxu0 0.0
      %730 = vmatprep.subr.mxu0 0.0
      %731 = vmatpush1.msra.mxu0 0.0
      %732 = vmatprep.subr.mxu0 0.0
      %733 = vmatpush1.msra.mxu0 0.0
      %734 = vmatprep.subr.mxu0 0.0
      %735 = vmatpush1.msra.mxu0 0.0
      %736 = vmatprep.subr.mxu0 0.0
      %737 = vmatpush1.msra.mxu0 0.0
      %738 = vmatprep.subr.mxu0 0.0
      %739 = vmatpush1.msra.mxu0 0.0
      %740 = vmatprep.subr.mxu0 0.0
      %741 = vmatpush1.msra.mxu0 0.0
      %742 = vmatprep.subr.mxu0 0.0
      %743 = vmatpush1.msra.mxu0 0.0
      %744 = vmatprep.subr.mxu0 0.0
      %745 = vmatpush1.msra.mxu0 0.0
      %746 = vmatprep.subr.mxu0 0.0
      %747 = vmatpush1.msra.mxu0 0.0
      %748 = vmatprep.subr.mxu0 0.0
      %749 = vmatpush1.msra.mxu0 0.0
      %750 = vmatprep.subr.mxu0 0.0
      %751 = vmatpush1.msra.mxu0 0.0
      %752 = vmatprep.subr.mxu0 0.0
      %753 = vmatpush1.msra.mxu0 0.0
      %754 = vmatprep.subr.mxu0 0.0
      %755 = vmatpush1.msra.mxu0 0.0
      %756 = vmatprep.subr.mxu0 0.0
      %757 = vmatpush1.msra.mxu0 0.0
      %758 = vmatprep.subr.mxu0 0.0
      %759 = vmatpush1.msra.mxu0 0.0
      %760 = vmatprep.subr.mxu0 0.0
      %761 = vmatpush1.msra.mxu0 0.0
      %762 = vmatprep.subr.mxu0 0.0
      %763 = vmatpush1.msra.mxu0 0.0
      %764 = vmatprep.subr.mxu0 0.0
      %765 = vmatpush1.msra.mxu0 0.0
      %766 = vmatprep.subr.mxu0 0.0
      %767 = vmatpush1.msra.mxu0 0.0
      %768 = vmatprep.subr.mxu0 0.0
      %769 = vmatpush1.msra.mxu0 0.0
      %770 = vmatprep.subr.mxu0 0.0
      %771 = vmatpush1.msra.mxu0 0.0
      %772 = vmatprep.subr.mxu0 0.0
      %773 = vmatpush1.msra.mxu0 0.0
      %774 = vmatprep.subr.mxu0 0.0
      %775 = vmatpush1.msra.mxu0 0.0
      %776 = vmatprep.mubr.f32.mxu0 0.0
      %777 = vmatmul.mubr.f32.gmra.mrb[0].mxu0 %v710
      %v778 = vpop.f32.mrb[0].mxu0
      %v779 = vadd.f32 1.0, %v778
      %v780 = vpop.f32.mrb[0].mxu0
      %v781 = vadd.f32 1.0, %v780
      %782 = vdwg.mxu0
      %v783 = vadd.f32 %v779, %v705
      %v784 = vadd.f32 %v781, %v707
      %v785 = vlaneseq
      %v786 = vshrl.u32 %v785, 7
      %v787 = vsub.s32 0, %v786
      %v788 = vrot.slane %v783, %v787
      %v789 = vlaneseq
      %v790 = vshrl.u32 %v789, 7
      %v791 = vsub.s32 0, %v790
      %v792 = vrot.slane %v784, %v791
      %v795 = vcombine.low %v788, %v792
      %v797 = vmul.f32 %v452, %v795
      %798 = vst [vmem:[%s450] sm:$0xff] %v797
      %s799 = smul.u32 2, %s23
      %p800 = scmp.lt.s32.totalorder %s22, 1
      %s801 = scalar_select %p800, %s22, 1
      %p802 = scmp.lt.s32.totalorder %s799, 1
      %s803 = scalar_select %p802, %s799, 1
      %s804 = smul.addr %s801, 2
      %s805 = sadd.s32 %s803, %s804
      %s806 = smul.addr %s805, 4
      %s807 = scalar_lea.vmem %s7, %s806
      // Predicated region
      $region49: #{conn_comp_attention.7} parent=47 // pred_check
        %p808 = pneg %p238
      $region50: #{conn_comp_attention.7} parent=47 // pred_check_branch
        %810 = sbr.rel (%p808) target = $region52
      $region51: #{conn_comp_attention.7} parent=47 // pred_region
        %s811 = smul.u32 2, %s23
      $region52: #{conn_comp_attention.7} parent=47 // pred_fallthru
        _
    $region48: #{conn_comp_attention.7} parent=5 // pred_fallthru
      _
    %p812 = scmp.le.s32.totalorder 2, %s13
    // Predicated region
    $region53: #{conn_comp_attention.7} parent=5 // pred_check
      %p813 = pneg %p812
    $region54: #{conn_comp_attention.7} parent=5 // pred_check_branch
      %815 = sbr.rel (%p813) target = $region56
    $region55: #{conn_comp_attention.7} parent=5 // pred_region
      %s816 = ssub.s32 %s13, 2
      // Predicated region
      $region57: #{conn_comp_attention.7} parent=55 // pred_check
        %p817 = pneg %p244
      $region58: #{conn_comp_attention.7} parent=55 // pred_check_branch
        %819 = sbr.rel (%p817) target = $region60
      $region59: #{conn_comp_attention.7} parent=55 // pred_region
        %s820 = smul.u32 2, %s25
        %p821 = scmp.lt.s32.totalorder %s24, 1
        %s822 = scalar_select %p821, %s24, 1
        %p823 = scmp.lt.s32.totalorder %s820, 1
        %s824 = scalar_select %p823, %s820, 1
        %s825 = smul.addr %s822, 2
        %s826 = sadd.s32 %s824, %s825
        %s827 = smul.addr %s826, 4
        %s828 = scalar_lea.vmem %s7, %s827
      $region60: #{conn_comp_attention.7} parent=55 // pred_fallthru
        _
    $region56: #{conn_comp_attention.7} parent=5 // pred_fallthru
      _
  $region6: #{conn_comp_attention.7} parent=0 // loop_footer
    %s17 = sadd.s32 1, %s13
  $region7: #{conn_comp_attention.7} parent=0 // loop_footer_branch
    %12 = sbr.rel target = $region3
  $region8: #{conn_comp_attention.7} parent=0 // loop_exit
    _

// kernel: conn_comp_attention.6
$region0: #{conn_comp_attention.6}
  #allocation0 [shape = 'u32[]', space=smem, size = 0x4, offset = 0x4, fixed_abs, tag = 'smem constant byte address 0x4 - core index']
  #allocation1 [shape = 'u32[144,128]{1,0:T(1,128)}', space=vmem, size = 0x12000, scoped, tag = 'internal scratch']
  #allocation2 [shape = 'f32[32,4]{1,0:T(8,128)}', space=vmem, size = 0x4000, scoped, tag = 'scratch operand']
  #allocation3 [shape = 'f32[32,4]{1,0:T(8,128)}', space=vmem, size = 0x4000, scoped, tag = 'scratch operand']
  #allocation4 [shape = 'f32[32,1]{1,0:T(8,128)}', space=vmem, size = 0x4000, scoped, tag = 'scratch operand']
  #allocation5 [shape = 'f32[1,32]{1,0:T(1,128)}', space=vmem, size = 0x200, scoped, tag = 'scratch operand']
  #allocation6 [shape = 'f32[32,1]{1,0:T(8,128)}', space=vmem, size = 0x4000, scoped, tag = 'scratch operand']
  #allocation7 [shape = 'f32[1,32]{1,0:T(1,128)}', space=vmem, size = 0x200, scoped, tag = 'scratch operand']
  %s0 = inlined_call_operand.vmem [shape: s32[2,32,1], index: 0, kind: input, shape index: {}]
  %s1 = inlined_call_operand.vmem [shape: s32[2,32,1], index: 1, kind: input, shape index: {}]
  %s2 = inlined_call_operand.vmem [shape: f32[2,4,256], index: 2, kind: input, shape index: {}]
  %s3 = inlined_call_operand.vmem [shape: s32[2,1,256], index: 3, kind: input, shape index: {}]
  %s4 = inlined_call_operand.vmem [shape: s32[2,1,256], index: 4, kind: input, shape index: {}]
  %s5 = inlined_call_operand.vmem [shape: f32[2,1,32], index: 5, kind: output, shape index: {0}]
  %s6 = inlined_call_operand.vmem [shape: f32[2,1,32], index: 6, kind: output, shape index: {1}]
  %7 = xla_tuple %s5, %s6
  %s8 = sld [smem:[#allocation0]]
  $region69: #{conn_comp_attention.6} parent=0
    _
  %s10 = ssub.s32 1, %s8
  %s11 = scalar_select 0, %s10, %s8
  loop: start=0, step=1, limit=4
  $region2: #{conn_comp_attention.6} parent=0 // loop_pre_header
    _
  $region3: #{conn_comp_attention.6} parent=0 // loop_header
    %s13 = sphi 0, %s17
    %p14 = scmp.ge.s32.totalorder %s13, 4
    %s20 = sphi 0, %s32
    %s21 = sphi 0, %s28
    %s22 = sphi 0, %s20
    %s23 = sphi 0, %s21
    %s24 = sphi 0, %s22
    %s25 = sphi 0, %s23
    %s35 = sphi 0, %s37
    %s38 = sphi 0, %s35
    %s39 = sphi 0, %s38
    %s55 = sphi 0, %s39
    %s61 = sphi 0, %s63
    %s64 = sphi 0, %s61
    %s65 = sphi 0, %s64
    %s81 = sphi 0, %s65
    %s89 = sphi 0, %s91
    %s92 = sphi 0, %s89
    %s93 = sphi 0, %s92
    %s109 = sphi 0, %s93
    %s117 = sphi 0, %s119
    %s120 = sphi 0, %s117
    %s121 = sphi 0, %s120
    %s137 = sphi 0, %s121
    %s145 = sphi 0, %s147
    %s148 = sphi 0, %s145
    %s149 = sphi 0, %s148
    %s165 = sphi 0, %s149
    %s171 = sphi 0, %s173
    %s174 = sphi 0, %s171
    %s175 = sphi 0, %s174
    %s191 = sphi 0, %s175
    %s197 = sphi 0, %s199
    %s200 = sphi 0, %s197
    %s201 = sphi 0, %s200
    %s217 = sphi 0, %s201
  $region4: #{conn_comp_attention.6} parent=0 // loop_header_branch
    %16 = sbr.rel (%p14) target = $region8
  $region5: #{conn_comp_attention.6} parent=0 // loop_body
    %s18 = ssub.s32 %s13, 1
    %s19 = ssub.s32 %s13, 2
    %s26 = sadd.s32 1, %s21
    %p27 = scmp.ge.s32.totalorder %s26, 1
    %s28 = scalar_select %p27, 0, %s26
    %s29 = sadd.s32 1, %s20
    %s30 = scalar_select %p27, %s29, %s20
    %p31 = scmp.ge.s32.totalorder %s30, 2
    %s32 = scalar_select %p31, 0, %s30
    %s33 = ssub.s32 %s20, %s32
    %p34 = scmp.eq.s32.totalorder %s33, 0
    %s36 = sadd.s32 %s35, 1
    %s37 = scalar_select %p34, %s35, %s36
    %p40 = pneg %p34
    %p41 = scmp.eq.s32.totalorder %s13, 1
    %p42 = por %p40, %p41
    %p43 = scmp.ne.s32.totalorder %s35, %s38
    %p44 = scmp.eq.s32.totalorder %s13, 0
    %p45 = por %p43, %p44
    %p46 = scmp.ne.s32.totalorder %s35, %s38
    %p47 = scmp.eq.s32.totalorder %s18, 1
    %p48 = por %p46, %p47
    %p49 = scmp.ne.s32.totalorder %s38, %s39
    %p50 = scmp.eq.s32.totalorder %s18, 0
    %p51 = por %p49, %p50
    %p52 = scmp.ne.s32.totalorder %s38, %s39
    %p53 = scmp.eq.s32.totalorder %s19, 1
    %p54 = por %p52, %p53
    %p56 = scmp.ne.s32.totalorder %s39, %s55
    %p57 = scmp.eq.s32.totalorder %s19, 0
    %p58 = por %p56, %p57
    %s59 = ssub.s32 %s20, %s32
    %p60 = scmp.eq.s32.totalorder %s59, 0
    %s62 = sadd.s32 %s61, 1
    %s63 = scalar_select %p60, %s61, %s62
    %p66 = pneg %p60
    %p67 = scmp.eq.s32.totalorder %s13, 1
    %p68 = por %p66, %p67
    %p69 = scmp.ne.s32.totalorder %s61, %s64
    %p70 = scmp.eq.s32.totalorder %s13, 0
    %p71 = por %p69, %p70
    %p72 = scmp.ne.s32.totalorder %s61, %s64
    %p73 = scmp.eq.s32.totalorder %s18, 1
    %p74 = por %p72, %p73
    %p75 = scmp.ne.s32.totalorder %s64, %s65
    %p76 = scmp.eq.s32.totalorder %s18, 0
    %p77 = por %p75, %p76
    %p78 = scmp.ne.s32.totalorder %s64, %s65
    %p79 = scmp.eq.s32.totalorder %s19, 1
    %p80 = por %p78, %p79
    %p82 = scmp.ne.s32.totalorder %s65, %s81
    %p83 = scmp.eq.s32.totalorder %s19, 0
    %p84 = por %p82, %p83
    %s85 = ssub.s32 %s20, %s32
    %s86 = ssub.s32 %s21, %s28
    %s87 = sor.u32 %s85, %s86
    %p88 = scmp.eq.s32.totalorder %s87, 0
    %s90 = sadd.s32 %s89, 1
    %s91 = scalar_select %p88, %s89, %s90
    %p94 = pneg %p88
    %p95 = scmp.eq.s32.totalorder %s13, 1
    %p96 = por %p94, %p95
    %p97 = scmp.ne.s32.totalorder %s89, %s92
    %p98 = scmp.eq.s32.totalorder %s13, 0
    %p99 = por %p97, %p98
    %p100 = scmp.ne.s32.totalorder %s89, %s92
    %p101 = scmp.eq.s32.totalorder %s18, 1
    %p102 = por %p100, %p101
    %p103 = scmp.ne.s32.totalorder %s92, %s93
    %p104 = scmp.eq.s32.totalorder %s18, 0
    %p105 = por %p103, %p104
    %p106 = scmp.ne.s32.totalorder %s92, %s93
    %p107 = scmp.eq.s32.totalorder %s19, 1
    %p108 = por %p106, %p107
    %p110 = scmp.ne.s32.totalorder %s93, %s109
    %p111 = scmp.eq.s32.totalorder %s19, 0
    %p112 = por %p110, %p111
    %s113 = ssub.s32 %s20, %s32
    %s114 = ssub.s32 %s21, %s28
    %s115 = sor.u32 %s113, %s114
    %p116 = scmp.eq.s32.totalorder %s115, 0
    %s118 = sadd.s32 %s117, 1
    %s119 = scalar_select %p116, %s117, %s118
    %p122 = pneg %p116
    %p123 = scmp.eq.s32.totalorder %s13, 1
    %p124 = por %p122, %p123
    %p125 = scmp.ne.s32.totalorder %s117, %s120
    %p126 = scmp.eq.s32.totalorder %s13, 0
    %p127 = por %p125, %p126
    %p128 = scmp.ne.s32.totalorder %s117, %s120
    %p129 = scmp.eq.s32.totalorder %s18, 1
    %p130 = por %p128, %p129
    %p131 = scmp.ne.s32.totalorder %s120, %s121
    %p132 = scmp.eq.s32.totalorder %s18, 0
    %p133 = por %p131, %p132
    %p134 = scmp.ne.s32.totalorder %s120, %s121
    %p135 = scmp.eq.s32.totalorder %s19, 1
    %p136 = por %p134, %p135
    %p138 = scmp.ne.s32.totalorder %s121, %s137
    %p139 = scmp.eq.s32.totalorder %s19, 0
    %p140 = por %p138, %p139
    %s141 = ssub.s32 %s20, %s32
    %s142 = ssub.s32 %s21, %s28
    %s143 = sor.u32 %s141, %s142
    %p144 = scmp.eq.s32.totalorder %s143, 0
    %s146 = sadd.s32 %s145, 1
    %s147 = scalar_select %p144, %s145, %s146
    %p150 = pneg %p144
    %p151 = scmp.eq.s32.totalorder %s13, 1
    %p152 = por %p150, %p151
    %p153 = scmp.ne.s32.totalorder %s145, %s148
    %p154 = scmp.eq.s32.totalorder %s13, 0
    %p155 = por %p153, %p154
    %p156 = scmp.ne.s32.totalorder %s145, %s148
    %p157 = scmp.eq.s32.totalorder %s18, 1
    %p158 = por %p156, %p157
    %p159 = scmp.ne.s32.totalorder %s148, %s149
    %p160 = scmp.eq.s32.totalorder %s18, 0
    %p161 = por %p159, %p160
    %p162 = scmp.ne.s32.totalorder %s148, %s149
    %p163 = scmp.eq.s32.totalorder %s19, 1
    %p164 = por %p162, %p163
    %p166 = scmp.ne.s32.totalorder %s149, %s165
    %p167 = scmp.eq.s32.totalorder %s19, 0
    %p168 = por %p166, %p167
    %s169 = ssub.s32 %s20, %s32
    %p170 = scmp.eq.s32.totalorder %s169, 0
    %s172 = sadd.s32 %s171, 1
    %s173 = scalar_select %p170, %s171, %s172
    %p176 = pneg %p170
    %p177 = scmp.eq.s32.totalorder %s13, 1
    %p178 = por %p176, %p177
    %p179 = scmp.ne.s32.totalorder %s171, %s174
    %p180 = scmp.eq.s32.totalorder %s13, 0
    %p181 = por %p179, %p180
    %p182 = scmp.ne.s32.totalorder %s171, %s174
    %p183 = scmp.eq.s32.totalorder %s18, 1
    %p184 = por %p182, %p183
    %p185 = scmp.ne.s32.totalorder %s174, %s175
    %p186 = scmp.eq.s32.totalorder %s18, 0
    %p187 = por %p185, %p186
    %p188 = scmp.ne.s32.totalorder %s174, %s175
    %p189 = scmp.eq.s32.totalorder %s19, 1
    %p190 = por %p188, %p189
    %p192 = scmp.ne.s32.totalorder %s175, %s191
    %p193 = scmp.eq.s32.totalorder %s19, 0
    %p194 = por %p192, %p193
    %s195 = ssub.s32 %s20, %s32
    %p196 = scmp.eq.s32.totalorder %s195, 0
    %s198 = sadd.s32 %s197, 1
    %s199 = scalar_select %p196, %s197, %s198
    %p202 = pneg %p196
    %p203 = scmp.eq.s32.totalorder %s13, 1
    %p204 = por %p202, %p203
    %p205 = scmp.ne.s32.totalorder %s197, %s200
    %p206 = scmp.eq.s32.totalorder %s13, 0
    %p207 = por %p205, %p206
    %p208 = scmp.ne.s32.totalorder %s197, %s200
    %p209 = scmp.eq.s32.totalorder %s18, 1
    %p210 = por %p208, %p209
    %p211 = scmp.ne.s32.totalorder %s200, %s201
    %p212 = scmp.eq.s32.totalorder %s18, 0
    %p213 = por %p211, %p212
    %p214 = scmp.ne.s32.totalorder %s200, %s201
    %p215 = scmp.eq.s32.totalorder %s19, 1
    %p216 = por %p214, %p215
    %p218 = scmp.ne.s32.totalorder %s201, %s217
    %p219 = scmp.eq.s32.totalorder %s19, 0
    %p220 = por %p218, %p219
    %p221 = scmp.le.s32.totalorder 1, %s13
    %p222 = scmp.lt.s32.totalorder %s13, 3
    %p223 = pnand %p221, %p222
    %p224 = pneg %p223
    // Predicated region
    $region9: #{conn_comp_attention.6} parent=5 // pred_check
      _
    $region10: #{conn_comp_attention.6} parent=5 // pred_check_branch
      %226 = sbr.rel (%p223) target = $region12
    $region11: #{conn_comp_attention.6} parent=5 // pred_region
      %s227 = ssub.s32 %s13, 1
    $region12: #{conn_comp_attention.6} parent=5 // pred_fallthru
      _
    %p228 = scmp.lt.s32.totalorder %s13, 2
    // Predicated region
    $region13: #{conn_comp_attention.6} parent=5 // pred_check
      %p229 = pneg %p228
    $region14: #{conn_comp_attention.6} parent=5 // pred_check_branch
      %231 = sbr.rel (%p229) target = $region16
    $region15: #{conn_comp_attention.6} parent=5 // pred_region
      // Predicated region
      $region17: #{conn_comp_attention.6} parent=15 // pred_check
        %p232 = pneg %p45
      $region18: #{conn_comp_attention.6} parent=15 // pred_check_branch
        %234 = sbr.rel (%p232) target = $region20
      $region19: #{conn_comp_attention.6} parent=15 // pred_region
        %p235 = scmp.lt.s32.totalorder %s20, 1
        %s236 = scalar_select %p235, %s20, 1
        %s237 = smul.addr %s236, 4
        %s238 = smul.addr %s237, 8
        %s239 = scalar_lea.vmem %s0, %s238
      $region20: #{conn_comp_attention.6} parent=15 // pred_fallthru
        _
      // Predicated region
      $region21: #{conn_comp_attention.6} parent=15 // pred_check
        %p240 = pneg %p71
      $region22: #{conn_comp_attention.6} parent=15 // pred_check_branch
        %242 = sbr.rel (%p240) target = $region24
      $region23: #{conn_comp_attention.6} parent=15 // pred_region
        %p243 = scmp.lt.s32.totalorder %s20, 1
        %s244 = scalar_select %p243, %s20, 1
        %s245 = smul.addr %s244, 4
        %s246 = smul.addr %s245, 8
        %s247 = scalar_lea.vmem %s1, %s246
      $region24: #{conn_comp_attention.6} parent=15 // pred_fallthru
        _
      // Predicated region
      $region25: #{conn_comp_attention.6} parent=15 // pred_check
        %p248 = pneg %p99
      $region26: #{conn_comp_attention.6} parent=15 // pred_check_branch
        %250 = sbr.rel (%p248) target = $region28
      $region27: #{conn_comp_attention.6} parent=15 // pred_region
        %s251 = smul.u32 2, %s21
        %p252 = scmp.lt.s32.totalorder %s20, 1
        %s253 = scalar_select %p252, %s20, 1
        %p254 = scmp.lt.s32.totalorder %s251, 1
        %s255 = scalar_select %p254, %s251, 1
        %s256 = smul.addr %s253, 2
        %s257 = sadd.s32 %s255, %s256
        %s258 = smul.addr %s257, 4
        %s259 = scalar_lea.vmem %s2, %s258
        %s260 = smul.u32 2, %s21
      $region28: #{conn_comp_attention.6} parent=15 // pred_fallthru
        _
      // Predicated region
      $region29: #{conn_comp_attention.6} parent=15 // pred_check
        %p261 = pneg %p127
      $region30: #{conn_comp_attention.6} parent=15 // pred_check_branch
        %263 = sbr.rel (%p261) target = $region32
      $region31: #{conn_comp_attention.6} parent=15 // pred_region
        %s264 = smul.u32 2, %s21
        %p265 = scmp.lt.s32.totalorder %s20, 1
        %s266 = scalar_select %p265, %s20, 1
        %p267 = scmp.lt.s32.totalorder %s264, 1
        %s268 = scalar_select %p267, %s264, 1
        %s269 = smul.addr %s266, 2
        %s270 = sadd.s32 %s268, %s269
        %s271 = scalar_lea.vmem %s3, %s270
        %s272 = smul.u32 2, %s21
      $region32: #{conn_comp_attention.6} parent=15 // pred_fallthru
        _
      // Predicated region
      $region33: #{conn_comp_attention.6} parent=15 // pred_check
        %p273 = pneg %p155
      $region34: #{conn_comp_attention.6} parent=15 // pred_check_branch
        %275 = sbr.rel (%p273) target = $region36
      $region35: #{conn_comp_attention.6} parent=15 // pred_region
        %s276 = smul.u32 2, %s21
        %p277 = scmp.lt.s32.totalorder %s20, 1
        %s278 = scalar_select %p277, %s20, 1
        %p279 = scmp.lt.s32.totalorder %s276, 1
        %s280 = scalar_select %p279, %s276, 1
        %s281 = smul.addr %s278, 2
        %s282 = sadd.s32 %s280, %s281
        %s283 = scalar_lea.vmem %s4, %s282
        %s284 = smul.u32 2, %s21
      $region36: #{conn_comp_attention.6} parent=15 // pred_fallthru
        _
    $region16: #{conn_comp_attention.6} parent=5 // pred_fallthru
      _
    %p285 = scmp.le.s32.totalorder 1, %s13
    %p286 = scmp.lt.s32.totalorder %s13, 3
    %p287 = pnand %p285, %p286
    %p288 = pneg %p287
    // Predicated region
    $region37: #{conn_comp_attention.6} parent=5 // pred_check
      _
    $region38: #{conn_comp_attention.6} parent=5 // pred_check_branch
      %290 = sbr.rel (%p287) target = $region40
    $region39: #{conn_comp_attention.6} parent=5 // pred_region
      %s291 = ssub.s32 %s13, 1
      %p292 = scmp.lt.s32.totalorder %s22, 1
      %s293 = scalar_select %p292, %s22, 1
      %s294 = smul.addr %s293, 4
      %s295 = smul.addr %s294, 8
      %s296 = scalar_lea.vmem %s0, %s295
      %p297 = pneg %p51
      %p298 = pneg %p48
      %p299 = scmp.lt.s32.totalorder %s22, 1
      %s300 = scalar_select %p299, %s22, 1
      %s301 = smul.addr %s300, 4
      %s302 = smul.addr %s301, 8
      %s303 = scalar_lea.vmem %s1, %s302
      %p304 = pneg %p77
      %p305 = pneg %p74
      %s306 = smul.u32 2, %s23
      %p307 = scmp.lt.s32.totalorder %s22, 1
      %s308 = scalar_select %p307, %s22, 1
      %p309 = scmp.lt.s32.totalorder %s306, 1
      %s310 = scalar_select %p309, %s306, 1
      %s311 = smul.addr %s308, 2
      %s312 = sadd.s32 %s310, %s311
      %s313 = smul.addr %s312, 4
      %s314 = scalar_lea.vmem %s2, %s313
      %p315 = pneg %p105
      %p316 = pneg %p102
      %s317 = smul.u32 2, %s23
      %p318 = scmp.lt.s32.totalorder %s22, 1
      %s319 = scalar_select %p318, %s22, 1
      %p320 = scmp.lt.s32.totalorder %s317, 1
      %s321 = scalar_select %p320, %s317, 1
      %s322 = smul.addr %s319, 2
      %s323 = sadd.s32 %s321, %s322
      %s324 = scalar_lea.vmem %s3, %s323
      %p325 = pneg %p133
      %p326 = pneg %p130
      %s327 = smul.u32 2, %s23
      %p328 = scmp.lt.s32.totalorder %s22, 1
      %s329 = scalar_select %p328, %s22, 1
      %p330 = scmp.lt.s32.totalorder %s327, 1
      %s331 = scalar_select %p330, %s327, 1
      %s332 = smul.addr %s329, 2
      %s333 = sadd.s32 %s331, %s332
      %s334 = scalar_lea.vmem %s4, %s333
      %p335 = pneg %p161
      %p336 = pneg %p158
      %p337 = pneg %p187
      %p338 = pneg %p184
      %p339 = scmp.lt.s32.totalorder %s22, 1
      %s340 = scalar_select %p339, %s22, 1
      %s341 = scalar_lea.vmem %s5, %s340
      %p342 = pneg %p213
      %p343 = pneg %p210
      %p344 = scmp.lt.s32.totalorder %s22, 1
      %s345 = scalar_select %p344, %s22, 1
      %s346 = scalar_lea.vmem %s6, %s345
      %p347 = scmp.lt.s32.totalorder %s22, 1
      %s348 = scalar_select %p347, %s22, 1
      %s349 = smul.addr %s348, 4
      %s350 = smul.addr %s349, 8
      %s351 = scalar_lea.vmem %s0, %s350
      %p352 = scmp.lt.s32.totalorder %s22, 1
      %s353 = scalar_select %p352, %s22, 1
      %s354 = smul.addr %s353, 4
      %s355 = smul.addr %s354, 8
      %s356 = scalar_lea.vmem %s1, %s355
      %s357 = smul.u32 2, %s23
      %p358 = scmp.lt.s32.totalorder %s22, 1
      %s359 = scalar_select %p358, %s22, 1
      %p360 = scmp.lt.s32.totalorder %s357, 1
      %s361 = scalar_select %p360, %s357, 1
      %s362 = smul.addr %s359, 2
      %s363 = sadd.s32 %s361, %s362
      %s364 = smul.addr %s363, 4
      %s365 = scalar_lea.vmem %s2, %s364
      %s366 = smul.u32 2, %s23
      %s367 = smul.u32 2, %s23
      %p368 = scmp.lt.s32.totalorder %s22, 1
      %s369 = scalar_select %p368, %s22, 1
      %p370 = scmp.lt.s32.totalorder %s367, 1
      %s371 = scalar_select %p370, %s367, 1
      %s372 = smul.addr %s369, 2
      %s373 = sadd.s32 %s371, %s372
      %s374 = scalar_lea.vmem %s3, %s373
      %s375 = smul.u32 2, %s23
      %s376 = smul.u32 2, %s23
      %p377 = scmp.lt.s32.totalorder %s22, 1
      %s378 = scalar_select %p377, %s22, 1
      %p379 = scmp.lt.s32.totalorder %s376, 1
      %s380 = scalar_select %p379, %s376, 1
      %s381 = smul.addr %s378, 2
      %s382 = sadd.s32 %s380, %s381
      %s383 = scalar_lea.vmem %s4, %s382
      %s384 = smul.u32 2, %s23
      %p385 = scmp.lt.s32.totalorder %s22, 1
      %s386 = scalar_select %p385, %s22, 1
      %s387 = scalar_lea.vmem %s5, %s386
      %p388 = scmp.lt.s32.totalorder %s22, 1
      %s389 = scalar_select %p388, %s22, 1
      %s390 = scalar_lea.vmem %s6, %s389
      %p391 = scmp.eq.s32.totalorder %s23, 0
      // Predicated region
      $region41: #{conn_comp_attention.6} parent=39 // pred_check
        %p392 = pneg %p391
      $region42: #{conn_comp_attention.6} parent=39 // pred_check_branch
        %394 = sbr.rel (%p392) target = $region44
      $region43: #{conn_comp_attention.6} parent=39 // pred_region
        %vm395 = vcmask 31744
        %396 = vst.msk [vmem:[#allocation2] sm:$0xff] %vm395, 0.0
        %397 = vst.msk [vmem:[#allocation2 + $0x8] sm:$0xff] %vm395, 0.0
        %398 = vst.msk [vmem:[#allocation2 + $0x10] sm:$0xff] %vm395, 0.0
        %399 = vst.msk [vmem:[#allocation2 + $0x18] sm:$0xff] %vm395, 0.0
        %400 = vst.msk [vmem:[#allocation3] sm:$0xff] %vm395, 0.0
        %401 = vst.msk [vmem:[#allocation3 + $0x8] sm:$0xff] %vm395, 0.0
        %402 = vst.msk [vmem:[#allocation3 + $0x10] sm:$0xff] %vm395, 0.0
        %403 = vst.msk [vmem:[#allocation3 + $0x18] sm:$0xff] %vm395, 0.0
        %vm404 = vcmask 7168
        %405 = vst.msk [vmem:[#allocation4] sm:$0xff] %vm404, 0.0
        %406 = vst.msk [vmem:[#allocation4 + $0x8] sm:$0xff] %vm404, 0.0
        %407 = vst.msk [vmem:[#allocation4 + $0x10] sm:$0xff] %vm404, 0.0
        %408 = vst.msk [vmem:[#allocation4 + $0x18] sm:$0xff] %vm404, 0.0
        %vm409 = vcmask 253952
        %410 = vst.msk [vmem:[#allocation5] sm:$0x1] %vm409, 0.0
        %411 = vst.msk [vmem:[#allocation6] sm:$0xff] %vm404, 0.0
        %412 = vst.msk [vmem:[#allocation6 + $0x8] sm:$0xff] %vm404, 0.0
        %413 = vst.msk [vmem:[#allocation6 + $0x10] sm:$0xff] %vm404, 0.0
        %414 = vst.msk [vmem:[#allocation6 + $0x18] sm:$0xff] %vm404, 0.0
        %415 = vst.msk [vmem:[#allocation7] sm:$0x1] %vm409, 0.0
      $region44: #{conn_comp_attention.6} parent=39 // pred_fallthru
        _
      %v416 = vld [vmem:[%s365] sm:$0xff]
      %v417 = vld [vmem:[%s374] sm:$0x3]
      %v418 = vld [vmem:[%s383] sm:$0x3]
      %v419 = vld [vmem:[%s351] sm:$0xff]
      %v420 = vld [vmem:[%s351 + $0x8] sm:$0xff]
      %v421 = vld [vmem:[%s351 + $0x10] sm:$0xff]
      %v422 = vld [vmem:[%s351 + $0x18] sm:$0xff]
      %v423 = vld [vmem:[%s356] sm:$0xff]
      %v424 = vld [vmem:[%s356 + $0x8] sm:$0xff]
      %v425 = vld [vmem:[%s356 + $0x10] sm:$0xff]
      %v426 = vld [vmem:[%s356 + $0x18] sm:$0xff]
      %v427 = vlaneseq
      %v428 = vshrl.u32 %v427, 7
      %v429 = vadd.s32 %v428, 8
      %v430 = vadd.s32 %v428, 16
      %v431 = vadd.s32 %v428, 24
      %vm432 = vcmp.ne.s32.totalorder %v419, 0
      %vm433 = vcmp.ne.s32.totalorder %v420, 0
      %vm434 = vcmp.ne.s32.totalorder %v421, 0
      %vm435 = vcmp.ne.s32.totalorder %v422, 0
      %vm436 = vcmp.lt.s32.totalorder %v428, 19
      %vm437 = vcmp.lt.s32.totalorder %v429, 19
      %vm438 = vcmp.lt.s32.totalorder %v430, 19
      %vm439 = vcmp.lt.s32.totalorder %v431, 19
      %vm440 = vmand %vm432, %vm436
      %vm441 = vmand %vm433, %vm437
      %vm442 = vmand %vm434, %vm438
      %vm443 = vmand %vm435, %vm439
      %vm444 = vcmp.ne.s32.totalorder %v423, 0
      %vm445 = vcmp.ne.s32.totalorder %v424, 0
      %vm446 = vcmp.ne.s32.totalorder %v425, 0
      %vm447 = vcmp.ne.s32.totalorder %v426, 0
      %vm448 = vmand %vm444, %vm436
      %vm449 = vmand %vm445, %vm437
      %vm450 = vmand %vm446, %vm438
      %vm451 = vmand %vm447, %vm439
      %v452 = vlaneseq
      %v453 = vshrl.u32 %v452, 7
      %v454 = vsub.s32 0, %v453
      %v455 = vrot.slane %v417, %v454
      %v456 = vlaneseq
      %v457 = vshrl.u32 %v456, 7
      %v458 = vsub.s32 1, %v457
      %v459 = vrot.slane %v417, %v458
      %460 = vset.pattern.permute.xlu0 0
      %461 = vperm.xlu0 %460, %v419
      %v462 = vpop.permute.xlu0 %461
      %463 = vset.pattern.permute.xlu0 0
      %464 = vperm.xlu0 %463, %v420
      %v465 = vpop.permute.xlu0 %464
      %466 = vset.pattern.permute.xlu0 0
      %467 = vperm.xlu0 %466, %v421
      %v468 = vpop.permute.xlu0 %467
      %469 = vset.pattern.permute.xlu0 0
      %470 = vperm.xlu0 %469, %v422
      %v471 = vpop.permute.xlu0 %470
      %vm472 = vcmp.eq.s32.totalorder %v455, %v462
      %vm473 = vcmp.eq.s32.totalorder %v459, %v462
      %vm474 = vcmp.eq.s32.totalorder %v455, %v465
      %vm475 = vcmp.eq.s32.totalorder %v459, %v465
      %vm476 = vcmp.eq.s32.totalorder %v455, %v468
      %vm477 = vcmp.eq.s32.totalorder %v459, %v468
      %vm478 = vcmp.eq.s32.totalorder %v455, %v471
      %vm479 = vcmp.eq.s32.totalorder %v459, %v471
      %v480 = vsel %vm440, 1, 0
      %v481 = vsel %vm441, 1, 0
      %v482 = vsel %vm442, 1, 0
      %v483 = vsel %vm443, 1, 0
      %484 = vset.pattern.permute.xlu0 0
      %485 = vperm.xlu0 %484, %v480
      %v486 = vpop.permute.xlu0 %485
      %487 = vset.pattern.permute.xlu0 0
      %488 = vperm.xlu0 %487, %v481
      %v489 = vpop.permute.xlu0 %488
      %490 = vset.pattern.permute.xlu0 0
      %491 = vperm.xlu0 %490, %v482
      %v492 = vpop.permute.xlu0 %491
      %493 = vset.pattern.permute.xlu0 0
      %494 = vperm.xlu0 %493, %v483
      %v495 = vpop.permute.xlu0 %494
      %vm496 = vcmp.eq.s32.totalorder %v486, 1
      %vm497 = vcmp.eq.s32.totalorder %v489, 1
      %vm498 = vcmp.eq.s32.totalorder %v492, 1
      %vm499 = vcmp.eq.s32.totalorder %v495, 1
      %vm500 = vmand %vm472, %vm496
      %vm501 = vmand %vm473, %vm496
      %vm502 = vmand %vm474, %vm497
      %vm503 = vmand %vm475, %vm497
      %vm504 = vmand %vm476, %vm498
      %vm505 = vmand %vm477, %vm498
      %vm506 = vmand %vm478, %vm499
      %vm507 = vmand %vm479, %vm499
      %v508 = vsel %vm500, 1, 0
      %v509 = vsel %vm501, 1, 0
      %v510 = vsel %vm502, 1, 0
      %v511 = vsel %vm503, 1, 0
      %v512 = vsel %vm504, 1, 0
      %v513 = vsel %vm505, 1, 0
      %v514 = vsel %vm506, 1, 0
      %v515 = vsel %vm507, 1, 0
      %v516 = vcvt.s32.f32 %v508
      %v517 = vcvt.s32.f32 %v509
      %v518 = vcvt.s32.f32 %v510
      %v519 = vcvt.s32.f32 %v511
      %v520 = vcvt.s32.f32 %v512
      %v521 = vcvt.s32.f32 %v513
      %v522 = vcvt.s32.f32 %v514
      %v523 = vcvt.s32.f32 %v515
      %v524 = vlaneseq
      %v525 = vshrl.u32 %v524, 7
      %v526 = vsub.s32 0, %v525
      %v527 = vrot.slane %v418, %v526
      %v528 = vlaneseq
      %v529 = vshrl.u32 %v528, 7
      %v530 = vsub.s32 1, %v529
      %v531 = vrot.slane %v418, %v530
      %532 = vset.pattern.permute.xlu0 0
      %533 = vperm.xlu0 %532, %v423
      %v534 = vpop.permute.xlu0 %533
      %535 = vset.pattern.permute.xlu0 0
      %536 = vperm.xlu0 %535, %v424
      %v537 = vpop.permute.xlu0 %536
      %538 = vset.pattern.permute.xlu0 0
      %539 = vperm.xlu0 %538, %v425
      %v540 = vpop.permute.xlu0 %539
      %541 = vset.pattern.permute.xlu0 0
      %542 = vperm.xlu0 %541, %v426
      %v543 = vpop.permute.xlu0 %542
      %vm544 = vcmp.eq.s32.totalorder %v527, %v534
      %vm545 = vcmp.eq.s32.totalorder %v531, %v534
      %vm546 = vcmp.eq.s32.totalorder %v527, %v537
      %vm547 = vcmp.eq.s32.totalorder %v531, %v537
      %vm548 = vcmp.eq.s32.totalorder %v527, %v540
      %vm549 = vcmp.eq.s32.totalorder %v531, %v540
      %vm550 = vcmp.eq.s32.totalorder %v527, %v543
      %vm551 = vcmp.eq.s32.totalorder %v531, %v543
      %v552 = vsel %vm448, 1, 0
      %v553 = vsel %vm449, 1, 0
      %v554 = vsel %vm450, 1, 0
      %v555 = vsel %vm451, 1, 0
      %556 = vset.pattern.permute.xlu0 0
      %557 = vperm.xlu0 %556, %v552
      %v558 = vpop.permute.xlu0 %557
      %559 = vset.pattern.permute.xlu0 0
      %560 = vperm.xlu0 %559, %v553
      %v561 = vpop.permute.xlu0 %560
      %562 = vset.pattern.permute.xlu0 0
      %563 = vperm.xlu0 %562, %v554
      %v564 = vpop.permute.xlu0 %563
      %565 = vset.pattern.permute.xlu0 0
      %566 = vperm.xlu0 %565, %v555
      %v567 = vpop.permute.xlu0 %566
      %vm568 = vcmp.eq.s32.totalorder %v558, 1
      %vm569 = vcmp.eq.s32.totalorder %v561, 1
      %vm570 = vcmp.eq.s32.totalorder %v564, 1
      %vm571 = vcmp.eq.s32.totalorder %v567, 1
      %vm572 = vmand %vm544, %vm568
      %vm573 = vmand %vm545, %vm568
      %vm574 = vmand %vm546, %vm569
      %vm575 = vmand %vm547, %vm569
      %vm576 = vmand %vm548, %vm570
      %vm577 = vmand %vm549, %vm570
      %vm578 = vmand %vm550, %vm571
      %vm579 = vmand %vm551, %vm571
      %v580 = vsel %vm572, 1, 0
      %v581 = vsel %vm573, 1, 0
      %v582 = vsel %vm574, 1, 0
      %v583 = vsel %vm575, 1, 0
      %v584 = vsel %vm576, 1, 0
      %v585 = vsel %vm577, 1, 0
      %v586 = vsel %vm578, 1, 0
      %v587 = vsel %vm579, 1, 0
      %v588 = vcvt.s32.f32 %v580
      %v589 = vcvt.s32.f32 %v581
      %v590 = vcvt.s32.f32 %v582
      %v591 = vcvt.s32.f32 %v583
      %v592 = vcvt.s32.f32 %v584
      %v593 = vcvt.s32.f32 %v585
      %v594 = vcvt.s32.f32 %v586
      %v595 = vcvt.s32.f32 %v587
      %v596 = vld [vmem:[#allocation2] sm:$0xff]
      %v597 = vld [vmem:[#allocation2 + $0x8] sm:$0xff]
      %v598 = vld [vmem:[#allocation2 + $0x10] sm:$0xff]
      %v599 = vld [vmem:[#allocation2 + $0x18] sm:$0xff]
      %v601 = vcombine.high %v416, %v416
      %603 = vmatprep.subr.mxu0 %v601
      %604 = vmatpush1.xpose.msra.mxu0 %v416
      %605 = vmatprep.subr.mxu0 0.0
      %606 = vmatpush1.xpose.msra.mxu0 0.0
      %607 = vmatprep.subr.mxu0 0.0
      %608 = vmatpush1.xpose.msra.mxu0 0.0
      %609 = vmatprep.subr.mxu0 0.0
      %610 = vmatpush1.xpose.msra.mxu0 0.0
      %611 = vmatprep.subr.mxu0 0.0
      %612 = vmatpush1.xpose.msra.mxu0 0.0
      %613 = vmatprep.subr.mxu0 0.0
      %614 = vmatpush1.xpose.msra.mxu0 0.0
      %615 = vmatprep.subr.mxu0 0.0
      %616 = vmatpush1.xpose.msra.mxu0 0.0
      %617 = vmatprep.subr.mxu0 0.0
      %618 = vmatpush1.xpose.msra.mxu0 0.0
      %619 = vmatprep.subr.mxu0 0.0
      %620 = vmatpush1.xpose.msra.mxu0 0.0
      %621 = vmatprep.subr.mxu0 0.0
      %622 = vmatpush1.xpose.msra.mxu0 0.0
      %623 = vmatprep.subr.mxu0 0.0
      %624 = vmatpush1.xpose.msra.mxu0 0.0
      %625 = vmatprep.subr.mxu0 0.0
      %626 = vmatpush1.xpose.msra.mxu0 0.0
      %627 = vmatprep.subr.mxu0 0.0
      %628 = vmatpush1.xpose.msra.mxu0 0.0
      %629 = vmatprep.subr.mxu0 0.0
      %630 = vmatpush1.xpose.msra.mxu0 0.0
      %631 = vmatprep.subr.mxu0 0.0
      %632 = vmatpush1.xpose.msra.mxu0 0.0
      %633 = vmatprep.subr.mxu0 0.0
      %634 = vmatpush1.xpose.msra.mxu0 0.0
      %635 = vmatprep.subr.mxu0 0.0
      %636 = vmatpush1.xpose.msra.mxu0 0.0
      %637 = vmatprep.subr.mxu0 0.0
      %638 = vmatpush1.xpose.msra.mxu0 0.0
      %639 = vmatprep.subr.mxu0 0.0
      %640 = vmatpush1.xpose.msra.mxu0 0.0
      %641 = vmatprep.subr.mxu0 0.0
      %642 = vmatpush1.xpose.msra.mxu0 0.0
      %643 = vmatprep.subr.mxu0 0.0
      %644 = vmatpush1.xpose.msra.mxu0 0.0
      %645 = vmatprep.subr.mxu0 0.0
      %646 = vmatpush1.xpose.msra.mxu0 0.0
      %647 = vmatprep.subr.mxu0 0.0
      %648 = vmatpush1.xpose.msra.mxu0 0.0
      %649 = vmatprep.subr.mxu0 0.0
      %650 = vmatpush1.xpose.msra.mxu0 0.0
      %651 = vmatprep.subr.mxu0 0.0
      %652 = vmatpush1.xpose.msra.mxu0 0.0
      %653 = vmatprep.subr.mxu0 0.0
      %654 = vmatpush1.xpose.msra.mxu0 0.0
      %655 = vmatprep.subr.mxu0 0.0
      %656 = vmatpush1.xpose.msra.mxu0 0.0
      %657 = vmatprep.subr.mxu0 0.0
      %658 = vmatpush1.xpose.msra.mxu0 0.0
      %659 = vmatprep.subr.mxu0 0.0
      %660 = vmatpush1.xpose.msra.mxu0 0.0
      %661 = vmatprep.subr.mxu0 0.0
      %662 = vmatpush1.xpose.msra.mxu0 0.0
      %663 = vmatprep.subr.mxu0 0.0
      %664 = vmatpush1.xpose.msra.mxu0 0.0
      %665 = vmatprep.subr.mxu0 0.0
      %666 = vmatpush1.xpose.msra.mxu0 0.0
      %667 = vmatprep.mubr.f32.mxu0 %v517
      %668 = vmatmul.mubr.f32.gmra.mrb[0].mxu0 %v516
      %v669 = vpop.f32.mrb[0].mxu0
      %v670 = vadd.f32 0.0, %v669
      %v671 = vpop.f32.mrb[0].mxu0
      %672 = vmatprep.mubr.f32.mxu0 %v519
      %673 = vmatmul.mubr.f32.gmra.mrb[0].mxu0 %v518
      %v674 = vpop.f32.mrb[0].mxu0
      %v675 = vadd.f32 0.0, %v674
      %v676 = vpop.f32.mrb[0].mxu0
      %677 = vmatprep.mubr.f32.mxu0 %v521
      %678 = vmatmul.mubr.f32.gmra.mrb[0].mxu0 %v520
      %v679 = vpop.f32.mrb[0].mxu0
      %v680 = vadd.f32 0.0, %v679
      %v681 = vpop.f32.mrb[0].mxu0
      %682 = vmatprep.mubr.f32.mxu0 %v523
      %683 = vmatmul.mubr.f32.gmra.mrb[0].mxu0 %v522
      %v684 = vpop.f32.mrb[0].mxu0
      %v685 = vadd.f32 0.0, %v684
      %v686 = vpop.f32.mrb[0].mxu0
      %687 = vdwg.mxu0
      %v688 = vadd.f32 %v596, %v670
      %v689 = vadd.f32 %v597, %v675
      %v690 = vadd.f32 %v598, %v680
      %v691 = vadd.f32 %v599, %v685
      %vm692 = vcmask 31744
      %693 = vst.msk [vmem:[#allocation2] sm:$0xff] %vm692, %v688
      %694 = vst.msk [vmem:[#allocation2 + $0x8] sm:$0xff] %vm692, %v689
      %695 = vst.msk [vmem:[#allocation2 + $0x10] sm:$0xff] %vm692, %v690
      %696 = vst.msk [vmem:[#allocation2 + $0x18] sm:$0xff] %vm692, %v691
      %v697 = vld [vmem:[#allocation3] sm:$0xff]
      %v698 = vld [vmem:[#allocation3 + $0x8] sm:$0xff]
      %v699 = vld [vmem:[#allocation3 + $0x10] sm:$0xff]
      %v700 = vld [vmem:[#allocation3 + $0x18] sm:$0xff]
      %701 = vmatprep.subr.mxu0 %v601
      %702 = vmatpush1.xpose.msra.mxu0 %v416
      %703 = vmatprep.subr.mxu0 0.0
      %704 = vmatpush1.xpose.msra.mxu0 0.0
      %705 = vmatprep.subr.mxu0 0.0
      %706 = vmatpush1.xpose.msra.mxu0 0.0
      %707 = vmatprep.subr.mxu0 0.0
      %708 = vmatpush1.xpose.msra.mxu0 0.0
      %709 = vmatprep.subr.mxu0 0.0
      %710 = vmatpush1.xpose.msra.mxu0 0.0
      %711 = vmatprep.subr.mxu0 0.0
      %712 = vmatpush1.xpose.msra.mxu0 0.0
      %713 = vmatprep.subr.mxu0 0.0
      %714 = vmatpush1.xpose.msra.mxu0 0.0
      %715 = vmatprep.subr.mxu0 0.0
      %716 = vmatpush1.xpose.msra.mxu0 0.0
      %717 = vmatprep.subr.mxu0 0.0
      %718 = vmatpush1.xpose.msra.mxu0 0.0
      %719 = vmatprep.subr.mxu0 0.0
      %720 = vmatpush1.xpose.msra.mxu0 0.0
      %721 = vmatprep.subr.mxu0 0.0
      %722 = vmatpush1.xpose.msra.mxu0 0.0
      %723 = vmatprep.subr.mxu0 0.0
      %724 = vmatpush1.xpose.msra.mxu0 0.0
      %725 = vmatprep.subr.mxu0 0.0
      %726 = vmatpush1.xpose.msra.mxu0 0.0
      %727 = vmatprep.subr.mxu0 0.0
      %728 = vmatpush1.xpose.msra.mxu0 0.0
      %729 = vmatprep.subr.mxu0 0.0
      %730 = vmatpush1.xpose.msra.mxu0 0.0
      %731 = vmatprep.subr.mxu0 0.0
      %732 = vmatpush1.xpose.msra.mxu0 0.0
      %733 = vmatprep.subr.mxu0 0.0
      %734 = vmatpush1.xpose.msra.mxu0 0.0
      %735 = vmatprep.subr.mxu0 0.0
      %736 = vmatpush1.xpose.msra.mxu0 0.0
      %737 = vmatprep.subr.mxu0 0.0
      %738 = vmatpush1.xpose.msra.mxu0 0.0
      %739 = vmatprep.subr.mxu0 0.0
      %740 = vmatpush1.xpose.msra.mxu0 0.0
      %741 = vmatprep.subr.mxu0 0.0
      %742 = vmatpush1.xpose.msra.mxu0 0.0
      %743 = vmatprep.subr.mxu0 0.0
      %744 = vmatpush1.xpose.msra.mxu0 0.0
      %745 = vmatprep.subr.mxu0 0.0
      %746 = vmatpush1.xpose.msra.mxu0 0.0
      %747 = vmatprep.subr.mxu0 0.0
      %748 = vmatpush1.xpose.msra.mxu0 0.0
      %749 = vmatprep.subr.mxu0 0.0
      %750 = vmatpush1.xpose.msra.mxu0 0.0
      %751 = vmatprep.subr.mxu0 0.0
      %752 = vmatpush1.xpose.msra.mxu0 0.0
      %753 = vmatprep.subr.mxu0 0.0
      %754 = vmatpush1.xpose.msra.mxu0 0.0
      %755 = vmatprep.subr.mxu0 0.0
      %756 = vmatpush1.xpose.msra.mxu0 0.0
      %757 = vmatprep.subr.mxu0 0.0
      %758 = vmatpush1.xpose.msra.mxu0 0.0
      %759 = vmatprep.subr.mxu0 0.0
      %760 = vmatpush1.xpose.msra.mxu0 0.0
      %761 = vmatprep.subr.mxu0 0.0
      %762 = vmatpush1.xpose.msra.mxu0 0.0
      %763 = vmatprep.subr.mxu0 0.0
      %764 = vmatpush1.xpose.msra.mxu0 0.0
      %765 = vmatprep.mubr.f32.mxu0 %v589
      %766 = vmatmul.mubr.f32.gmra.mrb[0].mxu0 %v588
      %v767 = vpop.f32.mrb[0].mxu0
      %v768 = vadd.f32 0.0, %v767
      %v769 = vpop.f32.mrb[0].mxu0
      %770 = vmatprep.mubr.f32.mxu0 %v591
      %771 = vmatmul.mubr.f32.gmra.mrb[0].mxu0 %v590
      %v772 = vpop.f32.mrb[0].mxu0
      %v773 = vadd.f32 0.0, %v772
      %v774 = vpop.f32.mrb[0].mxu0
      %775 = vmatprep.mubr.f32.mxu0 %v593
      %776 = vmatmul.mubr.f32.gmra.mrb[0].mxu0 %v592
      %v777 = vpop.f32.mrb[0].mxu0
      %v778 = vadd.f32 0.0, %v777
      %v779 = vpop.f32.mrb[0].mxu0
      %780 = vmatprep.mubr.f32.mxu0 %v595
      %781 = vmatmul.mubr.f32.gmra.mrb[0].mxu0 %v594
      %v782 = vpop.f32.mrb[0].mxu0
      %v783 = vadd.f32 0.0, %v782
      %v784 = vpop.f32.mrb[0].mxu0
      %785 = vdwg.mxu0
      %v786 = vadd.f32 %v697, %v768
      %v787 = vadd.f32 %v698, %v773
      %v788 = vadd.f32 %v699, %v778
      %v789 = vadd.f32 %v700, %v783
      %790 = vst.msk [vmem:[#allocation3] sm:$0xff] %vm692, %v786
      %791 = vst.msk [vmem:[#allocation3 + $0x8] sm:$0xff] %vm692, %v787
      %792 = vst.msk [vmem:[#allocation3 + $0x10] sm:$0xff] %vm692, %v788
      %793 = vst.msk [vmem:[#allocation3 + $0x18] sm:$0xff] %vm692, %v789
      %v794 = vld [vmem:[#allocation4] sm:$0xff]
      %v795 = vld [vmem:[#allocation4 + $0x8] sm:$0xff]
      %v796 = vld [vmem:[#allocation4 + $0x10] sm:$0xff]
      %v797 = vld [vmem:[#allocation4 + $0x18] sm:$0xff]
      %v798 = vadd.f32 %v516, %v517
      %799 = vadd.xlane.f32.xlu0 %v798
      %v800 = vpop.xlane.xlu0 %799
      %v801 = vadd.f32 %v518, %v519
      %802 = vadd.xlane.f32.xlu0 %v801
      %v803 = vpop.xlane.xlu0 %802
      %v804 = vadd.f32 %v520, %v521
      %805 = vadd.xlane.f32.xlu0 %v804
      %v806 = vpop.xlane.xlu0 %805
      %v807 = vadd.f32 %v522, %v523
      %808 = vadd.xlane.f32.xlu0 %v807
      %v809 = vpop.xlane.xlu0 %808
      %v810 = vadd.f32 %v794, %v800
      %v811 = vadd.f32 %v795, %v803
      %v812 = vadd.f32 %v796, %v806
      %v813 = vadd.f32 %v797, %v809
      %vm814 = vcmask 7168
      %815 = vst.msk [vmem:[#allocation4] sm:$0xff] %vm814, %v810
      %816 = vst.msk [vmem:[#allocation4 + $0x8] sm:$0xff] %vm814, %v811
      %817 = vst.msk [vmem:[#allocation4 + $0x10] sm:$0xff] %vm814, %v812
      %818 = vst.msk [vmem:[#allocation4 + $0x18] sm:$0xff] %vm814, %v813
      %v819 = vld [vmem:[#allocation6] sm:$0xff]
      %v820 = vld [vmem:[#allocation6 + $0x8] sm:$0xff]
      %v821 = vld [vmem:[#allocation6 + $0x10] sm:$0xff]
      %v822 = vld [vmem:[#allocation6 + $0x18] sm:$0xff]
      %v823 = vadd.f32 %v588, %v589
      %824 = vadd.xlane.f32.xlu0 %v823
      %v825 = vpop.xlane.xlu0 %824
      %v826 = vadd.f32 %v590, %v591
      %827 = vadd.xlane.f32.xlu0 %v826
      %v828 = vpop.xlane.xlu0 %827
      %v829 = vadd.f32 %v592, %v593
      %830 = vadd.xlane.f32.xlu0 %v829
      %v831 = vpop.xlane.xlu0 %830
      %v832 = vadd.f32 %v594, %v595
      %833 = vadd.xlane.f32.xlu0 %v832
      %v834 = vpop.xlane.xlu0 %833
      %v835 = vadd.f32 %v819, %v825
      %v836 = vadd.f32 %v820, %v828
      %v837 = vadd.f32 %v821, %v831
      %v838 = vadd.f32 %v822, %v834
      %839 = vst.msk [vmem:[#allocation6] sm:$0xff] %vm814, %v835
      %840 = vst.msk [vmem:[#allocation6 + $0x8] sm:$0xff] %vm814, %v836
      %841 = vst.msk [vmem:[#allocation6 + $0x10] sm:$0xff] %vm814, %v837
      %842 = vst.msk [vmem:[#allocation6 + $0x18] sm:$0xff] %vm814, %v838
      %v843 = vld [vmem:[#allocation5] sm:$0x1]
      %844 = vmatprep.subr.mxu0 %v517
      %845 = vmatpush1.xpose.msra.mxu0 %v516
      %846 = vmatprep.subr.mxu0 %v519
      %847 = vmatpush1.xpose.msra.mxu0 %v518
      %848 = vmatprep.subr.mxu0 %v521
      %849 = vmatpush1.xpose.msra.mxu0 %v520
      %850 = vmatprep.subr.mxu0 %v523
      %851 = vmatpush1.xpose.msra.mxu0 %v522
      %852 = vmatprep.subr.mxu0 0.0
      %853 = vmatpush1.xpose.msra.mxu0 0.0
      %854 = vmatprep.subr.mxu0 0.0
      %855 = vmatpush1.xpose.msra.mxu0 0.0
      %856 = vmatprep.subr.mxu0 0.0
      %857 = vmatpush1.xpose.msra.mxu0 0.0
      %858 = vmatprep.subr.mxu0 0.0
      %859 = vmatpush1.xpose.msra.mxu0 0.0
      %860 = vmatprep.subr.mxu0 0.0
      %861 = vmatpush1.xpose.msra.mxu0 0.0
      %862 = vmatprep.subr.mxu0 0.0
      %863 = vmatpush1.xpose.msra.mxu0 0.0
      %864 = vmatprep.subr.mxu0 0.0
      %865 = vmatpush1.xpose.msra.mxu0 0.0
      %866 = vmatprep.subr.mxu0 0.0
      %867 = vmatpush1.xpose.msra.mxu0 0.0
      %868 = vmatprep.subr.mxu0 0.0
      %869 = vmatpush1.xpose.msra.mxu0 0.0
      %870 = vmatprep.subr.mxu0 0.0
      %871 = vmatpush1.xpose.msra.mxu0 0.0
      %872 = vmatprep.subr.mxu0 0.0
      %873 = vmatpush1.xpose.msra.mxu0 0.0
      %874 = vmatprep.subr.mxu0 0.0
      %875 = vmatpush1.xpose.msra.mxu0 0.0
      %876 = vmatprep.subr.mxu0 0.0
      %877 = vmatpush1.xpose.msra.mxu0 0.0
      %878 = vmatprep.subr.mxu0 0.0
      %879 = vmatpush1.xpose.msra.mxu0 0.0
      %880 = vmatprep.subr.mxu0 0.0
      %881 = vmatpush1.xpose.msra.mxu0 0.0
      %882 = vmatprep.subr.mxu0 0.0
      %883 = vmatpush1.xpose.msra.mxu0 0.0
      %884 = vmatprep.subr.mxu0 0.0
      %885 = vmatpush1.xpose.msra.mxu0 0.0
      %886 = vmatprep.subr.mxu0 0.0
      %887 = vmatpush1.xpose.msra.mxu0 0.0
      %888 = vmatprep.subr.mxu0 0.0
      %889 = vmatpush1.xpose.msra.mxu0 0.0
      %890 = vmatprep.subr.mxu0 0.0
      %891 = vmatpush1.xpose.msra.mxu0 0.0
      %892 = vmatprep.subr.mxu0 0.0
      %893 = vmatpush1.xpose.msra.mxu0 0.0
      %894 = vmatprep.subr.mxu0 0.0
      %895 = vmatpush1.xpose.msra.mxu0 0.0
      %896 = vmatprep.subr.mxu0 0.0
      %897 = vmatpush1.xpose.msra.mxu0 0.0
      %898 = vmatprep.subr.mxu0 0.0
      %899 = vmatpush1.xpose.msra.mxu0 0.0
      %900 = vmatprep.subr.mxu0 0.0
      %901 = vmatpush1.xpose.msra.mxu0 0.0
      %902 = vmatprep.subr.mxu0 0.0
      %903 = vmatpush1.xpose.msra.mxu0 0.0
      %904 = vmatprep.subr.mxu0 0.0
      %905 = vmatpush1.xpose.msra.mxu0 0.0
      %906 = vmatprep.subr.mxu0 0.0
      %907 = vmatpush1.xpose.msra.mxu0 0.0
      %908 = vmatprep.mubr.f32.mxu0 1.0
      %909 = vmatmul.mubr.f32.gmra.mrb[0].mxu0 1.0
      %v910 = vpop.f32.mrb[0].mxu0
      %v911 = vadd.f32 0.0, %v910
      %v912 = vpop.f32.mrb[0].mxu0
      %913 = vdwg.mxu0
      %v914 = vadd.f32 %v843, %v911
      %vm915 = vcmask 253952
      %916 = vst.msk [vmem:[#allocation5] sm:$0x1] %vm915, %v914
      %v917 = vld [vmem:[#allocation7] sm:$0x1]
      %918 = vmatprep.subr.mxu0 %v589
      %919 = vmatpush1.xpose.msra.mxu0 %v588
      %920 = vmatprep.subr.mxu0 %v591
      %921 = vmatpush1.xpose.msra.mxu0 %v590
      %922 = vmatprep.subr.mxu0 %v593
      %923 = vmatpush1.xpose.msra.mxu0 %v592
      %924 = vmatprep.subr.mxu0 %v595
      %925 = vmatpush1.xpose.msra.mxu0 %v594
      %926 = vmatprep.subr.mxu0 0.0
      %927 = vmatpush1.xpose.msra.mxu0 0.0
      %928 = vmatprep.subr.mxu0 0.0
      %929 = vmatpush1.xpose.msra.mxu0 0.0
      %930 = vmatprep.subr.mxu0 0.0
      %931 = vmatpush1.xpose.msra.mxu0 0.0
      %932 = vmatprep.subr.mxu0 0.0
      %933 = vmatpush1.xpose.msra.mxu0 0.0
      %934 = vmatprep.subr.mxu0 0.0
      %935 = vmatpush1.xpose.msra.mxu0 0.0
      %936 = vmatprep.subr.mxu0 0.0
      %937 = vmatpush1.xpose.msra.mxu0 0.0
      %938 = vmatprep.subr.mxu0 0.0
      %939 = vmatpush1.xpose.msra.mxu0 0.0
      %940 = vmatprep.subr.mxu0 0.0
      %941 = vmatpush1.xpose.msra.mxu0 0.0
      %942 = vmatprep.subr.mxu0 0.0
      %943 = vmatpush1.xpose.msra.mxu0 0.0
      %944 = vmatprep.subr.mxu0 0.0
      %945 = vmatpush1.xpose.msra.mxu0 0.0
      %946 = vmatprep.subr.mxu0 0.0
      %947 = vmatpush1.xpose.msra.mxu0 0.0
      %948 = vmatprep.subr.mxu0 0.0
      %949 = vmatpush1.xpose.msra.mxu0 0.0
      %950 = vmatprep.subr.mxu0 0.0
      %951 = vmatpush1.xpose.msra.mxu0 0.0
      %952 = vmatprep.subr.mxu0 0.0
      %953 = vmatpush1.xpose.msra.mxu0 0.0
      %954 = vmatprep.subr.mxu0 0.0
      %955 = vmatpush1.xpose.msra.mxu0 0.0
      %956 = vmatprep.subr.mxu0 0.0
      %957 = vmatpush1.xpose.msra.mxu0 0.0
      %958 = vmatprep.subr.mxu0 0.0
      %959 = vmatpush1.xpose.msra.mxu0 0.0
      %960 = vmatprep.subr.mxu0 0.0
      %961 = vmatpush1.xpose.msra.mxu0 0.0
      %962 = vmatprep.subr.mxu0 0.0
      %963 = vmatpush1.xpose.msra.mxu0 0.0
      %964 = vmatprep.subr.mxu0 0.0
      %965 = vmatpush1.xpose.msra.mxu0 0.0
      %966 = vmatprep.subr.mxu0 0.0
      %967 = vmatpush1.xpose.msra.mxu0 0.0
      %968 = vmatprep.subr.mxu0 0.0
      %969 = vmatpush1.xpose.msra.mxu0 0.0
      %970 = vmatprep.subr.mxu0 0.0
      %971 = vmatpush1.xpose.msra.mxu0 0.0
      %972 = vmatprep.subr.mxu0 0.0
      %973 = vmatpush1.xpose.msra.mxu0 0.0
      %974 = vmatprep.subr.mxu0 0.0
      %975 = vmatpush1.xpose.msra.mxu0 0.0
      %976 = vmatprep.subr.mxu0 0.0
      %977 = vmatpush1.xpose.msra.mxu0 0.0
      %978 = vmatprep.subr.mxu0 0.0
      %979 = vmatpush1.xpose.msra.mxu0 0.0
      %980 = vmatprep.subr.mxu0 0.0
      %981 = vmatpush1.xpose.msra.mxu0 0.0
      %982 = vmatprep.mubr.f32.mxu0 1.0
      %983 = vmatmul.mubr.f32.gmra.mrb[0].mxu0 1.0
      %v984 = vpop.f32.mrb[0].mxu0
      %v985 = vadd.f32 0.0, %v984
      %v986 = vpop.f32.mrb[0].mxu0
      %987 = vdwg.mxu0
      %v988 = vadd.f32 %v917, %v985
      %989 = vst.msk [vmem:[#allocation7] sm:$0x1] %vm915, %v988
      // Predicated region
      $region45: #{conn_comp_attention.6} parent=39 // pred_check
        %p990 = pneg %p391
      $region46: #{conn_comp_attention.6} parent=39 // pred_check_branch
        %992 = sbr.rel (%p990) target = $region48
      $region47: #{conn_comp_attention.6} parent=39 // pred_region
        %v993 = vld [vmem:[#allocation4] sm:$0xff]
        %v994 = vld [vmem:[#allocation4 + $0x8] sm:$0xff]
        %v995 = vld [vmem:[#allocation4 + $0x10] sm:$0xff]
        %v996 = vld [vmem:[#allocation4 + $0x18] sm:$0xff]
        %v997 = vmax.f32 %v993, 1.0
        %v998 = vmax.f32 %v994, 1.0
        %v999 = vmax.f32 %v995, 1.0
        %v1000 = vmax.f32 %v996, 1.0
        %v1001 = vrcp.pop %v997
        %v1002 = vmul.f32 1.0, %v1001
        %v1003 = vrcp.pop %v998
        %v1004 = vmul.f32 1.0, %v1003
        %v1005 = vrcp.pop %v999
        %v1006 = vmul.f32 1.0, %v1005
        %v1007 = vrcp.pop %v1000
        %v1008 = vmul.f32 1.0, %v1007
        %v1009 = vld [vmem:[#allocation5] sm:$0x1]
        %v1010 = vmax.f32 %v1009, 1.0
        %v1011 = vrcp.pop %v1010
        %v1012 = vmul.f32 1.0, %v1011
        %v1013 = vld [vmem:[#allocation6] sm:$0xff]
        %v1014 = vld [vmem:[#allocation6 + $0x8] sm:$0xff]
        %v1015 = vld [vmem:[#allocation6 + $0x10] sm:$0xff]
        %v1016 = vld [vmem:[#allocation6 + $0x18] sm:$0xff]
        %v1017 = vmax.f32 %v1013, 1.0
        %v1018 = vmax.f32 %v1014, 1.0
        %v1019 = vmax.f32 %v1015, 1.0
        %v1020 = vmax.f32 %v1016, 1.0
        %v1021 = vrcp.pop %v1017
        %v1022 = vmul.f32 1.0, %v1021
        %v1023 = vrcp.pop %v1018
        %v1024 = vmul.f32 1.0, %v1023
        %v1025 = vrcp.pop %v1019
        %v1026 = vmul.f32 1.0, %v1025
        %v1027 = vrcp.pop %v1020
        %v1028 = vmul.f32 1.0, %v1027
        %v1029 = vld [vmem:[#allocation7] sm:$0x1]
        %v1030 = vmax.f32 %v1029, 1.0
        %v1031 = vrcp.pop %v1030
        %v1032 = vmul.f32 1.0, %v1031
        %v1033 = vld [vmem:[#allocation2] sm:$0xff]
        %v1034 = vld [vmem:[#allocation2 + $0x8] sm:$0xff]
        %v1035 = vld [vmem:[#allocation2 + $0x10] sm:$0xff]
        %v1036 = vld [vmem:[#allocation2 + $0x18] sm:$0xff]
        %v1037 = vld [vmem:[#allocation3] sm:$0xff]
        %v1038 = vld [vmem:[#allocation3 + $0x8] sm:$0xff]
        %v1039 = vld [vmem:[#allocation3 + $0x10] sm:$0xff]
        %v1040 = vld [vmem:[#allocation3 + $0x18] sm:$0xff]
        %v1042 = vsel %vm692, %v1033, 0
        %v1045 = vsel %vm692, %v1034, 0
        %v1048 = vsel %vm692, %v1035, 0
        %v1051 = vsel %vm692, %v1036, 0
        %v1054 = vsel %vm692, %v1037, 0
        %v1057 = vsel %vm692, %v1038, 0
        %v1060 = vsel %vm692, %v1039, 0
        %v1063 = vsel %vm692, %v1040, 0
        %1065 = vmatprep.subr.mxu0 0.0
        %1066 = vmatpush1.xpose.msra.mxu0 %v1054
        %1067 = vmatprep.subr.mxu0 0.0
        %1068 = vmatpush1.xpose.msra.mxu0 %v1057
        %1069 = vmatprep.subr.mxu0 0.0
        %1070 = vmatpush1.xpose.msra.mxu0 %v1060
        %1071 = vmatprep.subr.mxu0 0.0
        %1072 = vmatpush1.xpose.msra.mxu0 %v1063
        %1073 = vmatprep.subr.mxu0 0.0
        %1074 = vmatpush1.xpose.msra.mxu0 0.0
        %1075 = vmatprep.subr.mxu0 0.0
        %1076 = vmatpush1.xpose.msra.mxu0 0.0
        %1077 = vmatprep.subr.mxu0 0.0
        %1078 = vmatpush1.xpose.msra.mxu0 0.0
        %1079 = vmatprep.subr.mxu0 0.0
        %1080 = vmatpush1.xpose.msra.mxu0 0.0
        %1081 = vmatprep.subr.mxu0 0.0
        %1082 = vmatpush1.xpose.msra.mxu0 0.0
        %1083 = vmatprep.subr.mxu0 0.0
        %1084 = vmatpush1.xpose.msra.mxu0 0.0
        %1085 = vmatprep.subr.mxu0 0.0
        %1086 = vmatpush1.xpose.msra.mxu0 0.0
        %1087 = vmatprep.subr.mxu0 0.0
        %1088 = vmatpush1.xpose.msra.mxu0 0.0
        %1089 = vmatprep.subr.mxu0 0.0
        %1090 = vmatpush1.xpose.msra.mxu0 0.0
        %1091 = vmatprep.subr.mxu0 0.0
        %1092 = vmatpush1.xpose.msra.mxu0 0.0
        %1093 = vmatprep.subr.mxu0 0.0
        %1094 = vmatpush1.xpose.msra.mxu0 0.0
        %1095 = vmatprep.subr.mxu0 0.0
        %1096 = vmatpush1.xpose.msra.mxu0 0.0
        %1097 = vmatprep.subr.mxu0 0.0
        %1098 = vmatpush1.xpose.msra.mxu0 0.0
        %1099 = vmatprep.subr.mxu0 0.0
        %1100 = vmatpush1.xpose.msra.mxu0 0.0
        %1101 = vmatprep.subr.mxu0 0.0
        %1102 = vmatpush1.xpose.msra.mxu0 0.0
        %1103 = vmatprep.subr.mxu0 0.0
        %1104 = vmatpush1.xpose.msra.mxu0 0.0
        %1105 = vmatprep.subr.mxu0 0.0
        %1106 = vmatpush1.xpose.msra.mxu0 0.0
        %1107 = vmatprep.subr.mxu0 0.0
        %1108 = vmatpush1.xpose.msra.mxu0 0.0
        %1109 = vmatprep.subr.mxu0 0.0
        %1110 = vmatpush1.xpose.msra.mxu0 0.0
        %1111 = vmatprep.subr.mxu0 0.0
        %1112 = vmatpush1.xpose.msra.mxu0 0.0
        %1113 = vmatprep.subr.mxu0 0.0
        %1114 = vmatpush1.xpose.msra.mxu0 0.0
        %1115 = vmatprep.subr.mxu0 0.0
        %1116 = vmatpush1.xpose.msra.mxu0 0.0
        %1117 = vmatprep.subr.mxu0 0.0
        %1118 = vmatpush1.xpose.msra.mxu0 0.0
        %1119 = vmatprep.subr.mxu0 0.0
        %1120 = vmatpush1.xpose.msra.mxu0 0.0
        %1121 = vmatprep.subr.mxu0 0.0
        %1122 = vmatpush1.xpose.msra.mxu0 0.0
        %1123 = vmatprep.subr.mxu0 0.0
        %1124 = vmatpush1.xpose.msra.mxu0 0.0
        %1125 = vmatprep.subr.mxu0 0.0
        %1126 = vmatpush1.xpose.msra.mxu0 0.0
        %1127 = vmatprep.subr.mxu0 0.0
        %1128 = vmatpush1.xpose.msra.mxu0 0.0
        %1129 = vmatprep.mubr.f32.mxu0 0.0
        %1130 = vmatmul.mubr.f32.gmra.mrb[0].mxu0 %v1042
        %v1131 = vpop.f32.mrb[0].mxu0
        %v1132 = vadd.f32 0.0, %v1131
        %v1133 = vpop.f32.mrb[0].mxu0
        %1134 = vmatprep.mubr.f32.mxu0 0.0
        %1135 = vmatmul.mubr.f32.gmra.mrb[0].mxu0 %v1045
        %v1136 = vpop.f32.mrb[0].mxu0
        %v1137 = vadd.f32 0.0, %v1136
        %v1138 = vpop.f32.mrb[0].mxu0
        %1139 = vmatprep.mubr.f32.mxu0 0.0
        %1140 = vmatmul.mubr.f32.gmra.mrb[0].mxu0 %v1048
        %v1141 = vpop.f32.mrb[0].mxu0
        %v1142 = vadd.f32 0.0, %v1141
        %v1143 = vpop.f32.mrb[0].mxu0
        %1144 = vmatprep.mubr.f32.mxu0 0.0
        %1145 = vmatmul.mubr.f32.gmra.mrb[0].mxu0 %v1051
        %v1146 = vpop.f32.mrb[0].mxu0
        %v1147 = vadd.f32 0.0, %v1146
        %v1148 = vpop.f32.mrb[0].mxu0
        %1149 = vdwg.mxu0
        %1150 = vmatprep.subr.mxu0 0.0
        %1151 = vmatpush1.xpose.msra.mxu0 %v1042
        %1152 = vmatprep.subr.mxu0 0.0
        %1153 = vmatpush1.xpose.msra.mxu0 %v1045
        %1154 = vmatprep.subr.mxu0 0.0
        %1155 = vmatpush1.xpose.msra.mxu0 %v1048
        %1156 = vmatprep.subr.mxu0 0.0
        %1157 = vmatpush1.xpose.msra.mxu0 %v1051
        %1158 = vmatprep.subr.mxu0 0.0
        %1159 = vmatpush1.xpose.msra.mxu0 0.0
        %1160 = vmatprep.subr.mxu0 0.0
        %1161 = vmatpush1.xpose.msra.mxu0 0.0
        %1162 = vmatprep.subr.mxu0 0.0
        %1163 = vmatpush1.xpose.msra.mxu0 0.0
        %1164 = vmatprep.subr.mxu0 0.0
        %1165 = vmatpush1.xpose.msra.mxu0 0.0
        %1166 = vmatprep.subr.mxu0 0.0
        %1167 = vmatpush1.xpose.msra.mxu0 0.0
        %1168 = vmatprep.subr.mxu0 0.0
        %1169 = vmatpush1.xpose.msra.mxu0 0.0
        %1170 = vmatprep.subr.mxu0 0.0
        %1171 = vmatpush1.xpose.msra.mxu0 0.0
        %1172 = vmatprep.subr.mxu0 0.0
        %1173 = vmatpush1.xpose.msra.mxu0 0.0
        %1174 = vmatprep.subr.mxu0 0.0
        %1175 = vmatpush1.xpose.msra.mxu0 0.0
        %1176 = vmatprep.subr.mxu0 0.0
        %1177 = vmatpush1.xpose.msra.mxu0 0.0
        %1178 = vmatprep.subr.mxu0 0.0
        %1179 = vmatpush1.xpose.msra.mxu0 0.0
        %1180 = vmatprep.subr.mxu0 0.0
        %1181 = vmatpush1.xpose.msra.mxu0 0.0
        %1182 = vmatprep.subr.mxu0 0.0
        %1183 = vmatpush1.xpose.msra.mxu0 0.0
        %1184 = vmatprep.subr.mxu0 0.0
        %1185 = vmatpush1.xpose.msra.mxu0 0.0
        %1186 = vmatprep.subr.mxu0 0.0
        %1187 = vmatpush1.xpose.msra.mxu0 0.0
        %1188 = vmatprep.subr.mxu0 0.0
        %1189 = vmatpush1.xpose.msra.mxu0 0.0
        %1190 = vmatprep.subr.mxu0 0.0
        %1191 = vmatpush1.xpose.msra.mxu0 0.0
        %1192 = vmatprep.subr.mxu0 0.0
        %1193 = vmatpush1.xpose.msra.mxu0 0.0
        %1194 = vmatprep.subr.mxu0 0.0
        %1195 = vmatpush1.xpose.msra.mxu0 0.0
        %1196 = vmatprep.subr.mxu0 0.0
        %1197 = vmatpush1.xpose.msra.mxu0 0.0
        %1198 = vmatprep.subr.mxu0 0.0
        %1199 = vmatpush1.xpose.msra.mxu0 0.0
        %1200 = vmatprep.subr.mxu0 0.0
        %1201 = vmatpush1.xpose.msra.mxu0 0.0
        %1202 = vmatprep.subr.mxu0 0.0
        %1203 = vmatpush1.xpose.msra.mxu0 0.0
        %1204 = vmatprep.subr.mxu0 0.0
        %1205 = vmatpush1.xpose.msra.mxu0 0.0
        %1206 = vmatprep.subr.mxu0 0.0
        %1207 = vmatpush1.xpose.msra.mxu0 0.0
        %1208 = vmatprep.subr.mxu0 0.0
        %1209 = vmatpush1.xpose.msra.mxu0 0.0
        %1210 = vmatprep.subr.mxu0 0.0
        %1211 = vmatpush1.xpose.msra.mxu0 0.0
        %1212 = vmatprep.subr.mxu0 0.0
        %1213 = vmatpush1.xpose.msra.mxu0 0.0
        %1214 = vmatprep.mubr.f32.mxu0 0.0
        %1215 = vmatmul.mubr.f32.gmra.mrb[0].mxu0 %v1054
        %v1216 = vpop.f32.mrb[0].mxu0
        %v1217 = vadd.f32 0.0, %v1216
        %v1218 = vpop.f32.mrb[0].mxu0
        %1219 = vmatprep.mubr.f32.mxu0 0.0
        %1220 = vmatmul.mubr.f32.gmra.mrb[0].mxu0 %v1057
        %v1221 = vpop.f32.mrb[0].mxu0
        %v1222 = vadd.f32 0.0, %v1221
        %v1223 = vpop.f32.mrb[0].mxu0
        %1224 = vmatprep.mubr.f32.mxu0 0.0
        %1225 = vmatmul.mubr.f32.gmra.mrb[0].mxu0 %v1060
        %v1226 = vpop.f32.mrb[0].mxu0
        %v1227 = vadd.f32 0.0, %v1226
        %v1228 = vpop.f32.mrb[0].mxu0
        %1229 = vmatprep.mubr.f32.mxu0 0.0
        %1230 = vmatmul.mubr.f32.gmra.mrb[0].mxu0 %v1063
        %v1231 = vpop.f32.mrb[0].mxu0
        %v1232 = vadd.f32 0.0, %v1231
        %v1233 = vpop.f32.mrb[0].mxu0
        %1234 = vdwg.mxu0
        %1236 = vset.pattern.permute.xlu0 0
        %1237 = vperm.xlu0 %1236, %v1002
        %v1238 = vpop.permute.xlu0 %1237
        %1241 = vset.pattern.permute.xlu0 0
        %1242 = vperm.xlu0 %1241, %v1004
        %v1243 = vpop.permute.xlu0 %1242
        %1246 = vset.pattern.permute.xlu0 0
        %1247 = vperm.xlu0 %1246, %v1006
        %v1248 = vpop.permute.xlu0 %1247
        %1251 = vset.pattern.permute.xlu0 0
        %1252 = vperm.xlu0 %1251, %v1008
        %v1253 = vpop.permute.xlu0 %1252
        %v1255 = vmul.f32 %v1132, %v1238
        %v1256 = vmul.f32 %v1137, %v1243
        %v1257 = vmul.f32 %v1142, %v1248
        %v1258 = vmul.f32 %v1147, %v1253
        %v1260 = vlaneseq
        %v1261 = vshrl.u32 %v1260, 7
        %v1262 = vsub.s32 0, %v1261
        %v1263 = vrot.slane %v1032, %v1262
        %v1265 = vmul.f32 %v1255, %v1263
        %v1266 = vmul.f32 %v1256, %v1263
        %v1267 = vmul.f32 %v1257, %v1263
        %v1268 = vmul.f32 %v1258, %v1263
        %v1269 = vadd.f32 %v1265, 1.0
        %v1270 = vadd.f32 %v1266, 1.0
        %v1271 = vadd.f32 %v1267, 1.0
        %v1272 = vadd.f32 %v1268, 1.0
        %1274 = vset.pattern.permute.xlu0 0
        %1275 = vperm.xlu0 %1274, %v1022
        %v1276 = vpop.permute.xlu0 %1275
        %1279 = vset.pattern.permute.xlu0 0
        %1280 = vperm.xlu0 %1279, %v1024
        %v1281 = vpop.permute.xlu0 %1280
        %1284 = vset.pattern.permute.xlu0 0
        %1285 = vperm.xlu0 %1284, %v1026
        %v1286 = vpop.permute.xlu0 %1285
        %1289 = vset.pattern.permute.xlu0 0
        %1290 = vperm.xlu0 %1289, %v1028
        %v1291 = vpop.permute.xlu0 %1290
        %v1293 = vmul.f32 %v1217, %v1276
        %v1294 = vmul.f32 %v1222, %v1281
        %v1295 = vmul.f32 %v1227, %v1286
        %v1296 = vmul.f32 %v1232, %v1291
        %v1298 = vlaneseq
        %v1299 = vshrl.u32 %v1298, 7
        %v1300 = vsub.s32 0, %v1299
        %v1301 = vrot.slane %v1012, %v1300
        %v1303 = vmul.f32 %v1293, %v1301
        %v1304 = vmul.f32 %v1294, %v1301
        %v1305 = vmul.f32 %v1295, %v1301
        %v1306 = vmul.f32 %v1296, %v1301
        %v1307 = vadd.f32 %v1303, 1.0
        %v1308 = vadd.f32 %v1304, 1.0
        %v1309 = vadd.f32 %v1305, 1.0
        %v1310 = vadd.f32 %v1306, 1.0
        %v1311 = vmul.f32 %v1269, %v1271
        %v1312 = vmul.f32 %v1270, %v1272
        %v1313 = vmul.f32 %v1311, %v1312
        %v1315 = vrot.slane %v1313, 4
        %v1317 = vmul.f32 %v1313, %v1315
        %v1319 = vrot.slane %v1317, 2
        %v1321 = vmul.f32 %v1317, %v1319
        %v1323 = vrot.slane %v1321, 1
        %v1325 = vmul.f32 %v1321, %v1323
        %v1326 = vsub.f32 %v1325, 1.0
        %1327 = vst.msk [vmem:[%s390] sm:$0x1] %vm915, %v1326
        %v1328 = vmul.f32 %v1307, %v1309
        %v1329 = vmul.f32 %v1308, %v1310
        %v1330 = vmul.f32 %v1328, %v1329
        %v1332 = vrot.slane %v1330, 4
        %v1334 = vmul.f32 %v1330, %v1332
        %v1336 = vrot.slane %v1334, 2
        %v1338 = vmul.f32 %v1334, %v1336
        %v1340 = vrot.slane %v1338, 1
        %v1342 = vmul.f32 %v1338, %v1340
        %v1343 = vsub.f32 %v1342, 1.0
        %1344 = vst.msk [vmem:[%s387] sm:$0x1] %vm915, %v1343
      $region48: #{conn_comp_attention.6} parent=39 // pred_fallthru
        _
      %p1345 = scmp.lt.s32.totalorder %s22, 1
      %s1346 = scalar_select %p1345, %s22, 1
      %s1347 = scalar_lea.vmem %s5, %s1346
      %p1348 = scmp.lt.s32.totalorder %s22, 1
      %s1349 = scalar_select %p1348, %s22, 1
      %s1350 = scalar_lea.vmem %s6, %s1349
      // Predicated region
      $region49: #{conn_comp_attention.6} parent=39 // pred_check
        %p1351 = pneg %p184
      $region50: #{conn_comp_attention.6} parent=39 // pred_check_branch
        %1353 = sbr.rel (%p1351) target = $region52
      $region51: #{conn_comp_attention.6} parent=39 // pred_region
        _
      $region52: #{conn_comp_attention.6} parent=39 // pred_fallthru
        _
      // Predicated region
      $region53: #{conn_comp_attention.6} parent=39 // pred_check
        %p1354 = pneg %p210
      $region54: #{conn_comp_attention.6} parent=39 // pred_check_branch
        %1356 = sbr.rel (%p1354) target = $region56
      $region55: #{conn_comp_attention.6} parent=39 // pred_region
        _
      $region56: #{conn_comp_attention.6} parent=39 // pred_fallthru
        _
    $region40: #{conn_comp_attention.6} parent=5 // pred_fallthru
      _
    %p1357 = scmp.le.s32.totalorder 2, %s13
    // Predicated region
    $region57: #{conn_comp_attention.6} parent=5 // pred_check
      %p1358 = pneg %p1357
    $region58: #{conn_comp_attention.6} parent=5 // pred_check_branch
      %1360 = sbr.rel (%p1358) target = $region60
    $region59: #{conn_comp_attention.6} parent=5 // pred_region
      %s1361 = ssub.s32 %s13, 2
      // Predicated region
      $region61: #{conn_comp_attention.6} parent=59 // pred_check
        %p1362 = pneg %p190
      $region62: #{conn_comp_attention.6} parent=59 // pred_check_branch
        %1364 = sbr.rel (%p1362) target = $region64
      $region63: #{conn_comp_attention.6} parent=59 // pred_region
        %p1365 = scmp.lt.s32.totalorder %s24, 1
        %s1366 = scalar_select %p1365, %s24, 1
        %s1367 = scalar_lea.vmem %s5, %s1366
      $region64: #{conn_comp_attention.6} parent=59 // pred_fallthru
        _
      // Predicated region
      $region65: #{conn_comp_attention.6} parent=59 // pred_check
        %p1368 = pneg %p216
      $region66: #{conn_comp_attention.6} parent=59 // pred_check_branch
        %1370 = sbr.rel (%p1368) target = $region68
      $region67: #{conn_comp_attention.6} parent=59 // pred_region
        %p1371 = scmp.lt.s32.totalorder %s24, 1
        %s1372 = scalar_select %p1371, %s24, 1
        %s1373 = scalar_lea.vmem %s6, %s1372
      $region68: #{conn_comp_attention.6} parent=59 // pred_fallthru
        _
    $region60: #{conn_comp_attention.6} parent=5 // pred_fallthru
      _
  $region6: #{conn_comp_attention.6} parent=0 // loop_footer
    %s17 = sadd.s32 1, %s13
  $region7: #{conn_comp_attention.6} parent=0 // loop_footer_branch
    %12 = sbr.rel target = $region3
  $region8: #{conn_comp_attention.6} parent=0 // loop_exit
    _

// kernel: conn_comp_attention.8
$region0: #{conn_comp_attention.8}
  #allocation0 [shape = 'u32[]', space=smem, size = 0x4, offset = 0x4, fixed_abs, tag = 'smem constant byte address 0x4 - core index']
  #allocation1 [shape = 'u32[144,128]{1,0:T(1,128)}', space=vmem, size = 0x12000, scoped, tag = 'internal scratch']
  #allocation2 [shape = 'f32[4,1]{1,0:T(4,128)}', space=vmem, size = 0x800, scoped, tag = 'scratch operand']
  #allocation3 [shape = 'f32[4,1]{1,0:T(4,128)}', space=vmem, size = 0x800, scoped, tag = 'scratch operand']
  %s0 = inlined_call_operand.vmem [shape: f32[2,4,256], index: 0, kind: input, shape index: {}]
  %s1 = inlined_call_operand.vmem [shape: f32[4,1], index: 1, kind: input, shape index: {}]
  %s2 = inlined_call_operand.vmem [shape: f32[4,1], index: 2, kind: input, shape index: {}]
  %s3 = inlined_call_operand.vmem [shape: f32[4,1], index: 3, kind: output, shape index: {0}]
  %s4 = inlined_call_operand.vmem [shape: f32[4,1], index: 4, kind: output, shape index: {1}]
  %5 = xla_tuple %s3, %s4
  %s6 = sld [smem:[#allocation0]]
  $region61: #{conn_comp_attention.8} parent=0
    _
  %s8 = ssub.s32 1, %s6
  %s9 = scalar_select 0, %s8, %s6
  loop: start=0, step=1, limit=4
  $region2: #{conn_comp_attention.8} parent=0 // loop_pre_header
    _
  $region3: #{conn_comp_attention.8} parent=0 // loop_header
    %s11 = sphi 0, %s15
    %p12 = scmp.ge.s32.totalorder %s11, 4
    %s18 = sphi 0, %s30
    %s19 = sphi 0, %s26
    %s20 = sphi 0, %s18
    %s21 = sphi 0, %s19
    %s22 = sphi 0, %s20
    %s23 = sphi 0, %s21
    %s35 = sphi 0, %s37
    %s38 = sphi 0, %s35
    %s39 = sphi 0, %s38
    %s55 = sphi 0, %s39
    %s59 = sphi 0, %s59
    %s61 = sphi 0, %s59
    %s62 = sphi 0, %s61
    %s76 = sphi 0, %s62
    %s80 = sphi 0, %s80
    %s82 = sphi 0, %s80
    %s83 = sphi 0, %s82
    %s97 = sphi 0, %s83
    %s101 = sphi 0, %s101
    %s103 = sphi 0, %s101
    %s104 = sphi 0, %s103
    %s118 = sphi 0, %s104
    %s122 = sphi 0, %s122
    %s124 = sphi 0, %s122
    %s125 = sphi 0, %s124
    %s139 = sphi 0, %s125
  $region4: #{conn_comp_attention.8} parent=0 // loop_header_branch
    %14 = sbr.rel (%p12) target = $region8
  $region5: #{conn_comp_attention.8} parent=0 // loop_body
    %s16 = ssub.s32 %s11, 1
    %s17 = ssub.s32 %s11, 2
    %s24 = sadd.s32 1, %s19
    %p25 = scmp.ge.s32.totalorder %s24, 1
    %s26 = scalar_select %p25, 0, %s24
    %s27 = sadd.s32 1, %s18
    %s28 = scalar_select %p25, %s27, %s18
    %p29 = scmp.ge.s32.totalorder %s28, 2
    %s30 = scalar_select %p29, 0, %s28
    %s31 = ssub.s32 %s18, %s30
    %s32 = ssub.s32 %s19, %s26
    %s33 = sor.u32 %s31, %s32
    %p34 = scmp.eq.s32.totalorder %s33, 0
    %s36 = sadd.s32 %s35, 1
    %s37 = scalar_select %p34, %s35, %s36
    %p40 = pneg %p34
    %p41 = scmp.eq.s32.totalorder %s11, 1
    %p42 = por %p40, %p41
    %p43 = scmp.ne.s32.totalorder %s35, %s38
    %p44 = scmp.eq.s32.totalorder %s11, 0
    %p45 = por %p43, %p44
    %p46 = scmp.ne.s32.totalorder %s35, %s38
    %p47 = scmp.eq.s32.totalorder %s16, 1
    %p48 = por %p46, %p47
    %p49 = scmp.ne.s32.totalorder %s38, %s39
    %p50 = scmp.eq.s32.totalorder %s16, 0
    %p51 = por %p49, %p50
    %p52 = scmp.ne.s32.totalorder %s38, %s39
    %p53 = scmp.eq.s32.totalorder %s17, 1
    %p54 = por %p52, %p53
    %p56 = scmp.ne.s32.totalorder %s39, %s55
    %p57 = scmp.eq.s32.totalorder %s17, 0
    %p58 = por %p56, %p57
    %s60 = sadd.s32 %s59, 1
    %p63 = scmp.eq.s32.totalorder %s11, 1
    %p64 = scmp.ne.s32.totalorder %s59, %s61
    %p65 = scmp.eq.s32.totalorder %s11, 0
    %p66 = por %p64, %p65
    %p67 = scmp.ne.s32.totalorder %s59, %s61
    %p68 = scmp.eq.s32.totalorder %s16, 1
    %p69 = por %p67, %p68
    %p70 = scmp.ne.s32.totalorder %s61, %s62
    %p71 = scmp.eq.s32.totalorder %s16, 0
    %p72 = por %p70, %p71
    %p73 = scmp.ne.s32.totalorder %s61, %s62
    %p74 = scmp.eq.s32.totalorder %s17, 1
    %p75 = por %p73, %p74
    %p77 = scmp.ne.s32.totalorder %s62, %s76
    %p78 = scmp.eq.s32.totalorder %s17, 0
    %p79 = por %p77, %p78
    %s81 = sadd.s32 %s80, 1
    %p84 = scmp.eq.s32.totalorder %s11, 1
    %p85 = scmp.ne.s32.totalorder %s80, %s82
    %p86 = scmp.eq.s32.totalorder %s11, 0
    %p87 = por %p85, %p86
    %p88 = scmp.ne.s32.totalorder %s80, %s82
    %p89 = scmp.eq.s32.totalorder %s16, 1
    %p90 = por %p88, %p89
    %p91 = scmp.ne.s32.totalorder %s82, %s83
    %p92 = scmp.eq.s32.totalorder %s16, 0
    %p93 = por %p91, %p92
    %p94 = scmp.ne.s32.totalorder %s82, %s83
    %p95 = scmp.eq.s32.totalorder %s17, 1
    %p96 = por %p94, %p95
    %p98 = scmp.ne.s32.totalorder %s83, %s97
    %p99 = scmp.eq.s32.totalorder %s17, 0
    %p100 = por %p98, %p99
    %s102 = sadd.s32 %s101, 1
    %p105 = scmp.eq.s32.totalorder %s11, 1
    %p106 = scmp.ne.s32.totalorder %s101, %s103
    %p107 = scmp.eq.s32.totalorder %s11, 0
    %p108 = por %p106, %p107
    %p109 = scmp.ne.s32.totalorder %s101, %s103
    %p110 = scmp.eq.s32.totalorder %s16, 1
    %p111 = por %p109, %p110
    %p112 = scmp.ne.s32.totalorder %s103, %s104
    %p113 = scmp.eq.s32.totalorder %s16, 0
    %p114 = por %p112, %p113
    %p115 = scmp.ne.s32.totalorder %s103, %s104
    %p116 = scmp.eq.s32.totalorder %s17, 1
    %p117 = por %p115, %p116
    %p119 = scmp.ne.s32.totalorder %s104, %s118
    %p120 = scmp.eq.s32.totalorder %s17, 0
    %p121 = por %p119, %p120
    %s123 = sadd.s32 %s122, 1
    %p126 = scmp.eq.s32.totalorder %s11, 1
    %p127 = scmp.ne.s32.totalorder %s122, %s124
    %p128 = scmp.eq.s32.totalorder %s11, 0
    %p129 = por %p127, %p128
    %p130 = scmp.ne.s32.totalorder %s122, %s124
    %p131 = scmp.eq.s32.totalorder %s16, 1
    %p132 = por %p130, %p131
    %p133 = scmp.ne.s32.totalorder %s124, %s125
    %p134 = scmp.eq.s32.totalorder %s16, 0
    %p135 = por %p133, %p134
    %p136 = scmp.ne.s32.totalorder %s124, %s125
    %p137 = scmp.eq.s32.totalorder %s17, 1
    %p138 = por %p136, %p137
    %p140 = scmp.ne.s32.totalorder %s125, %s139
    %p141 = scmp.eq.s32.totalorder %s17, 0
    %p142 = por %p140, %p141
    %p143 = scmp.le.s32.totalorder 1, %s11
    %p144 = scmp.lt.s32.totalorder %s11, 3
    %p145 = pnand %p143, %p144
    %p146 = pneg %p145
    // Predicated region
    $region9: #{conn_comp_attention.8} parent=5 // pred_check
      _
    $region10: #{conn_comp_attention.8} parent=5 // pred_check_branch
      %148 = sbr.rel (%p145) target = $region12
    $region11: #{conn_comp_attention.8} parent=5 // pred_region
      %s149 = ssub.s32 %s11, 1
      // Predicated region
      $region13: #{conn_comp_attention.8} parent=11 // pred_check
        %p150 = pneg %p72
      $region14: #{conn_comp_attention.8} parent=11 // pred_check_branch
        %152 = sbr.rel (%p150) target = $region16
      $region15: #{conn_comp_attention.8} parent=11 // pred_region
        _
      $region16: #{conn_comp_attention.8} parent=11 // pred_fallthru
        _
      // Predicated region
      $region17: #{conn_comp_attention.8} parent=11 // pred_check
        %p153 = pneg %p93
      $region18: #{conn_comp_attention.8} parent=11 // pred_check_branch
        %155 = sbr.rel (%p153) target = $region20
      $region19: #{conn_comp_attention.8} parent=11 // pred_region
        _
      $region20: #{conn_comp_attention.8} parent=11 // pred_fallthru
        _
    $region12: #{conn_comp_attention.8} parent=5 // pred_fallthru
      _
    %p156 = scmp.lt.s32.totalorder %s11, 2
    // Predicated region
    $region21: #{conn_comp_attention.8} parent=5 // pred_check
      %p157 = pneg %p156
    $region22: #{conn_comp_attention.8} parent=5 // pred_check_branch
      %159 = sbr.rel (%p157) target = $region24
    $region23: #{conn_comp_attention.8} parent=5 // pred_region
      // Predicated region
      $region25: #{conn_comp_attention.8} parent=23 // pred_check
        %p160 = pneg %p45
      $region26: #{conn_comp_attention.8} parent=23 // pred_check_branch
        %162 = sbr.rel (%p160) target = $region28
      $region27: #{conn_comp_attention.8} parent=23 // pred_region
        %s163 = smul.u32 2, %s19
        %p164 = scmp.lt.s32.totalorder %s18, 1
        %s165 = scalar_select %p164, %s18, 1
        %p166 = scmp.lt.s32.totalorder %s163, 1
        %s167 = scalar_select %p166, %s163, 1
        %s168 = smul.addr %s165, 2
        %s169 = sadd.s32 %s167, %s168
        %s170 = smul.addr %s169, 4
        %s171 = scalar_lea.vmem %s0, %s170
        %s172 = smul.u32 2, %s19
      $region28: #{conn_comp_attention.8} parent=23 // pred_fallthru
        _
    $region24: #{conn_comp_attention.8} parent=5 // pred_fallthru
      _
    %p173 = scmp.le.s32.totalorder 1, %s11
    %p174 = scmp.lt.s32.totalorder %s11, 3
    %p175 = pnand %p173, %p174
    %p176 = pneg %p175
    // Predicated region
    $region29: #{conn_comp_attention.8} parent=5 // pred_check
      _
    $region30: #{conn_comp_attention.8} parent=5 // pred_check_branch
      %178 = sbr.rel (%p175) target = $region32
    $region31: #{conn_comp_attention.8} parent=5 // pred_region
      %s179 = ssub.s32 %s11, 1
      %s180 = smul.u32 2, %s21
      %p181 = scmp.lt.s32.totalorder %s20, 1
      %s182 = scalar_select %p181, %s20, 1
      %p183 = scmp.lt.s32.totalorder %s180, 1
      %s184 = scalar_select %p183, %s180, 1
      %s185 = smul.addr %s182, 2
      %s186 = sadd.s32 %s184, %s185
      %s187 = smul.addr %s186, 4
      %s188 = scalar_lea.vmem %s0, %s187
      %p189 = pneg %p51
      %p190 = pneg %p48
      %p191 = pneg %p72
      %p192 = pneg %p69
      %p193 = pneg %p93
      %p194 = pneg %p90
      %p195 = pneg %p114
      %p196 = pneg %p111
      %p197 = pneg %p135
      %p198 = pneg %p132
      %s199 = smul.u32 2, %s21
      %p200 = scmp.lt.s32.totalorder %s20, 1
      %s201 = scalar_select %p200, %s20, 1
      %p202 = scmp.lt.s32.totalorder %s199, 1
      %s203 = scalar_select %p202, %s199, 1
      %s204 = smul.addr %s201, 2
      %s205 = sadd.s32 %s203, %s204
      %s206 = smul.addr %s205, 4
      %s207 = scalar_lea.vmem %s0, %s206
      %s208 = smul.u32 2, %s21
      %p209 = scmp.eq.s32.totalorder %s20, 0
      %p210 = scmp.eq.s32.totalorder %s21, 0
      %p211 = pnand %p209, %p210
      %p212 = pneg %p211
      // Predicated region
      $region33: #{conn_comp_attention.8} parent=31 // pred_check
        _
      $region34: #{conn_comp_attention.8} parent=31 // pred_check_branch
        %214 = sbr.rel (%p211) target = $region36
      $region35: #{conn_comp_attention.8} parent=31 // pred_region
        %vm215 = vcmask 3072
        %216 = vst.msk [vmem:[#allocation2] sm:$0xf] %vm215, 0.0
        %217 = vst.msk [vmem:[#allocation3] sm:$0xf] %vm215, 0.0
      $region36: #{conn_comp_attention.8} parent=31 // pred_fallthru
        _
      %v218 = vld [vmem:[%s207] sm:$0xff]
      %v219 = vld [vmem:[#allocation2] sm:$0xf]
      %v221 = vcombine.high %v218, %v218
      %vm223 = vcmask 1043456
      %v224 = vsel %vm223, %v218, 0.0
      %v225 = vsel %vm223, %v221, 0.0
      %v226 = vadd.f32 %v224, %v225
      %227 = vadd.xlane.f32.xlu0 %v226
      %v228 = vpop.xlane.xlu0 %227
      %v229 = vadd.f32 %v219, %v228
      %vm230 = vcmask 3072
      %231 = vst.msk [vmem:[#allocation2] sm:$0xf] %vm230, %v229
      %v232 = vld [vmem:[#allocation3] sm:$0xf]
      %v233 = vmul.f32 %v218, %v218
      %v235 = vcombine.high %v233, %v233
      %v237 = vsel %vm223, %v233, 0.0
      %v238 = vsel %vm223, %v235, 0.0
      %v239 = vadd.f32 %v237, %v238
      %240 = vadd.xlane.f32.xlu0 %v239
      %v241 = vpop.xlane.xlu0 %240
      %v242 = vadd.f32 %v232, %v241
      %243 = vst.msk [vmem:[#allocation3] sm:$0xf] %vm230, %v242
      %p244 = scmp.eq.s32.totalorder %s20, 1
      %p245 = pnand %p244, %p210
      %p246 = pneg %p245
      // Predicated region
      $region37: #{conn_comp_attention.8} parent=31 // pred_check
        _
      $region38: #{conn_comp_attention.8} parent=31 // pred_check_branch
        %248 = sbr.rel (%p245) target = $region40
      $region39: #{conn_comp_attention.8} parent=31 // pred_region
        %v249 = vld [vmem:[#allocation2] sm:$0xf]
        %v250 = vmul.f32 %v249, 0.001953125
        %v251 = vld [vmem:[#allocation3] sm:$0xf]
        %v252 = vmul.f32 %v251, 0.001953125
        %v253 = vmul.f32 %v250, %v250
        %v254 = vsub.f32 %v252, %v253
        %v255 = vld [vmem:[%s1] sm:$0xf]
        %v256 = vadd.f32 %v254, 1e-05
        %v257 = vrsqrt.pop %v256
        %v258 = vmul.f32 %v255, %v257
        %259 = vst.msk [vmem:[%s3] sm:$0xf] %vm230, %v258
        %v260 = vld [vmem:[%s2] sm:$0xf]
        %v261 = vmul.f32 %v250, %v258
        %v262 = vsub.f32 %v260, %v261
        %263 = vst.msk [vmem:[%s4] sm:$0xf] %vm230, %v262
      $region40: #{conn_comp_attention.8} parent=31 // pred_fallthru
        _
      // Predicated region
      $region41: #{conn_comp_attention.8} parent=31 // pred_check
        %p264 = pneg %p111
      $region42: #{conn_comp_attention.8} parent=31 // pred_check_branch
        %266 = sbr.rel (%p264) target = $region44
      $region43: #{conn_comp_attention.8} parent=31 // pred_region
        _
      $region44: #{conn_comp_attention.8} parent=31 // pred_fallthru
        _
      // Predicated region
      $region45: #{conn_comp_attention.8} parent=31 // pred_check
        %p267 = pneg %p132
      $region46: #{conn_comp_attention.8} parent=31 // pred_check_branch
        %269 = sbr.rel (%p267) target = $region48
      $region47: #{conn_comp_attention.8} parent=31 // pred_region
        _
      $region48: #{conn_comp_attention.8} parent=31 // pred_fallthru
        _
      // Predicated region
      $region49: #{conn_comp_attention.8} parent=31 // pred_check
        %p270 = pneg %p111
      $region50: #{conn_comp_attention.8} parent=31 // pred_check_branch
        %272 = sbr.rel (%p270) target = $region52
      $region51: #{conn_comp_attention.8} parent=31 // pred_region
        _
      $region52: #{conn_comp_attention.8} parent=31 // pred_fallthru
        _
      // Predicated region
      $region53: #{conn_comp_attention.8} parent=31 // pred_check
        %p273 = pneg %p132
      $region54: #{conn_comp_attention.8} parent=31 // pred_check_branch
        %275 = sbr.rel (%p273) target = $region56
      $region55: #{conn_comp_attention.8} parent=31 // pred_region
        _
      $region56: #{conn_comp_attention.8} parent=31 // pred_fallthru
        _
    $region32: #{conn_comp_attention.8} parent=5 // pred_fallthru
      _
    %p276 = scmp.le.s32.totalorder 2, %s11
    // Predicated region
    $region57: #{conn_comp_attention.8} parent=5 // pred_check
      %p277 = pneg %p276
    $region58: #{conn_comp_attention.8} parent=5 // pred_check_branch
      %279 = sbr.rel (%p277) target = $region60
    $region59: #{conn_comp_attention.8} parent=5 // pred_region
      %s280 = ssub.s32 %s11, 2
    $region60: #{conn_comp_attention.8} parent=5 // pred_fallthru
      _
  $region6: #{conn_comp_attention.8} parent=0 // loop_footer
    %s15 = sadd.s32 1, %s11
  $region7: #{conn_comp_attention.8} parent=0 // loop_footer_branch
    %10 = sbr.rel target = $region3
  $region8: #{conn_comp_attention.8} parent=0 // loop_exit
    _

// kernel: conn_comp_attention.9
$region0: #{conn_comp_attention.9}
  #allocation0 [shape = 'u32[]', space=smem, size = 0x4, offset = 0x4, fixed_abs, tag = 'smem constant byte address 0x4 - core index']
  #allocation1 [shape = 'u32[144,128]{1,0:T(1,128)}', space=vmem, size = 0x12000, scoped, tag = 'internal scratch']
  %s0 = inlined_call_operand.vmem [shape: f32[2,4,256], index: 0, kind: input, shape index: {}]
  %s1 = inlined_call_operand.vmem [shape: f32[4,1], index: 1, kind: input, shape index: {}]
  %s2 = inlined_call_operand.vmem [shape: f32[4,1], index: 2, kind: input, shape index: {}]
  %s3 = inlined_call_operand.vmem [shape: f32[2,4,256], index: 3, kind: output, shape index: {}]
  %s4 = sld [smem:[#allocation0]]
  $region45: #{conn_comp_attention.9} parent=0
    _
  %s6 = ssub.s32 1, %s4
  %s7 = scalar_select 0, %s6, %s4
  loop: start=0, step=1, limit=4
  $region2: #{conn_comp_attention.9} parent=0 // loop_pre_header
    _
  $region3: #{conn_comp_attention.9} parent=0 // loop_header
    %s9 = sphi 0, %s13
    %p10 = scmp.ge.s32.totalorder %s9, 4
    %s16 = sphi 0, %s28
    %s17 = sphi 0, %s24
    %s18 = sphi 0, %s16
    %s19 = sphi 0, %s17
    %s20 = sphi 0, %s18
    %s21 = sphi 0, %s19
    %s33 = sphi 0, %s35
    %s36 = sphi 0, %s33
    %s37 = sphi 0, %s36
    %s53 = sphi 0, %s37
    %s57 = sphi 0, %s57
    %s59 = sphi 0, %s57
    %s60 = sphi 0, %s59
    %s74 = sphi 0, %s60
    %s78 = sphi 0, %s78
    %s80 = sphi 0, %s78
    %s81 = sphi 0, %s80
    %s95 = sphi 0, %s81
    %s103 = sphi 0, %s105
    %s106 = sphi 0, %s103
    %s107 = sphi 0, %s106
    %s123 = sphi 0, %s107
  $region4: #{conn_comp_attention.9} parent=0 // loop_header_branch
    %12 = sbr.rel (%p10) target = $region8
  $region5: #{conn_comp_attention.9} parent=0 // loop_body
    %s14 = ssub.s32 %s9, 1
    %s15 = ssub.s32 %s9, 2
    %s22 = sadd.s32 1, %s17
    %p23 = scmp.ge.s32.totalorder %s22, 1
    %s24 = scalar_select %p23, 0, %s22
    %s25 = sadd.s32 1, %s16
    %s26 = scalar_select %p23, %s25, %s16
    %p27 = scmp.ge.s32.totalorder %s26, 2
    %s28 = scalar_select %p27, 0, %s26
    %s29 = ssub.s32 %s16, %s28
    %s30 = ssub.s32 %s17, %s24
    %s31 = sor.u32 %s29, %s30
    %p32 = scmp.eq.s32.totalorder %s31, 0
    %s34 = sadd.s32 %s33, 1
    %s35 = scalar_select %p32, %s33, %s34
    %p38 = pneg %p32
    %p39 = scmp.eq.s32.totalorder %s9, 1
    %p40 = por %p38, %p39
    %p41 = scmp.ne.s32.totalorder %s33, %s36
    %p42 = scmp.eq.s32.totalorder %s9, 0
    %p43 = por %p41, %p42
    %p44 = scmp.ne.s32.totalorder %s33, %s36
    %p45 = scmp.eq.s32.totalorder %s14, 1
    %p46 = por %p44, %p45
    %p47 = scmp.ne.s32.totalorder %s36, %s37
    %p48 = scmp.eq.s32.totalorder %s14, 0
    %p49 = por %p47, %p48
    %p50 = scmp.ne.s32.totalorder %s36, %s37
    %p51 = scmp.eq.s32.totalorder %s15, 1
    %p52 = por %p50, %p51
    %p54 = scmp.ne.s32.totalorder %s37, %s53
    %p55 = scmp.eq.s32.totalorder %s15, 0
    %p56 = por %p54, %p55
    %s58 = sadd.s32 %s57, 1
    %p61 = scmp.eq.s32.totalorder %s9, 1
    %p62 = scmp.ne.s32.totalorder %s57, %s59
    %p63 = scmp.eq.s32.totalorder %s9, 0
    %p64 = por %p62, %p63
    %p65 = scmp.ne.s32.totalorder %s57, %s59
    %p66 = scmp.eq.s32.totalorder %s14, 1
    %p67 = por %p65, %p66
    %p68 = scmp.ne.s32.totalorder %s59, %s60
    %p69 = scmp.eq.s32.totalorder %s14, 0
    %p70 = por %p68, %p69
    %p71 = scmp.ne.s32.totalorder %s59, %s60
    %p72 = scmp.eq.s32.totalorder %s15, 1
    %p73 = por %p71, %p72
    %p75 = scmp.ne.s32.totalorder %s60, %s74
    %p76 = scmp.eq.s32.totalorder %s15, 0
    %p77 = por %p75, %p76
    %s79 = sadd.s32 %s78, 1
    %p82 = scmp.eq.s32.totalorder %s9, 1
    %p83 = scmp.ne.s32.totalorder %s78, %s80
    %p84 = scmp.eq.s32.totalorder %s9, 0
    %p85 = por %p83, %p84
    %p86 = scmp.ne.s32.totalorder %s78, %s80
    %p87 = scmp.eq.s32.totalorder %s14, 1
    %p88 = por %p86, %p87
    %p89 = scmp.ne.s32.totalorder %s80, %s81
    %p90 = scmp.eq.s32.totalorder %s14, 0
    %p91 = por %p89, %p90
    %p92 = scmp.ne.s32.totalorder %s80, %s81
    %p93 = scmp.eq.s32.totalorder %s15, 1
    %p94 = por %p92, %p93
    %p96 = scmp.ne.s32.totalorder %s81, %s95
    %p97 = scmp.eq.s32.totalorder %s15, 0
    %p98 = por %p96, %p97
    %s99 = ssub.s32 %s16, %s28
    %s100 = ssub.s32 %s17, %s24
    %s101 = sor.u32 %s99, %s100
    %p102 = scmp.eq.s32.totalorder %s101, 0
    %s104 = sadd.s32 %s103, 1
    %s105 = scalar_select %p102, %s103, %s104
    %p108 = pneg %p102
    %p109 = scmp.eq.s32.totalorder %s9, 1
    %p110 = por %p108, %p109
    %p111 = scmp.ne.s32.totalorder %s103, %s106
    %p112 = scmp.eq.s32.totalorder %s9, 0
    %p113 = por %p111, %p112
    %p114 = scmp.ne.s32.totalorder %s103, %s106
    %p115 = scmp.eq.s32.totalorder %s14, 1
    %p116 = por %p114, %p115
    %p117 = scmp.ne.s32.totalorder %s106, %s107
    %p118 = scmp.eq.s32.totalorder %s14, 0
    %p119 = por %p117, %p118
    %p120 = scmp.ne.s32.totalorder %s106, %s107
    %p121 = scmp.eq.s32.totalorder %s15, 1
    %p122 = por %p120, %p121
    %p124 = scmp.ne.s32.totalorder %s107, %s123
    %p125 = scmp.eq.s32.totalorder %s15, 0
    %p126 = por %p124, %p125
    %p127 = scmp.le.s32.totalorder 1, %s9
    %p128 = scmp.lt.s32.totalorder %s9, 3
    %p129 = pnand %p127, %p128
    %p130 = pneg %p129
    // Predicated region
    $region9: #{conn_comp_attention.9} parent=5 // pred_check
      _
    $region10: #{conn_comp_attention.9} parent=5 // pred_check_branch
      %132 = sbr.rel (%p129) target = $region12
    $region11: #{conn_comp_attention.9} parent=5 // pred_region
      %s133 = ssub.s32 %s9, 1
      // Predicated region
      $region13: #{conn_comp_attention.9} parent=11 // pred_check
        %p134 = pneg %p70
      $region14: #{conn_comp_attention.9} parent=11 // pred_check_branch
        %136 = sbr.rel (%p134) target = $region16
      $region15: #{conn_comp_attention.9} parent=11 // pred_region
        _
      $region16: #{conn_comp_attention.9} parent=11 // pred_fallthru
        _
      // Predicated region
      $region17: #{conn_comp_attention.9} parent=11 // pred_check
        %p137 = pneg %p91
      $region18: #{conn_comp_attention.9} parent=11 // pred_check_branch
        %139 = sbr.rel (%p137) target = $region20
      $region19: #{conn_comp_attention.9} parent=11 // pred_region
        _
      $region20: #{conn_comp_attention.9} parent=11 // pred_fallthru
        _
    $region12: #{conn_comp_attention.9} parent=5 // pred_fallthru
      _
    %p140 = scmp.lt.s32.totalorder %s9, 2
    // Predicated region
    $region21: #{conn_comp_attention.9} parent=5 // pred_check
      %p141 = pneg %p140
    $region22: #{conn_comp_attention.9} parent=5 // pred_check_branch
      %143 = sbr.rel (%p141) target = $region24
    $region23: #{conn_comp_attention.9} parent=5 // pred_region
      // Predicated region
      $region25: #{conn_comp_attention.9} parent=23 // pred_check
        %p144 = pneg %p43
      $region26: #{conn_comp_attention.9} parent=23 // pred_check_branch
        %146 = sbr.rel (%p144) target = $region28
      $region27: #{conn_comp_attention.9} parent=23 // pred_region
        %s147 = smul.u32 2, %s17
        %p148 = scmp.lt.s32.totalorder %s16, 1
        %s149 = scalar_select %p148, %s16, 1
        %p150 = scmp.lt.s32.totalorder %s147, 1
        %s151 = scalar_select %p150, %s147, 1
        %s152 = smul.addr %s149, 2
        %s153 = sadd.s32 %s151, %s152
        %s154 = smul.addr %s153, 4
        %s155 = scalar_lea.vmem %s0, %s154
        %s156 = smul.u32 2, %s17
      $region28: #{conn_comp_attention.9} parent=23 // pred_fallthru
        _
    $region24: #{conn_comp_attention.9} parent=5 // pred_fallthru
      _
    %p157 = scmp.le.s32.totalorder 1, %s9
    %p158 = scmp.lt.s32.totalorder %s9, 3
    %p159 = pnand %p157, %p158
    %p160 = pneg %p159
    // Predicated region
    $region29: #{conn_comp_attention.9} parent=5 // pred_check
      _
    $region30: #{conn_comp_attention.9} parent=5 // pred_check_branch
      %162 = sbr.rel (%p159) target = $region32
    $region31: #{conn_comp_attention.9} parent=5 // pred_region
      %s163 = ssub.s32 %s9, 1
      %s164 = smul.u32 2, %s19
      %p165 = scmp.lt.s32.totalorder %s18, 1
      %s166 = scalar_select %p165, %s18, 1
      %p167 = scmp.lt.s32.totalorder %s164, 1
      %s168 = scalar_select %p167, %s164, 1
      %s169 = smul.addr %s166, 2
      %s170 = sadd.s32 %s168, %s169
      %s171 = smul.addr %s170, 4
      %s172 = scalar_lea.vmem %s0, %s171
      %p173 = pneg %p49
      %p174 = pneg %p46
      %p175 = pneg %p70
      %p176 = pneg %p67
      %p177 = pneg %p91
      %p178 = pneg %p88
      %p179 = pneg %p119
      %p180 = pneg %p116
      %s181 = smul.u32 2, %s19
      %p182 = scmp.lt.s32.totalorder %s18, 1
      %s183 = scalar_select %p182, %s18, 1
      %p184 = scmp.lt.s32.totalorder %s181, 1
      %s185 = scalar_select %p184, %s181, 1
      %s186 = smul.addr %s183, 2
      %s187 = sadd.s32 %s185, %s186
      %s188 = smul.addr %s187, 4
      %s189 = scalar_lea.vmem %s3, %s188
      %s190 = smul.u32 2, %s19
      %p191 = scmp.lt.s32.totalorder %s18, 1
      %s192 = scalar_select %p191, %s18, 1
      %p193 = scmp.lt.s32.totalorder %s190, 1
      %s194 = scalar_select %p193, %s190, 1
      %s195 = smul.addr %s192, 2
      %s196 = sadd.s32 %s194, %s195
      %s197 = smul.addr %s196, 4
      %s198 = scalar_lea.vmem %s0, %s197
      %s199 = smul.u32 2, %s19
      %s200 = smul.u32 2, %s19
      %p201 = scmp.lt.s32.totalorder %s18, 1
      %s202 = scalar_select %p201, %s18, 1
      %p203 = scmp.lt.s32.totalorder %s200, 1
      %s204 = scalar_select %p203, %s200, 1
      %s205 = smul.addr %s202, 2
      %s206 = sadd.s32 %s204, %s205
      %s207 = smul.addr %s206, 4
      %s208 = scalar_lea.vmem %s3, %s207
      %s209 = smul.u32 2, %s19
      %v210 = vld [vmem:[%s198] sm:$0xff]
      %v211 = vld [vmem:[%s1] sm:$0xf]
      %213 = vset.pattern.permute.xlu0 0
      %214 = vperm.xlu0 %213, %v211
      %v215 = vpop.permute.xlu0 %214
      %v217 = vunpack.c.l.s4 839922192
      %v218 = vunpack.c.0.s8 %v217
      %v219 = vlaneseq
      %v220 = vshrl.u32 %v219, 7
      %v221 = vsub.s32 %v218, %v220
      %v222 = vrot.slane %v215, %v221
      %v224 = vmul.f32 %v210, %v222
      %v225 = vld [vmem:[%s2] sm:$0xf]
      %227 = vset.pattern.permute.xlu0 0
      %228 = vperm.xlu0 %227, %v225
      %v229 = vpop.permute.xlu0 %228
      %v231 = vunpack.c.l.s4 839922192
      %v232 = vunpack.c.0.s8 %v231
      %v233 = vlaneseq
      %v234 = vshrl.u32 %v233, 7
      %v235 = vsub.s32 %v232, %v234
      %v236 = vrot.slane %v229, %v235
      %v238 = vadd.f32 %v224, %v236
      %239 = vst [vmem:[%s208] sm:$0xff] %v238
      %s240 = smul.u32 2, %s19
      %p241 = scmp.lt.s32.totalorder %s18, 1
      %s242 = scalar_select %p241, %s18, 1
      %p243 = scmp.lt.s32.totalorder %s240, 1
      %s244 = scalar_select %p243, %s240, 1
      %s245 = smul.addr %s242, 2
      %s246 = sadd.s32 %s244, %s245
      %s247 = smul.addr %s246, 4
      %s248 = scalar_lea.vmem %s3, %s247
      // Predicated region
      $region33: #{conn_comp_attention.9} parent=31 // pred_check
        %p249 = pneg %p116
      $region34: #{conn_comp_attention.9} parent=31 // pred_check_branch
        %251 = sbr.rel (%p249) target = $region36
      $region35: #{conn_comp_attention.9} parent=31 // pred_region
        %s252 = smul.u32 2, %s19
      $region36: #{conn_comp_attention.9} parent=31 // pred_fallthru
        _
    $region32: #{conn_comp_attention.9} parent=5 // pred_fallthru
      _
    %p253 = scmp.le.s32.totalorder 2, %s9
    // Predicated region
    $region37: #{conn_comp_attention.9} parent=5 // pred_check
      %p254 = pneg %p253
    $region38: #{conn_comp_attention.9} parent=5 // pred_check_branch
      %256 = sbr.rel (%p254) target = $region40
    $region39: #{conn_comp_attention.9} parent=5 // pred_region
      %s257 = ssub.s32 %s9, 2
      // Predicated region
      $region41: #{conn_comp_attention.9} parent=39 // pred_check
        %p258 = pneg %p122
      $region42: #{conn_comp_attention.9} parent=39 // pred_check_branch
        %260 = sbr.rel (%p258) target = $region44
      $region43: #{conn_comp_attention.9} parent=39 // pred_region
        %s261 = smul.u32 2, %s21
        %p262 = scmp.lt.s32.totalorder %s20, 1
        %s263 = scalar_select %p262, %s20, 1
        %p264 = scmp.lt.s32.totalorder %s261, 1
        %s265 = scalar_select %p264, %s261, 1
        %s266 = smul.addr %s263, 2
        %s267 = sadd.s32 %s265, %s266
        %s268 = smul.addr %s267, 4
        %s269 = scalar_lea.vmem %s3, %s268
      $region44: #{conn_comp_attention.9} parent=39 // pred_fallthru
        _
    $region40: #{conn_comp_attention.9} parent=5 // pred_fallthru
      _
  $region6: #{conn_comp_attention.9} parent=0 // loop_footer
    %s13 = sadd.s32 1, %s9
  $region7: #{conn_comp_attention.9} parent=0 // loop_footer_branch
    %8 = sbr.rel target = $region3
  $region8: #{conn_comp_attention.9} parent=0 // loop_exit
    _

</llo_original>
